<compile_context>
chip_gen: v7x
topology: tpu7x:2x2x1
jax: 0.10.0
libtpu: 0.0.40
codegen_flags: <defaults>
</compile_context>

<pallas_src>
import functools

import jax
import jax.numpy as jnp
from jax.experimental import pallas as pl
from jax.experimental.pallas import tpu as pltpu


def _round_up(x, m):
    return ((x + m - 1) // m) * m


def _pick_time_block(T, max_block):
    """Largest divisor of T that is <= max_block (whole sequence if small)."""
    for cand in range(min(T, max_block), 0, -1):
        if T % cand == 0:
            return cand
    return 1


def _block_diag(a, b):
    """[[a, 0], [0, b]] — (2H, 8H) fused-direction W_hh."""
    H, G = a.shape
    z = jnp.zeros((H, G), a.dtype)
    return jnp.concatenate(
        [jnp.concatenate([a, z], axis=1), jnp.concatenate([z, b], axis=1)], axis=0)


# ----------------------------------------------------------------------------
# Hoisted LSTM input projection: emits xpf and xpb directly as (T, B, 4H).
#   xpf[t] = sum_k x_k[t] @ Wf_k + (b_ih_f + b_hh_f)
#   xpb[t] = sum_k x_k[t] @ Wb_k + (b_ih_b + b_hh_b)
# bf16 operands, f32 accumulation, f32 outputs.
# ----------------------------------------------------------------------------
def _make_proj_kernel(n_in, tpb, batch, gdim):
    def kernel(*refs):
        xs = refs[:n_in]
        wfs = refs[n_in:2 * n_in]
        wbs = refs[2 * n_in:3 * n_in]
        bf_ref, bb_ref, of_ref, ob_ref = refs[3 * n_in:]
        accf = None
        accb = None
        for k in range(n_in):
            xk = xs[k][...]                                  # (tpb, B, Din_k) bf16
            x2 = xk.reshape(tpb * batch, xk.shape[-1])       # leading-dim merge
            pf = jnp.dot(x2, wfs[k][...], preferred_element_type=jnp.float32)
            pb = jnp.dot(x2, wbs[k][...], preferred_element_type=jnp.float32)
            accf = pf if accf is None else accf + pf
            accb = pb if accb is None else accb + pb
        of_ref[...] = (accf + bf_ref[...]).reshape(tpb, batch, gdim)
        ob_ref[...] = (accb + bb_ref[...]).reshape(tpb, batch, gdim)
    return kernel


def lstm_input_proj(xs, wfs, wbs, b_f, b_b, *, tpb):
    """xs: list of (T, B, Din_k) bf16; wfs/wbs: list of (Din_k, 4H) bf16.
    Returns (xpf, xpb), each (T, B, 4H) float32 in natural time order."""
    T, B = xs[0].shape[0], xs[0].shape[1]
    G = wfs[0].shape[1]
    n_in = len(xs)
    nblk = T // tpb
    in_specs = (
        [pl.BlockSpec((tpb, B, x.shape[2]), lambda i: (i, 0, 0)) for x in xs]
        + [pl.BlockSpec(w.shape, lambda i: (0, 0)) for w in wfs]
        + [pl.BlockSpec(w.shape, lambda i: (0, 0)) for w in wbs]
        + [pl.BlockSpec(b_f.shape, lambda i: (0, 0)),
           pl.BlockSpec(b_b.shape, lambda i: (0, 0))]
    )
    return pl.pallas_call(
        _make_proj_kernel(n_in, tpb, B, G),
        out_shape=(jax.ShapeDtypeStruct((T, B, G), jnp.float32),
                   jax.ShapeDtypeStruct((T, B, G), jnp.float32)),
        grid_spec=pltpu.PrefetchScalarGridSpec(
            num_scalar_prefetch=0,
            grid=(nblk,),
            in_specs=in_specs,
            out_specs=(pl.BlockSpec((tpb, B, G), lambda i: (i, 0, 0)),
                       pl.BlockSpec((tpb, B, G), lambda i: (i, 0, 0))),
        ),
        compiler_params=pltpu.CompilerParams(
            dimension_semantics=("parallel",)),
    )(*xs, *wfs, *wbs, b_f, b_b)


# ----------------------------------------------------------------------------
# Fused bidirectional LSTM recurrence (one layer, both directions,
# one block-diagonal h @ W_hh matmul per timestep).
# ----------------------------------------------------------------------------
def _bilstm_kernel(xpf_ref, xpb_ref, whh_ref, hf_ref, hb_ref,
                   hf_sc, cf_sc, hb_sc, cb_sc, *, t_blk, hidden, unroll):
    @pl.when(pl.program_id(0) == 0)
    def _():
        hf_sc[...] = jnp.zeros_like(hf_sc)
        cf_sc[...] = jnp.zeros_like(cf_sc)
        hb_sc[...] = jnp.zeros_like(hb_sc)
        cb_sc[...] = jnp.zeros_like(cb_sc)

    H = hidden
    whh = whh_ref[...]                                       # (2H, 8H) bf16 block-diag

    def half_cell(gates, c):
        # PyTorch gate order [i, f, g, o]; gates already contain x@W_ih + b + h@W_hh.
        i_g = jax.nn.sigmoid(gates[:, 0 * H:1 * H])
        f_g = jax.nn.sigmoid(gates[:, 1 * H:2 * H])
        g_g = jnp.tanh(gates[:, 2 * H:3 * H])
        o_g = jax.nn.sigmoid(gates[:, 3 * H:4 * H])
        c_new = f_g * c + i_g * g_g
        h_new = o_g * jnp.tanh(c_new)
        return h_new, c_new

    def body(s, carry):
        sb = t_blk - 1 - s
        # One fused (B, 2H) @ (2H, 8H) MXU op per timestep (bf16 operands, f32 acc).
        h_cat = jnp.concatenate([hf_sc[...], hb_sc[...]], axis=-1)     # (B, 2H) f32
        hg = jnp.dot(h_cat.astype(jnp.bfloat16), whh,
                     preferred_element_type=jnp.float32)               # (B, 8H) f32
        # Split at the 4H lane boundary (aligned when H is a multiple of 32).
        gates_f = xpf_ref[s] + hg[:, :4 * H]
        gates_b = xpb_ref[sb] + hg[:, 4 * H:]
        h_f, c_f = half_cell(gates_f, cf_sc[...])
        h_b, c_b = half_cell(gates_b, cb_sc[...])
        hf_sc[...] = h_f
        cf_sc[...] = c_f
        hb_sc[...] = h_b
        cb_sc[...] = c_b
        # Outputs stored bf16 so downstream matmuls read half the bytes.
        hf_ref[s] = h_f.astype(jnp.bfloat16)
        hb_ref[sb] = h_b.astype(jnp.bfloat16)
        return carry

    jax.lax.fori_loop(0, t_blk, body, 0, unroll=unroll)


def bilstm_layer(xpf, xpb, whh_bd, *, t_blk, unroll=8):
    """xpf/xpb: (T, B, 4H) f32 pre-gate activations (natural time order).
    whh_bd: (2H, 8H) bf16 block-diagonal recurrent weight.
    Returns (h_fwd, h_bwd), each (T, B, H) bf16, natural time order."""
    T, B, G = xpf.shape
    H = G // 4
    nblk = T // t_blk

    # Explicit VMEM budget: double-buffered f32 inputs + bf16 outputs + weights
    # + scratch, with 2x headroom, capped at 64 MiB so it also fits v7x.
    need = (2 * 2 * t_blk * B * G * 4          # xpf/xpb, 2 buffers each, f32
            + 2 * 2 * t_blk * B * H * 2        # hf/hb, 2 buffers each, bf16
            + whh_bd.size * 2                  # block-diag W_hh, bf16
            + 4 * B * H * 4)                   # h/c scratch, f32
    vmem_limit = int(min(max(32 * 1024 * 1024, 2 * need), 64 * 1024 * 1024))

    kernel = functools.partial(_bilstm_kernel, t_blk=t_blk, hidden=H,
                               unroll=max(1, min(unroll, t_blk)))
    return pl.pallas_call(
        kernel,
        out_shape=(jax.ShapeDtypeStruct((T, B, H), jnp.bfloat16),
                   jax.ShapeDtypeStruct((T, B, H), jnp.bfloat16)),
        grid_spec=pltpu.PrefetchScalarGridSpec(
            num_scalar_prefetch=0,
            grid=(nblk,),
            in_specs=[
                pl.BlockSpec((t_blk, B, G), lambda i: (i, 0, 0)),
                pl.BlockSpec((t_blk, B, G), lambda i: (nblk - 1 - i, 0, 0)),
                pl.BlockSpec(whh_bd.shape, lambda i: (0, 0)),
            ],
            out_specs=(
                pl.BlockSpec((t_blk, B, H), lambda i: (i, 0, 0)),
                pl.BlockSpec((t_blk, B, H), lambda i: (nblk - 1 - i, 0, 0)),
            ),
            scratch_shapes=[
                pltpu.VMEM((B, H), jnp.float32),   # h fwd
                pltpu.VMEM((B, H), jnp.float32),   # c fwd
                pltpu.VMEM((B, H), jnp.float32),   # h bwd
                pltpu.VMEM((B, H), jnp.float32),   # c bwd
            ],
        ),
        compiler_params=pltpu.CompilerParams(
            dimension_semantics=("arbitrary",),    # sequential recurrence
            vmem_limit_bytes=vmem_limit),
    )(xpf, xpb, whh_bd)


# ----------------------------------------------------------------------------
# Dense head: linear(2H -> H) + ELU + classifier(H -> C), row-tiled grid.
# Split h_fwd/h_bwd operands (no HBM concat), bf16 matmul operands.
# ----------------------------------------------------------------------------
def _head_kernel(hf_ref, hb_ref, w1f_ref, w1b_ref, b1_ref, w2_ref, b2_ref, out_ref):
    h = (jnp.dot(hf_ref[...], w1f_ref[...], preferred_element_type=jnp.float32)
         + jnp.dot(hb_ref[...], w1b_ref[...], preferred_element_type=jnp.float32)
         + b1_ref[...])
    # ELU(alpha=1); clamp before exp so the discarded branch never overflows.
    elu = jnp.where(h > 0, h, jnp.exp(jnp.minimum(h, 0.0)) - 1.0)
    out_ref[...] = (jnp.dot(elu.astype(jnp.bfloat16), w2_ref[...],
                            preferred_element_type=jnp.float32)
                    + b2_ref[...])


def dense_head(h_fwd, h_bwd, w1, b1, w2, b2, *, row_block=512):
    """h_fwd/h_bwd: (N, H) bf16. Class dim is zero-padded to 128 lanes inside
    the kernel so stores are lane-dense; sliced back outside."""
    N, H = h_fwd.shape
    C = w2.shape[1]
    C_pad = _round_up(C, 128)
    w1_bf = w1.astype(jnp.bfloat16)
    w2p = jnp.pad(w2, ((0, 0), (0, C_pad - C))).astype(jnp.bfloat16)
    b2p = jnp.pad(b2, ((0, 0), (0, C_pad - C)))
    blk = min(row_block, _round_up(N, 16))
    N_pad = _round_up(N, blk)
    if N_pad != N:
        h_fwd = jnp.pad(h_fwd, ((0, N_pad - N), (0, 0)))
        h_bwd = jnp.pad(h_bwd, ((0, N_pad - N), (0, 0)))
    out = pl.pallas_call(
        _head_kernel,
        out_shape=jax.ShapeDtypeStruct((N_pad, C_pad), jnp.float32),
        grid_spec=pltpu.PrefetchScalarGridSpec(
            num_scalar_prefetch=0,
            grid=(N_pad // blk,),
            in_specs=[
                pl.BlockSpec((blk, H), lambda i: (i, 0)),
                pl.BlockSpec((blk, H), lambda i: (i, 0)),
                pl.BlockSpec((H, H), lambda i: (0, 0)),
                pl.BlockSpec((H, H), lambda i: (0, 0)),
                pl.BlockSpec((1, H), lambda i: (0, 0)),
                pl.BlockSpec((H, C_pad), lambda i: (0, 0)),
                pl.BlockSpec((1, C_pad), lambda i: (0, 0)),
            ],
            out_specs=pl.BlockSpec((blk, C_pad), lambda i: (i, 0)),
        ),
        compiler_params=pltpu.CompilerParams(
            dimension_semantics=("parallel",)),
    )(h_fwd, h_bwd, w1_bf[:H], w1_bf[H:], b1, w2p, b2p)
    return out[:N, :C]


# ----------------------------------------------------------------------------
# Full model forward
# ----------------------------------------------------------------------------
def glove_bilstm_forward(text, params, *, row_block=512, max_time_block=64,
                         proj_rows=512):
    """text: (B, T) int32 token ids. Returns (B, T, num_classes) float32."""
    B, T = text.shape
    H = params["lstm_layers"][0]["w_hh_f"].shape[0]
    C = params["w2"].shape[1]

    emb = params["embedding"][text]                               # frozen gather (B,T,E)
    x = jnp.transpose(emb, (1, 0, 2)).astype(jnp.bfloat16)        # (T, B, E) bf16
    B_pad = _round_up(B, 16)                                      # bf16 sublane packing
    if B_pad != B:
        x = jnp.pad(x, ((0, 0), (0, B_pad - B), (0, 0)))
    t_blk = _pick_time_block(T, max_time_block)
    tpb = _pick_time_block(T, max(1, proj_rows // B_pad))
    N = T * B_pad

    h_f = h_b = None
    for li, layer in enumerate(params["lstm_layers"]):
        wf = layer["w_ih_f"].astype(jnp.bfloat16)
        wb = layer["w_ih_b"].astype(jnp.bfloat16)
        if li == 0:
            xs, wfs, wbs = [x], [wf], [wb]
        else:
            # Input is concat(h_f, h_b): expressed via split weights (no HBM concat).
            xs = [h_f, h_b]
            wfs = [wf[:H], wf[H:]]
            wbs = [wb[:H], wb[H:]]
        xpf, xpb = lstm_input_proj(xs, wfs, wbs, layer["b_f"], layer["b_b"],
                                   tpb=tpb)                       # 2 x (T, B, 4H) f32
        whh_bd = _block_diag(layer["w_hh_f"],
                             layer["w_hh_b"]).astype(jnp.bfloat16)
        h_f, h_b = bilstm_layer(xpf, xpb, whh_bd, t_blk=t_blk)     # 2 x (T, B, H) bf16

    # Dropout is identity at inference time.
    logits = dense_head(h_f.reshape(N, H), h_b.reshape(N, H),
                        params["w1"], params["b1"], params["w2"], params["b2"],
                        row_block=row_block)                       # (N, C) f32
    logits = logits.reshape(T, B_pad, C)[:, :B, :]
    return jnp.transpose(logits, (1, 0, 2))                        # (B, T, C)


# ----------------------------------------------------------------------------
# Deterministic parameter construction (mirrors nn.LSTM / nn.Linear shapes)
# ----------------------------------------------------------------------------
def make_params(key, num_embeddings, embedding_dim, hidden_dim, n_layers,
                num_classes):
    keys = iter(jax.random.split(key, 64))
    H = hidden_dim
    bound = 1.0 / jnp.sqrt(H)

    def u(shape, b=bound):
        return jax.random.uniform(next(keys), shape, jnp.float32, -b, b)

    params = {
        "embedding": jax.random.normal(next(keys), (num_embeddings, embedding_dim),
                                       jnp.float32),
        "lstm_layers": [],
    }
    for l in range(n_layers):
        din = embedding_dim if l == 0 else 2 * H
        layer = {}
        for suffix in ("f", "b"):
            # PyTorch stores weight_ih as (4H, Din); we keep the transpose for x @ W.
            layer[f"w_ih_{suffix}"] = u((din, 4 * H))
            layer[f"w_hh_{suffix}"] = u((H, 4 * H))
            b_ih = u((4 * H,))
            b_hh = u((4 * H,))
            layer[f"b_{suffix}"] = (b_ih + b_hh).reshape(1, 4 * H)
        params["lstm_layers"].append(layer)

    params["w1"] = u((2 * H, H), 1.0 / jnp.sqrt(2 * H))    # linear: 2H -> H
    params["b1"] = u((1, H), 1.0 / jnp.sqrt(2 * H))
    params["w2"] = u((H, num_classes), 1.0 / jnp.sqrt(H))  # classifier: H -> C
    params["b2"] = u((1, num_classes), 1.0 / jnp.sqrt(H))
    return params


# ----------------------------------------------------------------------------
# Pure-JAX references: f32 module semantics, and bf16-operand variant that
# mirrors the kernel's mixed precision (bf16 matmul operands, f32 accumulate,
# f32 state) for a tight numerical check.
# ----------------------------------------------------------------------------
def _lstm_dir_ref(x_tbd, w_ih, w_hh, b, reverse, bf16_matmul):
    T, B, _ = x_tbd.shape
    H = w_hh.shape[0]
    if bf16_matmul:
        w_ih = w_ih.astype(jnp.bfloat16)
        w_hh = w_hh.astype(jnp.bfloat16)
    xs = x_tbd[::-1] if reverse else x_tbd

    def step(carry, xt):
        h, c = carry
        xm = xt.astype(jnp.bfloat16) if bf16_matmul else xt
        hm = h.astype(jnp.bfloat16) if bf16_matmul else h
        gates = (jnp.dot(xm, w_ih, preferred_element_type=jnp.float32)
                 + jnp.dot(hm, w_hh, preferred_element_type=jnp.float32) + b)
        i = jax.nn.sigmoid(gates[:, 0:H])
        f = jax.nn.sigmoid(gates[:, H:2 * H])
        g = jnp.tanh(gates[:, 2 * H:3 * H])
        o = jax.nn.sigmoid(gates[:, 3 * H:4 * H])
        c = f * c + i * g
        h = o * jnp.tanh(c)
        return (h, c), h

    init = (jnp.zeros((B, H), jnp.float32), jnp.zeros((B, H), jnp.float32))
    _, hs = jax.lax.scan(step, init, xs)
    return hs[::-1] if reverse else hs


def reference_forward(text, params, *, bf16_matmul=False):
    emb = params["embedding"][text].astype(jnp.float32)
    x = jnp.transpose(emb, (1, 0, 2))
    for layer in params["lstm_layers"]:
        hf = _lstm_dir_ref(x, layer["w_ih_f"], layer["w_hh_f"], layer["b_f"],
                           False, bf16_matmul)
        hb = _lstm_dir_ref(x, layer["w_ih_b"], layer["w_hh_b"], layer["b_b"],
                           True, bf16_matmul)
        x = jnp.concatenate([hf, hb], axis=-1)
    T, B, twoH = x.shape
    feats = jnp.transpose(x, (1, 0, 2)).reshape(B * T, twoH)
    if bf16_matmul:
        h = (jnp.dot(feats.astype(jnp.bfloat16), params["w1"].astype(jnp.bfloat16),
                     preferred_element_type=jnp.float32) + params["b1"])
    else:
        h = feats @ params["w1"] + params["b1"]
    elu = jnp.where(h > 0, h, jnp.exp(jnp.minimum(h, 0.0)) - 1.0)
    if bf16_matmul:
        logits = (jnp.dot(elu.astype(jnp.bfloat16), params["w2"].astype(jnp.bfloat16),
                          preferred_element_type=jnp.float32) + params["b2"])
    else:
        logits = elu @ params["w2"] + params["b2"]
    return logits.reshape(B, T, -1)


if __name__ == "__main__":
    # Small, module-consistent shapes.
    NUM_EMBEDDINGS = 50
    EMBEDDING_DIM = 32
    HIDDEN_DIM = 32
    N_LAYERS = 2
    NUM_CLASSES = 4
    BATCH = 2
    SEQ = 8

    key = jax.random.PRNGKey(0)
    k_params, k_text = jax.random.split(key)

    params = make_params(k_params, NUM_EMBEDDINGS, EMBEDDING_DIM, HIDDEN_DIM,
                         N_LAYERS, NUM_CLASSES)
    text = jax.random.randint(k_text, (BATCH, SEQ), 0, NUM_EMBEDDINGS,
                              dtype=jnp.int32)

    fwd = jax.jit(glove_bilstm_forward)
    out = jax.block_until_ready(fwd(text, params))
    assert out.shape == (BATCH, SEQ, NUM_CLASSES), out.shape

    # Tight check vs. a reference with identical mixed precision (bf16 MXU
    # operands, f32 accumulation/state), loose check vs. the pure-f32 module.
    ref_bf16 = jax.block_until_ready(reference_forward(text, params,
                                                       bf16_matmul=True))
    ref_f32 = jax.block_until_ready(reference_forward(text, params,
                                                      bf16_matmul=False))
    err_bf16 = float(jnp.max(jnp.abs(out - ref_bf16)))
    err_f32 = float(jnp.max(jnp.abs(out - ref_f32)))
    assert jnp.allclose(out, ref_bf16, atol=1e-2, rtol=1e-2), (err_bf16, err_f32)
    assert jnp.allclose(out, ref_f32, atol=1.5e-1, rtol=0.0), (err_bf16, err_f32)

    print("KERNEL_OK")
</pallas_src>

<mosaic_0001>
module attributes {stable_mosaic.version = 11 : i64} {
  func.func @kernel(%arg0: i32, %arg1: memref<8x16x32xbf16, #tpu.memory_space<vmem>>, %arg2: memref<32x128xbf16, #tpu.memory_space<vmem>>, %arg3: memref<32x128xbf16, #tpu.memory_space<vmem>>, %arg4: memref<1x128xf32, #tpu.memory_space<vmem>>, %arg5: memref<1x128xf32, #tpu.memory_space<vmem>>, %arg6: memref<8x16x128xf32, #tpu.memory_space<vmem>>, %arg7: memref<8x16x128xf32, #tpu.memory_space<vmem>>) attributes {dimension_semantics = [#tpu.dimension_semantics<parallel>], iteration_bounds = array<i64: 1>, scalar_prefetch = 0 : i64, scratch_operands = 0 : i64, tpu.core_type = #tpu.core_type<tc>, window_params = [{transform_indices = @transform_0, window_bounds = array<i64: 8, 16, 32>}, {pipeline_mode = #tpu.pipeline_mode<synchronous>, transform_indices = @transform_1, window_bounds = array<i64: 32, 128>}, {pipeline_mode = #tpu.pipeline_mode<synchronous>, transform_indices = @transform_2, window_bounds = array<i64: 32, 128>}, {pipeline_mode = #tpu.pipeline_mode<synchronous>, transform_indices = @transform_3, window_bounds = array<i64: 1, 128>}, {pipeline_mode = #tpu.pipeline_mode<synchronous>, transform_indices = @transform_4, window_bounds = array<i64: 1, 128>}, {transform_indices = @transform_5, window_bounds = array<i64: 8, 16, 128>}, {transform_indices = @transform_6, window_bounds = array<i64: 8, 16, 128>}]} {
    %c0 = arith.constant 0 : index
    %c0_0 = arith.constant 0 : index
    %c0_1 = arith.constant 0 : index
    %0 = vector.load %arg1[%c0, %c0_0, %c0_1] : memref<8x16x32xbf16, #tpu.memory_space<vmem>>, vector<8x16x32xbf16>
    %1 = vector.shape_cast %0 : vector<8x16x32xbf16> to vector<128x32xbf16>
    %c0_2 = arith.constant 0 : index
    %c0_3 = arith.constant 0 : index
    %2 = vector.load %arg2[%c0_2, %c0_3] : memref<32x128xbf16, #tpu.memory_space<vmem>>, vector<32x128xbf16>
    %cst = arith.constant dense<0.000000e+00> : vector<128x128xf32>
    %3 = tpu.matmul %1, %2, %cst {dimension_numbers = #tpu.dot_dimension_numbers<[1], [0], [0], [1], [0, 0, 1, 1], [], []>} : vector<128x32xbf16>, vector<32x128xbf16>, vector<128x128xf32> -> vector<128x128xf32>
    %c0_4 = arith.constant 0 : index
    %c0_5 = arith.constant 0 : index
    %4 = vector.load %arg3[%c0_4, %c0_5] : memref<32x128xbf16, #tpu.memory_space<vmem>>, vector<32x128xbf16>
    %cst_6 = arith.constant dense<0.000000e+00> : vector<128x128xf32>
    %5 = tpu.matmul %1, %4, %cst_6 {dimension_numbers = #tpu.dot_dimension_numbers<[1], [0], [0], [1], [0, 0, 1, 1], [], []>} : vector<128x32xbf16>, vector<32x128xbf16>, vector<128x128xf32> -> vector<128x128xf32>
    %c0_7 = arith.constant 0 : index
    %c0_8 = arith.constant 0 : index
    %6 = vector.load %arg4[%c0_7, %c0_8] : memref<1x128xf32, #tpu.memory_space<vmem>>, vector<1x128xf32>
    %7 = vector.broadcast %6 : vector<1x128xf32> to vector<128x128xf32>
    %8 = arith.addf %3, %7 : vector<128x128xf32>
    %9 = vector.shape_cast %8 : vector<128x128xf32> to vector<8x16x128xf32>
    %c0_9 = arith.constant 0 : index
    %c0_10 = arith.constant 0 : index
    %c0_11 = arith.constant 0 : index
    %10 = vector.load %arg6[%c0_9, %c0_10, %c0_11] : memref<8x16x128xf32, #tpu.memory_space<vmem>>, vector<8x16x128xf32>
    tpu.vector_store %arg6[%c0_9, %c0_10, %c0_11], %9 {strides = array<i32>} : memref<8x16x128xf32, #tpu.memory_space<vmem>>, vector<8x16x128xf32>,
    %c0_12 = arith.constant 0 : index
    %c0_13 = arith.constant 0 : index
    %11 = vector.load %arg5[%c0_12, %c0_13] : memref<1x128xf32, #tpu.memory_space<vmem>>, vector<1x128xf32>
    %12 = vector.broadcast %11 : vector<1x128xf32> to vector<128x128xf32>
    %13 = arith.addf %5, %12 : vector<128x128xf32>
    %14 = vector.shape_cast %13 : vector<128x128xf32> to vector<8x16x128xf32>
    %c0_14 = arith.constant 0 : index
    %c0_15 = arith.constant 0 : index
    %c0_16 = arith.constant 0 : index
    %15 = vector.load %arg7[%c0_14, %c0_15, %c0_16] : memref<8x16x128xf32, #tpu.memory_space<vmem>>, vector<8x16x128xf32>
    tpu.vector_store %arg7[%c0_14, %c0_15, %c0_16], %14 {strides = array<i32>} : memref<8x16x128xf32, #tpu.memory_space<vmem>>, vector<8x16x128xf32>,
    return
  }
  func.func @transform_0(%arg0: i32) -> (i32, i32, i32) {
    %c0_i32 = arith.constant 0 : i32
    %c0_i32_0 = arith.constant 0 : i32
    %c0_i32_1 = arith.constant 0 : i32
    return %arg0, %c0_i32, %c0_i32_0 : i32, i32, i32
  }
  func.func @transform_1(%arg0: i32) -> (i32, i32) {
    %c0_i32 = arith.constant 0 : i32
    %c0_i32_0 = arith.constant 0 : i32
    %c0_i32_1 = arith.constant 0 : i32
    return %c0_i32, %c0_i32_0 : i32, i32
  }
  func.func @transform_2(%arg0: i32) -> (i32, i32) {
    %c0_i32 = arith.constant 0 : i32
    %c0_i32_0 = arith.constant 0 : i32
    %c0_i32_1 = arith.constant 0 : i32
    return %c0_i32, %c0_i32_0 : i32, i32
  }
  func.func @transform_3(%arg0: i32) -> (i32, i32) {
    %c0_i32 = arith.constant 0 : i32
    %c0_i32_0 = arith.constant 0 : i32
    %c0_i32_1 = arith.constant 0 : i32
    return %c0_i32, %c0_i32_0 : i32, i32
  }
  func.func @transform_4(%arg0: i32) -> (i32, i32) {
    %c0_i32 = arith.constant 0 : i32
    %c0_i32_0 = arith.constant 0 : i32
    %c0_i32_1 = arith.constant 0 : i32
    return %c0_i32, %c0_i32_0 : i32, i32
  }
  func.func @transform_5(%arg0: i32) -> (i32, i32, i32) {
    %c0_i32 = arith.constant 0 : i32
    %c0_i32_0 = arith.constant 0 : i32
    %c0_i32_1 = arith.constant 0 : i32
    return %arg0, %c0_i32, %c0_i32_0 : i32, i32, i32
  }
  func.func @transform_6(%arg0: i32) -> (i32, i32, i32) {
    %c0_i32 = arith.constant 0 : i32
    %c0_i32_0 = arith.constant 0 : i32
    %c0_i32_1 = arith.constant 0 : i32
    return %arg0, %c0_i32, %c0_i32_0 : i32, i32, i32
  }
}

module attributes {stable_mosaic.version = 11 : i64} {
  func.func @_bilstm_kernel(%arg0: i32, %arg1: memref<8x16x128xf32, #tpu.memory_space<vmem>>, %arg2: memref<8x16x128xf32, #tpu.memory_space<vmem>>, %arg3: memref<64x256xbf16, #tpu.memory_space<vmem>>, %arg4: memref<8x16x32xbf16, #tpu.memory_space<vmem>>, %arg5: memref<8x16x32xbf16, #tpu.memory_space<vmem>>, %arg6: memref<16x32xf32, #tpu.memory_space<vmem>>, %arg7: memref<16x32xf32, #tpu.memory_space<vmem>>, %arg8: memref<16x32xf32, #tpu.memory_space<vmem>>, %arg9: memref<16x32xf32, #tpu.memory_space<vmem>>) attributes {dimension_semantics = [#tpu.dimension_semantics<arbitrary>], iteration_bounds = array<i64: 1>, scalar_prefetch = 0 : i64, scratch_operands = 4 : i64, tpu.core_type = #tpu.core_type<tc>, window_params = [{transform_indices = @transform_0, window_bounds = array<i64: 8, 16, 128>}, {transform_indices = @transform_1, window_bounds = array<i64: 8, 16, 128>}, {pipeline_mode = #tpu.pipeline_mode<synchronous>, transform_indices = @transform_2, window_bounds = array<i64: 64, 256>}, {transform_indices = @transform_3, window_bounds = array<i64: 8, 16, 32>}, {transform_indices = @transform_4, window_bounds = array<i64: 8, 16, 32>}]} {
    %c0_i32 = arith.constant 0 : i32
    %0 = arith.cmpi eq, %arg0, %c0_i32 : i32
    %1 = arith.extui %0 : i1 to i32
    %c0_i32_0 = arith.constant 0 : i32
    %2 = arith.cmpi ne, %1, %c0_i32_0 : i32
    scf.if %2 {
      %cst_258 = arith.constant 0.000000e+00 : f32
      %660 = vector.broadcast %cst_258 : f32 to vector<16x32xf32>
      %c0_259 = arith.constant 0 : index
      %c0_260 = arith.constant 0 : index
      %661 = vector.load %arg6[%c0_259, %c0_260] : memref<16x32xf32, #tpu.memory_space<vmem>>, vector<16x32xf32>
      tpu.vector_store %arg6[%c0_259, %c0_260], %660 {strides = array<i32>} : memref<16x32xf32, #tpu.memory_space<vmem>>, vector<16x32xf32>,
      %cst_261 = arith.constant 0.000000e+00 : f32
      %662 = vector.broadcast %cst_261 : f32 to vector<16x32xf32>
      %c0_262 = arith.constant 0 : index
      %c0_263 = arith.constant 0 : index
      %663 = vector.load %arg7[%c0_262, %c0_263] : memref<16x32xf32, #tpu.memory_space<vmem>>, vector<16x32xf32>
      tpu.vector_store %arg7[%c0_262, %c0_263], %662 {strides = array<i32>} : memref<16x32xf32, #tpu.memory_space<vmem>>, vector<16x32xf32>,
      %cst_264 = arith.constant 0.000000e+00 : f32
      %664 = vector.broadcast %cst_264 : f32 to vector<16x32xf32>
      %c0_265 = arith.constant 0 : index
      %c0_266 = arith.constant 0 : index
      %665 = vector.load %arg8[%c0_265, %c0_266] : memref<16x32xf32, #tpu.memory_space<vmem>>, vector<16x32xf32>
      tpu.vector_store %arg8[%c0_265, %c0_266], %664 {strides = array<i32>} : memref<16x32xf32, #tpu.memory_space<vmem>>, vector<16x32xf32>,
      %cst_267 = arith.constant 0.000000e+00 : f32
      %666 = vector.broadcast %cst_267 : f32 to vector<16x32xf32>
      %c0_268 = arith.constant 0 : index
      %c0_269 = arith.constant 0 : index
      %667 = vector.load %arg9[%c0_268, %c0_269] : memref<16x32xf32, #tpu.memory_space<vmem>>, vector<16x32xf32>
      tpu.vector_store %arg9[%c0_268, %c0_269], %666 {strides = array<i32>} : memref<16x32xf32, #tpu.memory_space<vmem>>, vector<16x32xf32>,
    } else {
    }
    %c0 = arith.constant 0 : index
    %c0_1 = arith.constant 0 : index
    %3 = vector.load %arg3[%c0, %c0_1] : memref<64x256xbf16, #tpu.memory_space<vmem>>, vector<64x256xbf16>
    %c0_i32_2 = arith.constant 0 : i32
    %c7_i32 = arith.constant 7 : i32
    %4 = arith.subi %c7_i32, %c0_i32_2 : i32
    %c0_3 = arith.constant 0 : index
    %c0_4 = arith.constant 0 : index
    %5 = vector.load %arg6[%c0_3, %c0_4] : memref<16x32xf32, #tpu.memory_space<vmem>>, vector<16x32xf32>
    %c0_5 = arith.constant 0 : index
    %c0_6 = arith.constant 0 : index
    %6 = vector.load %arg8[%c0_5, %c0_6] : memref<16x32xf32, #tpu.memory_space<vmem>>, vector<16x32xf32>
    %7 = tpu.concatenate %5, %6 in 1 : vector<16x32xf32>, vector<16x32xf32> -> vector<16x64xf32>
    %8 = arith.truncf %7 : vector<16x64xf32> to vector<16x64xbf16>
    %cst = arith.constant dense<0.000000e+00> : vector<16x256xf32>
    %9 = tpu.matmul %8, %3, %cst {dimension_numbers = #tpu.dot_dimension_numbers<[1], [0], [0], [1], [0, 0, 1, 1], [], []>} : vector<16x64xbf16>, vector<64x256xbf16>, vector<16x256xf32> -> vector<16x256xf32>
    %10 = arith.index_cast %c0_i32_2 : i32 to index
    %c0_7 = arith.constant 0 : index
    %c0_8 = arith.constant 0 : index
    %11 = vector.load %arg1[%10, %c0_7, %c0_8] : memref<8x16x128xf32, #tpu.memory_space<vmem>>, vector<1x16x128xf32>
    %12 = vector.shape_cast %11 : vector<1x16x128xf32> to vector<16x128xf32>
    %13 = vector.extract_strided_slice %9 {offsets = [0, 0], sizes = [16, 128], strides = [1, 1]} : vector<16x256xf32> to vector<16x128xf32>
    %14 = arith.addf %12, %13 : vector<16x128xf32>
    %15 = arith.index_cast %4 : i32 to index
    %c0_9 = arith.constant 0 : index
    %c0_10 = arith.constant 0 : index
    %16 = vector.load %arg2[%15, %c0_9, %c0_10] : memref<8x16x128xf32, #tpu.memory_space<vmem>>, vector<1x16x128xf32>
    %17 = vector.shape_cast %16 : vector<1x16x128xf32> to vector<16x128xf32>
    %18 = vector.extract_strided_slice %9 {offsets = [0, 128], sizes = [16, 128], strides = [1, 1]} : vector<16x256xf32> to vector<16x128xf32>
    %19 = arith.addf %17, %18 : vector<16x128xf32>
    %c0_11 = arith.constant 0 : index
    %c0_12 = arith.constant 0 : index
    %20 = vector.load %arg7[%c0_11, %c0_12] : memref<16x32xf32, #tpu.memory_space<vmem>>, vector<16x32xf32>
    %21 = vector.extract_strided_slice %14 {offsets = [0, 0], sizes = [16, 32], strides = [1, 1]} : vector<16x128xf32> to vector<16x32xf32>
    %22 = arith.negf %21 : vector<16x32xf32>
    %23 = math.exp %22 : vector<16x32xf32>
    %cst_13 = arith.constant 1.000000e+00 : f32
    %24 = vector.broadcast %cst_13 : f32 to vector<16x32xf32>
    %25 = arith.addf %24, %23 : vector<16x32xf32>
    %26 = arith.divf %24, %25 : vector<16x32xf32>
    %27 = vector.extract_strided_slice %14 {offsets = [0, 32], sizes = [16, 32], strides = [1, 1]} : vector<16x128xf32> to vector<16x32xf32>
    %28 = arith.negf %27 : vector<16x32xf32>
    %29 = math.exp %28 : vector<16x32xf32>
    %cst_14 = arith.constant 1.000000e+00 : f32
    %30 = vector.broadcast %cst_14 : f32 to vector<16x32xf32>
    %31 = arith.addf %30, %29 : vector<16x32xf32>
    %32 = arith.divf %30, %31 : vector<16x32xf32>
    %33 = vector.extract_strided_slice %14 {offsets = [0, 64], sizes = [16, 32], strides = [1, 1]} : vector<16x128xf32> to vector<16x32xf32>
    %34 = math.tanh %33 : vector<16x32xf32>
    %35 = vector.extract_strided_slice %14 {offsets = [0, 96], sizes = [16, 32], strides = [1, 1]} : vector<16x128xf32> to vector<16x32xf32>
    %36 = arith.negf %35 : vector<16x32xf32>
    %37 = math.exp %36 : vector<16x32xf32>
    %cst_15 = arith.constant 1.000000e+00 : f32
    %38 = vector.broadcast %cst_15 : f32 to vector<16x32xf32>
    %39 = arith.addf %38, %37 : vector<16x32xf32>
    %40 = arith.divf %38, %39 : vector<16x32xf32>
    %41 = arith.mulf %32, %20 : vector<16x32xf32>
    %42 = arith.mulf %26, %34 : vector<16x32xf32>
    %43 = arith.addf %41, %42 : vector<16x32xf32>
    %44 = math.tanh %43 : vector<16x32xf32>
    %45 = arith.mulf %40, %44 : vector<16x32xf32>
    %c0_16 = arith.constant 0 : index
    %c0_17 = arith.constant 0 : index
    %46 = vector.load %arg9[%c0_16, %c0_17] : memref<16x32xf32, #tpu.memory_space<vmem>>, vector<16x32xf32>
    %47 = vector.extract_strided_slice %19 {offsets = [0, 0], sizes = [16, 32], strides = [1, 1]} : vector<16x128xf32> to vector<16x32xf32>
    %48 = arith.negf %47 : vector<16x32xf32>
    %49 = math.exp %48 : vector<16x32xf32>
    %cst_18 = arith.constant 1.000000e+00 : f32
    %50 = vector.broadcast %cst_18 : f32 to vector<16x32xf32>
    %51 = arith.addf %50, %49 : vector<16x32xf32>
    %52 = arith.divf %50, %51 : vector<16x32xf32>
    %53 = vector.extract_strided_slice %19 {offsets = [0, 32], sizes = [16, 32], strides = [1, 1]} : vector<16x128xf32> to vector<16x32xf32>
    %54 = arith.negf %53 : vector<16x32xf32>
    %55 = math.exp %54 : vector<16x32xf32>
    %cst_19 = arith.constant 1.000000e+00 : f32
    %56 = vector.broadcast %cst_19 : f32 to vector<16x32xf32>
    %57 = arith.addf %56, %55 : vector<16x32xf32>
    %58 = arith.divf %56, %57 : vector<16x32xf32>
    %59 = vector.extract_strided_slice %19 {offsets = [0, 64], sizes = [16, 32], strides = [1, 1]} : vector<16x128xf32> to vector<16x32xf32>
    %60 = math.tanh %59 : vector<16x32xf32>
    %61 = vector.extract_strided_slice %19 {offsets = [0, 96], sizes = [16, 32], strides = [1, 1]} : vector<16x128xf32> to vector<16x32xf32>
    %62 = arith.negf %61 : vector<16x32xf32>
    %63 = math.exp %62 : vector<16x32xf32>
    %cst_20 = arith.constant 1.000000e+00 : f32
    %64 = vector.broadcast %cst_20 : f32 to vector<16x32xf32>
    %65 = arith.addf %64, %63 : vector<16x32xf32>
    %66 = arith.divf %64, %65 : vector<16x32xf32>
    %67 = arith.mulf %58, %46 : vector<16x32xf32>
    %68 = arith.mulf %52, %60 : vector<16x32xf32>
    %69 = arith.addf %67, %68 : vector<16x32xf32>
    %70 = math.tanh %69 : vector<16x32xf32>
    %71 = arith.mulf %66, %70 : vector<16x32xf32>
    %c0_21 = arith.constant 0 : index
    %c0_22 = arith.constant 0 : index
    %72 = vector.load %arg6[%c0_21, %c0_22] : memref<16x32xf32, #tpu.memory_space<vmem>>, vector<16x32xf32>
    tpu.vector_store %arg6[%c0_21, %c0_22], %45 {strides = array<i32>} : memref<16x32xf32, #tpu.memory_space<vmem>>, vector<16x32xf32>,
    %c0_23 = arith.constant 0 : index
    %c0_24 = arith.constant 0 : index
    %73 = vector.load %arg7[%c0_23, %c0_24] : memref<16x32xf32, #tpu.memory_space<vmem>>, vector<16x32xf32>
    tpu.vector_store %arg7[%c0_23, %c0_24], %43 {strides = array<i32>} : memref<16x32xf32, #tpu.memory_space<vmem>>, vector<16x32xf32>,
    %c0_25 = arith.constant 0 : index
    %c0_26 = arith.constant 0 : index
    %74 = vector.load %arg8[%c0_25, %c0_26] : memref<16x32xf32, #tpu.memory_space<vmem>>, vector<16x32xf32>
    tpu.vector_store %arg8[%c0_25, %c0_26], %71 {strides = array<i32>} : memref<16x32xf32, #tpu.memory_space<vmem>>, vector<16x32xf32>,
    %c0_27 = arith.constant 0 : index
    %c0_28 = arith.constant 0 : index
    %75 = vector.load %arg9[%c0_27, %c0_28] : memref<16x32xf32, #tpu.memory_space<vmem>>, vector<16x32xf32>
    tpu.vector_store %arg9[%c0_27, %c0_28], %69 {strides = array<i32>} : memref<16x32xf32, #tpu.memory_space<vmem>>, vector<16x32xf32>,
    %76 = arith.truncf %45 : vector<16x32xf32> to vector<16x32xbf16>
    %77 = arith.index_cast %c0_i32_2 : i32 to index
    %c0_29 = arith.constant 0 : index
    %c0_30 = arith.constant 0 : index
    %78 = vector.load %arg4[%77, %c0_29, %c0_30] : memref<8x16x32xbf16, #tpu.memory_space<vmem>>, vector<1x16x32xbf16>
    %79 = vector.shape_cast %78 : vector<1x16x32xbf16> to vector<16x32xbf16>
    %80 = vector.shape_cast %76 : vector<16x32xbf16> to vector<1x16x32xbf16>
    tpu.vector_store %arg4[%77, %c0_29, %c0_30], %80 {strides = array<i32>} : memref<8x16x32xbf16, #tpu.memory_space<vmem>>, vector<1x16x32xbf16>,
    %81 = arith.truncf %71 : vector<16x32xf32> to vector<16x32xbf16>
    %82 = arith.index_cast %4 : i32 to index
    %c0_31 = arith.constant 0 : index
    %c0_32 = arith.constant 0 : index
    %83 = vector.load %arg5[%82, %c0_31, %c0_32] : memref<8x16x32xbf16, #tpu.memory_space<vmem>>, vector<1x16x32xbf16>
    %84 = vector.shape_cast %83 : vector<1x16x32xbf16> to vector<16x32xbf16>
    %85 = vector.shape_cast %81 : vector<16x32xbf16> to vector<1x16x32xbf16>
    tpu.vector_store %arg5[%82, %c0_31, %c0_32], %85 {strides = array<i32>} : memref<8x16x32xbf16, #tpu.memory_space<vmem>>, vector<1x16x32xbf16>,
    %c1_i32 = arith.constant 1 : i32
    %c7_i32_33 = arith.constant 7 : i32
    %86 = arith.subi %c7_i32_33, %c1_i32 : i32
    %c0_34 = arith.constant 0 : index
    %c0_35 = arith.constant 0 : index
    %87 = vector.load %arg6[%c0_34, %c0_35] : memref<16x32xf32, #tpu.memory_space<vmem>>, vector<16x32xf32>
    %c0_36 = arith.constant 0 : index
    %c0_37 = arith.constant 0 : index
    %88 = vector.load %arg8[%c0_36, %c0_37] : memref<16x32xf32, #tpu.memory_space<vmem>>, vector<16x32xf32>
    %89 = tpu.concatenate %87, %88 in 1 : vector<16x32xf32>, vector<16x32xf32> -> vector<16x64xf32>
    %90 = arith.truncf %89 : vector<16x64xf32> to vector<16x64xbf16>
    %cst_38 = arith.constant dense<0.000000e+00> : vector<16x256xf32>
    %91 = tpu.matmul %90, %3, %cst_38 {dimension_numbers = #tpu.dot_dimension_numbers<[1], [0], [0], [1], [0, 0, 1, 1], [], []>} : vector<16x64xbf16>, vector<64x256xbf16>, vector<16x256xf32> -> vector<16x256xf32>
    %92 = arith.index_cast %c1_i32 : i32 to index
    %c0_39 = arith.constant 0 : index
    %c0_40 = arith.constant 0 : index
    %93 = vector.load %arg1[%92, %c0_39, %c0_40] : memref<8x16x128xf32, #tpu.memory_space<vmem>>, vector<1x16x128xf32>
    %94 = vector.shape_cast %93 : vector<1x16x128xf32> to vector<16x128xf32>
    %95 = vector.extract_strided_slice %91 {offsets = [0, 0], sizes = [16, 128], strides = [1, 1]} : vector<16x256xf32> to vector<16x128xf32>
    %96 = arith.addf %94, %95 : vector<16x128xf32>
    %97 = arith.index_cast %86 : i32 to index
    %c0_41 = arith.constant 0 : index
    %c0_42 = arith.constant 0 : index
    %98 = vector.load %arg2[%97, %c0_41, %c0_42] : memref<8x16x128xf32, #tpu.memory_space<vmem>>, vector<1x16x128xf32>
    %99 = vector.shape_cast %98 : vector<1x16x128xf32> to vector<16x128xf32>
    %100 = vector.extract_strided_slice %91 {offsets = [0, 128], sizes = [16, 128], strides = [1, 1]} : vector<16x256xf32> to vector<16x128xf32>
    %101 = arith.addf %99, %100 : vector<16x128xf32>
    %c0_43 = arith.constant 0 : index
    %c0_44 = arith.constant 0 : index
    %102 = vector.load %arg7[%c0_43, %c0_44] : memref<16x32xf32, #tpu.memory_space<vmem>>, vector<16x32xf32>
    %103 = vector.extract_strided_slice %96 {offsets = [0, 0], sizes = [16, 32], strides = [1, 1]} : vector<16x128xf32> to vector<16x32xf32>
    %104 = arith.negf %103 : vector<16x32xf32>
    %105 = math.exp %104 : vector<16x32xf32>
    %cst_45 = arith.constant 1.000000e+00 : f32
    %106 = vector.broadcast %cst_45 : f32 to vector<16x32xf32>
    %107 = arith.addf %106, %105 : vector<16x32xf32>
    %108 = arith.divf %106, %107 : vector<16x32xf32>
    %109 = vector.extract_strided_slice %96 {offsets = [0, 32], sizes = [16, 32], strides = [1, 1]} : vector<16x128xf32> to vector<16x32xf32>
    %110 = arith.negf %109 : vector<16x32xf32>
    %111 = math.exp %110 : vector<16x32xf32>
    %cst_46 = arith.constant 1.000000e+00 : f32
    %112 = vector.broadcast %cst_46 : f32 to vector<16x32xf32>
    %113 = arith.addf %112, %111 : vector<16x32xf32>
    %114 = arith.divf %112, %113 : vector<16x32xf32>
    %115 = vector.extract_strided_slice %96 {offsets = [0, 64], sizes = [16, 32], strides = [1, 1]} : vector<16x128xf32> to vector<16x32xf32>
    %116 = math.tanh %115 : vector<16x32xf32>
    %117 = vector.extract_strided_slice %96 {offsets = [0, 96], sizes = [16, 32], strides = [1, 1]} : vector<16x128xf32> to vector<16x32xf32>
    %118 = arith.negf %117 : vector<16x32xf32>
    %119 = math.exp %118 : vector<16x32xf32>
    %cst_47 = arith.constant 1.000000e+00 : f32
    %120 = vector.broadcast %cst_47 : f32 to vector<16x32xf32>
    %121 = arith.addf %120, %119 : vector<16x32xf32>
    %122 = arith.divf %120, %121 : vector<16x32xf32>
    %123 = arith.mulf %114, %102 : vector<16x32xf32>
    %124 = arith.mulf %108, %116 : vector<16x32xf32>
    %125 = arith.addf %123, %124 : vector<16x32xf32>
    %126 = math.tanh %125 : vector<16x32xf32>
    %127 = arith.mulf %122, %126 : vector<16x32xf32>
    %c0_48 = arith.constant 0 : index
    %c0_49 = arith.constant 0 : index
    %128 = vector.load %arg9[%c0_48, %c0_49] : memref<16x32xf32, #tpu.memory_space<vmem>>, vector<16x32xf32>
    %129 = vector.extract_strided_slice %101 {offsets = [0, 0], sizes = [16, 32], strides = [1, 1]} : vector<16x128xf32> to vector<16x32xf32>
    %130 = arith.negf %129 : vector<16x32xf32>
    %131 = math.exp %130 : vector<16x32xf32>
    %cst_50 = arith.constant 1.000000e+00 : f32
    %132 = vector.broadcast %cst_50 : f32 to vector<16x32xf32>
    %133 = arith.addf %132, %131 : vector<16x32xf32>
    %134 = arith.divf %132, %133 : vector<16x32xf32>
    %135 = vector.extract_strided_slice %101 {offsets = [0, 32], sizes = [16, 32], strides = [1, 1]} : vector<16x128xf32> to vector<16x32xf32>
    %136 = arith.negf %135 : vector<16x32xf32>
    %137 = math.exp %136 : vector<16x32xf32>
    %cst_51 = arith.constant 1.000000e+00 : f32
    %138 = vector.broadcast %cst_51 : f32 to vector<16x32xf32>
    %139 = arith.addf %138, %137 : vector<16x32xf32>
    %140 = arith.divf %138, %139 : vector<16x32xf32>
    %141 = vector.extract_strided_slice %101 {offsets = [0, 64], sizes = [16, 32], strides = [1, 1]} : vector<16x128xf32> to vector<16x32xf32>
    %142 = math.tanh %141 : vector<16x32xf32>
    %143 = vector.extract_strided_slice %101 {offsets = [0, 96], sizes = [16, 32], strides = [1, 1]} : vector<16x128xf32> to vector<16x32xf32>
    %144 = arith.negf %143 : vector<16x32xf32>
    %145 = math.exp %144 : vector<16x32xf32>
    %cst_52 = arith.constant 1.000000e+00 : f32
    %146 = vector.broadcast %cst_52 : f32 to vector<16x32xf32>
    %147 = arith.addf %146, %145 : vector<16x32xf32>
    %148 = arith.divf %146, %147 : vector<16x32xf32>
    %149 = arith.mulf %140, %128 : vector<16x32xf32>
    %150 = arith.mulf %134, %142 : vector<16x32xf32>
    %151 = arith.addf %149, %150 : vector<16x32xf32>
    %152 = math.tanh %151 : vector<16x32xf32>
    %153 = arith.mulf %148, %152 : vector<16x32xf32>
    %c0_53 = arith.constant 0 : index
    %c0_54 = arith.constant 0 : index
    %154 = vector.load %arg6[%c0_53, %c0_54] : memref<16x32xf32, #tpu.memory_space<vmem>>, vector<16x32xf32>
    tpu.vector_store %arg6[%c0_53, %c0_54], %127 {strides = array<i32>} : memref<16x32xf32, #tpu.memory_space<vmem>>, vector<16x32xf32>,
    %c0_55 = arith.constant 0 : index
    %c0_56 = arith.constant 0 : index
    %155 = vector.load %arg7[%c0_55, %c0_56] : memref<16x32xf32, #tpu.memory_space<vmem>>, vector<16x32xf32>
    tpu.vector_store %arg7[%c0_55, %c0_56], %125 {strides = array<i32>} : memref<16x32xf32, #tpu.memory_space<vmem>>, vector<16x32xf32>,
    %c0_57 = arith.constant 0 : index
    %c0_58 = arith.constant 0 : index
    %156 = vector.load %arg8[%c0_57, %c0_58] : memref<16x32xf32, #tpu.memory_space<vmem>>, vector<16x32xf32>
    tpu.vector_store %arg8[%c0_57, %c0_58], %153 {strides = array<i32>} : memref<16x32xf32, #tpu.memory_space<vmem>>, vector<16x32xf32>,
    %c0_59 = arith.constant 0 : index
    %c0_60 = arith.constant 0 : index
    %157 = vector.load %arg9[%c0_59, %c0_60] : memref<16x32xf32, #tpu.memory_space<vmem>>, vector<16x32xf32>
    tpu.vector_store %arg9[%c0_59, %c0_60], %151 {strides = array<i32>} : memref<16x32xf32, #tpu.memory_space<vmem>>, vector<16x32xf32>,
    %158 = arith.truncf %127 : vector<16x32xf32> to vector<16x32xbf16>
    %159 = arith.index_cast %c1_i32 : i32 to index
    %c0_61 = arith.constant 0 : index
    %c0_62 = arith.constant 0 : index
    %160 = vector.load %arg4[%159, %c0_61, %c0_62] : memref<8x16x32xbf16, #tpu.memory_space<vmem>>, vector<1x16x32xbf16>
    %161 = vector.shape_cast %160 : vector<1x16x32xbf16> to vector<16x32xbf16>
    %162 = vector.shape_cast %158 : vector<16x32xbf16> to vector<1x16x32xbf16>
    tpu.vector_store %arg4[%159, %c0_61, %c0_62], %162 {strides = array<i32>} : memref<8x16x32xbf16, #tpu.memory_space<vmem>>, vector<1x16x32xbf16>,
    %163 = arith.truncf %153 : vector<16x32xf32> to vector<16x32xbf16>
    %164 = arith.index_cast %86 : i32 to index
    %c0_63 = arith.constant 0 : index
    %c0_64 = arith.constant 0 : index
    %165 = vector.load %arg5[%164, %c0_63, %c0_64] : memref<8x16x32xbf16, #tpu.memory_space<vmem>>, vector<1x16x32xbf16>
    %166 = vector.shape_cast %165 : vector<1x16x32xbf16> to vector<16x32xbf16>
    %167 = vector.shape_cast %163 : vector<16x32xbf16> to vector<1x16x32xbf16>
    tpu.vector_store %arg5[%164, %c0_63, %c0_64], %167 {strides = array<i32>} : memref<8x16x32xbf16, #tpu.memory_space<vmem>>, vector<1x16x32xbf16>,
    %c2_i32 = arith.constant 2 : i32
    %c7_i32_65 = arith.constant 7 : i32
    %168 = arith.subi %c7_i32_65, %c2_i32 : i32
    %c0_66 = arith.constant 0 : index
    %c0_67 = arith.constant 0 : index
    %169 = vector.load %arg6[%c0_66, %c0_67] : memref<16x32xf32, #tpu.memory_space<vmem>>, vector<16x32xf32>
    %c0_68 = arith.constant 0 : index
    %c0_69 = arith.constant 0 : index
    %170 = vector.load %arg8[%c0_68, %c0_69] : memref<16x32xf32, #tpu.memory_space<vmem>>, vector<16x32xf32>
    %171 = tpu.concatenate %169, %170 in 1 : vector<16x32xf32>, vector<16x32xf32> -> vector<16x64xf32>
    %172 = arith.truncf %171 : vector<16x64xf32> to vector<16x64xbf16>
    %cst_70 = arith.constant dense<0.000000e+00> : vector<16x256xf32>
    %173 = tpu.matmul %172, %3, %cst_70 {dimension_numbers = #tpu.dot_dimension_numbers<[1], [0], [0], [1], [0, 0, 1, 1], [], []>} : vector<16x64xbf16>, vector<64x256xbf16>, vector<16x256xf32> -> vector<16x256xf32>
    %174 = arith.index_cast %c2_i32 : i32 to index
    %c0_71 = arith.constant 0 : index
    %c0_72 = arith.constant 0 : index
    %175 = vector.load %arg1[%174, %c0_71, %c0_72] : memref<8x16x128xf32, #tpu.memory_space<vmem>>, vector<1x16x128xf32>
    %176 = vector.shape_cast %175 : vector<1x16x128xf32> to vector<16x128xf32>
    %177 = vector.extract_strided_slice %173 {offsets = [0, 0], sizes = [16, 128], strides = [1, 1]} : vector<16x256xf32> to vector<16x128xf32>
    %178 = arith.addf %176, %177 : vector<16x128xf32>
    %179 = arith.index_cast %168 : i32 to index
    %c0_73 = arith.constant 0 : index
    %c0_74 = arith.constant 0 : index
    %180 = vector.load %arg2[%179, %c0_73, %c0_74] : memref<8x16x128xf32, #tpu.memory_space<vmem>>, vector<1x16x128xf32>
    %181 = vector.shape_cast %180 : vector<1x16x128xf32> to vector<16x128xf32>
    %182 = vector.extract_strided_slice %173 {offsets = [0, 128], sizes = [16, 128], strides = [1, 1]} : vector<16x256xf32> to vector<16x128xf32>
    %183 = arith.addf %181, %182 : vector<16x128xf32>
    %c0_75 = arith.constant 0 : index
    %c0_76 = arith.constant 0 : index
    %184 = vector.load %arg7[%c0_75, %c0_76] : memref<16x32xf32, #tpu.memory_space<vmem>>, vector<16x32xf32>
    %185 = vector.extract_strided_slice %178 {offsets = [0, 0], sizes = [16, 32], strides = [1, 1]} : vector<16x128xf32> to vector<16x32xf32>
    %186 = arith.negf %185 : vector<16x32xf32>
    %187 = math.exp %186 : vector<16x32xf32>
    %cst_77 = arith.constant 1.000000e+00 : f32
    %188 = vector.broadcast %cst_77 : f32 to vector<16x32xf32>
    %189 = arith.addf %188, %187 : vector<16x32xf32>
    %190 = arith.divf %188, %189 : vector<16x32xf32>
    %191 = vector.extract_strided_slice %178 {offsets = [0, 32], sizes = [16, 32], strides = [1, 1]} : vector<16x128xf32> to vector<16x32xf32>
    %192 = arith.negf %191 : vector<16x32xf32>
    %193 = math.exp %192 : vector<16x32xf32>
    %cst_78 = arith.constant 1.000000e+00 : f32
    %194 = vector.broadcast %cst_78 : f32 to vector<16x32xf32>
    %195 = arith.addf %194, %193 : vector<16x32xf32>
    %196 = arith.divf %194, %195 : vector<16x32xf32>
    %197 = vector.extract_strided_slice %178 {offsets = [0, 64], sizes = [16, 32], strides = [1, 1]} : vector<16x128xf32> to vector<16x32xf32>
    %198 = math.tanh %197 : vector<16x32xf32>
    %199 = vector.extract_strided_slice %178 {offsets = [0, 96], sizes = [16, 32], strides = [1, 1]} : vector<16x128xf32> to vector<16x32xf32>
    %200 = arith.negf %199 : vector<16x32xf32>
    %201 = math.exp %200 : vector<16x32xf32>
    %cst_79 = arith.constant 1.000000e+00 : f32
    %202 = vector.broadcast %cst_79 : f32 to vector<16x32xf32>
    %203 = arith.addf %202, %201 : vector<16x32xf32>
    %204 = arith.divf %202, %203 : vector<16x32xf32>
    %205 = arith.mulf %196, %184 : vector<16x32xf32>
    %206 = arith.mulf %190, %198 : vector<16x32xf32>
    %207 = arith.addf %205, %206 : vector<16x32xf32>
    %208 = math.tanh %207 : vector<16x32xf32>
    %209 = arith.mulf %204, %208 : vector<16x32xf32>
    %c0_80 = arith.constant 0 : index
    %c0_81 = arith.constant 0 : index
    %210 = vector.load %arg9[%c0_80, %c0_81] : memref<16x32xf32, #tpu.memory_space<vmem>>, vector<16x32xf32>
    %211 = vector.extract_strided_slice %183 {offsets = [0, 0], sizes = [16, 32], strides = [1, 1]} : vector<16x128xf32> to vector<16x32xf32>
    %212 = arith.negf %211 : vector<16x32xf32>
    %213 = math.exp %212 : vector<16x32xf32>
    %cst_82 = arith.constant 1.000000e+00 : f32
    %214 = vector.broadcast %cst_82 : f32 to vector<16x32xf32>
    %215 = arith.addf %214, %213 : vector<16x32xf32>
    %216 = arith.divf %214, %215 : vector<16x32xf32>
    %217 = vector.extract_strided_slice %183 {offsets = [0, 32], sizes = [16, 32], strides = [1, 1]} : vector<16x128xf32> to vector<16x32xf32>
    %218 = arith.negf %217 : vector<16x32xf32>
    %219 = math.exp %218 : vector<16x32xf32>
    %cst_83 = arith.constant 1.000000e+00 : f32
    %220 = vector.broadcast %cst_83 : f32 to vector<16x32xf32>
    %221 = arith.addf %220, %219 : vector<16x32xf32>
    %222 = arith.divf %220, %221 : vector<16x32xf32>
    %223 = vector.extract_strided_slice %183 {offsets = [0, 64], sizes = [16, 32], strides = [1, 1]} : vector<16x128xf32> to vector<16x32xf32>
    %224 = math.tanh %223 : vector<16x32xf32>
    %225 = vector.extract_strided_slice %183 {offsets = [0, 96], sizes = [16, 32], strides = [1, 1]} : vector<16x128xf32> to vector<16x32xf32>
    %226 = arith.negf %225 : vector<16x32xf32>
    %227 = math.exp %226 : vector<16x32xf32>
    %cst_84 = arith.constant 1.000000e+00 : f32
    %228 = vector.broadcast %cst_84 : f32 to vector<16x32xf32>
    %229 = arith.addf %228, %227 : vector<16x32xf32>
    %230 = arith.divf %228, %229 : vector<16x32xf32>
    %231 = arith.mulf %222, %210 : vector<16x32xf32>
    %232 = arith.mulf %216, %224 : vector<16x32xf32>
    %233 = arith.addf %231, %232 : vector<16x32xf32>
    %234 = math.tanh %233 : vector<16x32xf32>
    %235 = arith.mulf %230, %234 : vector<16x32xf32>
    %c0_85 = arith.constant 0 : index
    %c0_86 = arith.constant 0 : index
    %236 = vector.load %arg6[%c0_85, %c0_86] : memref<16x32xf32, #tpu.memory_space<vmem>>, vector<16x32xf32>
    tpu.vector_store %arg6[%c0_85, %c0_86], %209 {strides = array<i32>} : memref<16x32xf32, #tpu.memory_space<vmem>>, vector<16x32xf32>,
    %c0_87 = arith.constant 0 : index
    %c0_88 = arith.constant 0 : index
    %237 = vector.load %arg7[%c0_87, %c0_88] : memref<16x32xf32, #tpu.memory_space<vmem>>, vector<16x32xf32>
    tpu.vector_store %arg7[%c0_87, %c0_88], %207 {strides = array<i32>} : memref<16x32xf32, #tpu.memory_space<vmem>>, vector<16x32xf32>,
    %c0_89 = arith.constant 0 : index
    %c0_90 = arith.constant 0 : index
    %238 = vector.load %arg8[%c0_89, %c0_90] : memref<16x32xf32, #tpu.memory_space<vmem>>, vector<16x32xf32>
    tpu.vector_store %arg8[%c0_89, %c0_90], %235 {strides = array<i32>} : memref<16x32xf32, #tpu.memory_space<vmem>>, vector<16x32xf32>,
    %c0_91 = arith.constant 0 : index
    %c0_92 = arith.constant 0 : index
    %239 = vector.load %arg9[%c0_91, %c0_92] : memref<16x32xf32, #tpu.memory_space<vmem>>, vector<16x32xf32>
    tpu.vector_store %arg9[%c0_91, %c0_92], %233 {strides = array<i32>} : memref<16x32xf32, #tpu.memory_space<vmem>>, vector<16x32xf32>,
    %240 = arith.truncf %209 : vector<16x32xf32> to vector<16x32xbf16>
    %241 = arith.index_cast %c2_i32 : i32 to index
    %c0_93 = arith.constant 0 : index
    %c0_94 = arith.constant 0 : index
    %242 = vector.load %arg4[%241, %c0_93, %c0_94] : memref<8x16x32xbf16, #tpu.memory_space<vmem>>, vector<1x16x32xbf16>
    %243 = vector.shape_cast %242 : vector<1x16x32xbf16> to vector<16x32xbf16>
    %244 = vector.shape_cast %240 : vector<16x32xbf16> to vector<1x16x32xbf16>
    tpu.vector_store %arg4[%241, %c0_93, %c0_94], %244 {strides = array<i32>} : memref<8x16x32xbf16, #tpu.memory_space<vmem>>, vector<1x16x32xbf16>,
    %245 = arith.truncf %235 : vector<16x32xf32> to vector<16x32xbf16>
    %246 = arith.index_cast %168 : i32 to index
    %c0_95 = arith.constant 0 : index
    %c0_96 = arith.constant 0 : index
    %247 = vector.load %arg5[%246, %c0_95, %c0_96] : memref<8x16x32xbf16, #tpu.memory_space<vmem>>, vector<1x16x32xbf16>
    %248 = vector.shape_cast %247 : vector<1x16x32xbf16> to vector<16x32xbf16>
    %249 = vector.shape_cast %245 : vector<16x32xbf16> to vector<1x16x32xbf16>
    tpu.vector_store %arg5[%246, %c0_95, %c0_96], %249 {strides = array<i32>} : memref<8x16x32xbf16, #tpu.memory_space<vmem>>, vector<1x16x32xbf16>,
    %c3_i32 = arith.constant 3 : i32
    %c7_i32_97 = arith.constant 7 : i32
    %250 = arith.subi %c7_i32_97, %c3_i32 : i32
    %c0_98 = arith.constant 0 : index
    %c0_99 = arith.constant 0 : index
    %251 = vector.load %arg6[%c0_98, %c0_99] : memref<16x32xf32, #tpu.memory_space<vmem>>, vector<16x32xf32>
    %c0_100 = arith.constant 0 : index
    %c0_101 = arith.constant 0 : index
    %252 = vector.load %arg8[%c0_100, %c0_101] : memref<16x32xf32, #tpu.memory_space<vmem>>, vector<16x32xf32>
    %253 = tpu.concatenate %251, %252 in 1 : vector<16x32xf32>, vector<16x32xf32> -> vector<16x64xf32>
    %254 = arith.truncf %253 : vector<16x64xf32> to vector<16x64xbf16>
    %cst_102 = arith.constant dense<0.000000e+00> : vector<16x256xf32>
    %255 = tpu.matmul %254, %3, %cst_102 {dimension_numbers = #tpu.dot_dimension_numbers<[1], [0], [0], [1], [0, 0, 1, 1], [], []>} : vector<16x64xbf16>, vector<64x256xbf16>, vector<16x256xf32> -> vector<16x256xf32>
    %256 = arith.index_cast %c3_i32 : i32 to index
    %c0_103 = arith.constant 0 : index
    %c0_104 = arith.constant 0 : index
    %257 = vector.load %arg1[%256, %c0_103, %c0_104] : memref<8x16x128xf32, #tpu.memory_space<vmem>>, vector<1x16x128xf32>
    %258 = vector.shape_cast %257 : vector<1x16x128xf32> to vector<16x128xf32>
    %259 = vector.extract_strided_slice %255 {offsets = [0, 0], sizes = [16, 128], strides = [1, 1]} : vector<16x256xf32> to vector<16x128xf32>
    %260 = arith.addf %258, %259 : vector<16x128xf32>
    %261 = arith.index_cast %250 : i32 to index
    %c0_105 = arith.constant 0 : index
    %c0_106 = arith.constant 0 : index
    %262 = vector.load %arg2[%261, %c0_105, %c0_106] : memref<8x16x128xf32, #tpu.memory_space<vmem>>, vector<1x16x128xf32>
    %263 = vector.shape_cast %262 : vector<1x16x128xf32> to vector<16x128xf32>
    %264 = vector.extract_strided_slice %255 {offsets = [0, 128], sizes = [16, 128], strides = [1, 1]} : vector<16x256xf32> to vector<16x128xf32>
    %265 = arith.addf %263, %264 : vector<16x128xf32>
    %c0_107 = arith.constant 0 : index
    %c0_108 = arith.constant 0 : index
    %266 = vector.load %arg7[%c0_107, %c0_108] : memref<16x32xf32, #tpu.memory_space<vmem>>, vector<16x32xf32>
    %267 = vector.extract_strided_slice %260 {offsets = [0, 0], sizes = [16, 32], strides = [1, 1]} : vector<16x128xf32> to vector<16x32xf32>
    %268 = arith.negf %267 : vector<16x32xf32>
    %269 = math.exp %268 : vector<16x32xf32>
    %cst_109 = arith.constant 1.000000e+00 : f32
    %270 = vector.broadcast %cst_109 : f32 to vector<16x32xf32>
    %271 = arith.addf %270, %269 : vector<16x32xf32>
    %272 = arith.divf %270, %271 : vector<16x32xf32>
    %273 = vector.extract_strided_slice %260 {offsets = [0, 32], sizes = [16, 32], strides = [1, 1]} : vector<16x128xf32> to vector<16x32xf32>
    %274 = arith.negf %273 : vector<16x32xf32>
    %275 = math.exp %274 : vector<16x32xf32>
    %cst_110 = arith.constant 1.000000e+00 : f32
    %276 = vector.broadcast %cst_110 : f32 to vector<16x32xf32>
    %277 = arith.addf %276, %275 : vector<16x32xf32>
    %278 = arith.divf %276, %277 : vector<16x32xf32>
    %279 = vector.extract_strided_slice %260 {offsets = [0, 64], sizes = [16, 32], strides = [1, 1]} : vector<16x128xf32> to vector<16x32xf32>
    %280 = math.tanh %279 : vector<16x32xf32>
    %281 = vector.extract_strided_slice %260 {offsets = [0, 96], sizes = [16, 32], strides = [1, 1]} : vector<16x128xf32> to vector<16x32xf32>
    %282 = arith.negf %281 : vector<16x32xf32>
    %283 = math.exp %282 : vector<16x32xf32>
    %cst_111 = arith.constant 1.000000e+00 : f32
    %284 = vector.broadcast %cst_111 : f32 to vector<16x32xf32>
    %285 = arith.addf %284, %283 : vector<16x32xf32>
    %286 = arith.divf %284, %285 : vector<16x32xf32>
    %287 = arith.mulf %278, %266 : vector<16x32xf32>
    %288 = arith.mulf %272, %280 : vector<16x32xf32>
    %289 = arith.addf %287, %288 : vector<16x32xf32>
    %290 = math.tanh %289 : vector<16x32xf32>
    %291 = arith.mulf %286, %290 : vector<16x32xf32>
    %c0_112 = arith.constant 0 : index
    %c0_113 = arith.constant 0 : index
    %292 = vector.load %arg9[%c0_112, %c0_113] : memref<16x32xf32, #tpu.memory_space<vmem>>, vector<16x32xf32>
    %293 = vector.extract_strided_slice %265 {offsets = [0, 0], sizes = [16, 32], strides = [1, 1]} : vector<16x128xf32> to vector<16x32xf32>
    %294 = arith.negf %293 : vector<16x32xf32>
    %295 = math.exp %294 : vector<16x32xf32>
    %cst_114 = arith.constant 1.000000e+00 : f32
    %296 = vector.broadcast %cst_114 : f32 to vector<16x32xf32>
    %297 = arith.addf %296, %295 : vector<16x32xf32>
    %298 = arith.divf %296, %297 : vector<16x32xf32>
    %299 = vector.extract_strided_slice %265 {offsets = [0, 32], sizes = [16, 32], strides = [1, 1]} : vector<16x128xf32> to vector<16x32xf32>
    %300 = arith.negf %299 : vector<16x32xf32>
    %301 = math.exp %300 : vector<16x32xf32>
    %cst_115 = arith.constant 1.000000e+00 : f32
    %302 = vector.broadcast %cst_115 : f32 to vector<16x32xf32>
    %303 = arith.addf %302, %301 : vector<16x32xf32>
    %304 = arith.divf %302, %303 : vector<16x32xf32>
    %305 = vector.extract_strided_slice %265 {offsets = [0, 64], sizes = [16, 32], strides = [1, 1]} : vector<16x128xf32> to vector<16x32xf32>
    %306 = math.tanh %305 : vector<16x32xf32>
    %307 = vector.extract_strided_slice %265 {offsets = [0, 96], sizes = [16, 32], strides = [1, 1]} : vector<16x128xf32> to vector<16x32xf32>
    %308 = arith.negf %307 : vector<16x32xf32>
    %309 = math.exp %308 : vector<16x32xf32>
    %cst_116 = arith.constant 1.000000e+00 : f32
    %310 = vector.broadcast %cst_116 : f32 to vector<16x32xf32>
    %311 = arith.addf %310, %309 : vector<16x32xf32>
    %312 = arith.divf %310, %311 : vector<16x32xf32>
    %313 = arith.mulf %304, %292 : vector<16x32xf32>
    %314 = arith.mulf %298, %306 : vector<16x32xf32>
    %315 = arith.addf %313, %314 : vector<16x32xf32>
    %316 = math.tanh %315 : vector<16x32xf32>
    %317 = arith.mulf %312, %316 : vector<16x32xf32>
    %c0_117 = arith.constant 0 : index
    %c0_118 = arith.constant 0 : index
    %318 = vector.load %arg6[%c0_117, %c0_118] : memref<16x32xf32, #tpu.memory_space<vmem>>, vector<16x32xf32>
    tpu.vector_store %arg6[%c0_117, %c0_118], %291 {strides = array<i32>} : memref<16x32xf32, #tpu.memory_space<vmem>>, vector<16x32xf32>,
    %c0_119 = arith.constant 0 : index
    %c0_120 = arith.constant 0 : index
    %319 = vector.load %arg7[%c0_119, %c0_120] : memref<16x32xf32, #tpu.memory_space<vmem>>, vector<16x32xf32>
    tpu.vector_store %arg7[%c0_119, %c0_120], %289 {strides = array<i32>} : memref<16x32xf32, #tpu.memory_space<vmem>>, vector<16x32xf32>,
    %c0_121 = arith.constant 0 : index
    %c0_122 = arith.constant 0 : index
    %320 = vector.load %arg8[%c0_121, %c0_122] : memref<16x32xf32, #tpu.memory_space<vmem>>, vector<16x32xf32>
    tpu.vector_store %arg8[%c0_121, %c0_122], %317 {strides = array<i32>} : memref<16x32xf32, #tpu.memory_space<vmem>>, vector<16x32xf32>,
    %c0_123 = arith.constant 0 : index
    %c0_124 = arith.constant 0 : index
    %321 = vector.load %arg9[%c0_123, %c0_124] : memref<16x32xf32, #tpu.memory_space<vmem>>, vector<16x32xf32>
    tpu.vector_store %arg9[%c0_123, %c0_124], %315 {strides = array<i32>} : memref<16x32xf32, #tpu.memory_space<vmem>>, vector<16x32xf32>,
    %322 = arith.truncf %291 : vector<16x32xf32> to vector<16x32xbf16>
    %323 = arith.index_cast %c3_i32 : i32 to index
    %c0_125 = arith.constant 0 : index
    %c0_126 = arith.constant 0 : index
    %324 = vector.load %arg4[%323, %c0_125, %c0_126] : memref<8x16x32xbf16, #tpu.memory_space<vmem>>, vector<1x16x32xbf16>
    %325 = vector.shape_cast %324 : vector<1x16x32xbf16> to vector<16x32xbf16>
    %326 = vector.shape_cast %322 : vector<16x32xbf16> to vector<1x16x32xbf16>
    tpu.vector_store %arg4[%323, %c0_125, %c0_126], %326 {strides = array<i32>} : memref<8x16x32xbf16, #tpu.memory_space<vmem>>, vector<1x16x32xbf16>,
    %327 = arith.truncf %317 : vector<16x32xf32> to vector<16x32xbf16>
    %328 = arith.index_cast %250 : i32 to index
    %c0_127 = arith.constant 0 : index
    %c0_128 = arith.constant 0 : index
    %329 = vector.load %arg5[%328, %c0_127, %c0_128] : memref<8x16x32xbf16, #tpu.memory_space<vmem>>, vector<1x16x32xbf16>
    %330 = vector.shape_cast %329 : vector<1x16x32xbf16> to vector<16x32xbf16>
    %331 = vector.shape_cast %327 : vector<16x32xbf16> to vector<1x16x32xbf16>
    tpu.vector_store %arg5[%328, %c0_127, %c0_128], %331 {strides = array<i32>} : memref<8x16x32xbf16, #tpu.memory_space<vmem>>, vector<1x16x32xbf16>,
    %c4_i32 = arith.constant 4 : i32
    %c7_i32_129 = arith.constant 7 : i32
    %332 = arith.subi %c7_i32_129, %c4_i32 : i32
    %c0_130 = arith.constant 0 : index
    %c0_131 = arith.constant 0 : index
    %333 = vector.load %arg6[%c0_130, %c0_131] : memref<16x32xf32, #tpu.memory_space<vmem>>, vector<16x32xf32>
    %c0_132 = arith.constant 0 : index
    %c0_133 = arith.constant 0 : index
    %334 = vector.load %arg8[%c0_132, %c0_133] : memref<16x32xf32, #tpu.memory_space<vmem>>, vector<16x32xf32>
    %335 = tpu.concatenate %333, %334 in 1 : vector<16x32xf32>, vector<16x32xf32> -> vector<16x64xf32>
    %336 = arith.truncf %335 : vector<16x64xf32> to vector<16x64xbf16>
    %cst_134 = arith.constant dense<0.000000e+00> : vector<16x256xf32>
    %337 = tpu.matmul %336, %3, %cst_134 {dimension_numbers = #tpu.dot_dimension_numbers<[1], [0], [0], [1], [0, 0, 1, 1], [], []>} : vector<16x64xbf16>, vector<64x256xbf16>, vector<16x256xf32> -> vector<16x256xf32>
    %338 = arith.index_cast %c4_i32 : i32 to index
    %c0_135 = arith.constant 0 : index
    %c0_136 = arith.constant 0 : index
    %339 = vector.load %arg1[%338, %c0_135, %c0_136] : memref<8x16x128xf32, #tpu.memory_space<vmem>>, vector<1x16x128xf32>
    %340 = vector.shape_cast %339 : vector<1x16x128xf32> to vector<16x128xf32>
    %341 = vector.extract_strided_slice %337 {offsets = [0, 0], sizes = [16, 128], strides = [1, 1]} : vector<16x256xf32> to vector<16x128xf32>
    %342 = arith.addf %340, %341 : vector<16x128xf32>
    %343 = arith.index_cast %332 : i32 to index
    %c0_137 = arith.constant 0 : index
    %c0_138 = arith.constant 0 : index
    %344 = vector.load %arg2[%343, %c0_137, %c0_138] : memref<8x16x128xf32, #tpu.memory_space<vmem>>, vector<1x16x128xf32>
    %345 = vector.shape_cast %344 : vector<1x16x128xf32> to vector<16x128xf32>
    %346 = vector.extract_strided_slice %337 {offsets = [0, 128], sizes = [16, 128], strides = [1, 1]} : vector<16x256xf32> to vector<16x128xf32>
    %347 = arith.addf %345, %346 : vector<16x128xf32>
    %c0_139 = arith.constant 0 : index
    %c0_140 = arith.constant 0 : index
    %348 = vector.load %arg7[%c0_139, %c0_140] : memref<16x32xf32, #tpu.memory_space<vmem>>, vector<16x32xf32>
    %349 = vector.extract_strided_slice %342 {offsets = [0, 0], sizes = [16, 32], strides = [1, 1]} : vector<16x128xf32> to vector<16x32xf32>
    %350 = arith.negf %349 : vector<16x32xf32>
    %351 = math.exp %350 : vector<16x32xf32>
    %cst_141 = arith.constant 1.000000e+00 : f32
    %352 = vector.broadcast %cst_141 : f32 to vector<16x32xf32>
    %353 = arith.addf %352, %351 : vector<16x32xf32>
    %354 = arith.divf %352, %353 : vector<16x32xf32>
    %355 = vector.extract_strided_slice %342 {offsets = [0, 32], sizes = [16, 32], strides = [1, 1]} : vector<16x128xf32> to vector<16x32xf32>
    %356 = arith.negf %355 : vector<16x32xf32>
    %357 = math.exp %356 : vector<16x32xf32>
    %cst_142 = arith.constant 1.000000e+00 : f32
    %358 = vector.broadcast %cst_142 : f32 to vector<16x32xf32>
    %359 = arith.addf %358, %357 : vector<16x32xf32>
    %360 = arith.divf %358, %359 : vector<16x32xf32>
    %361 = vector.extract_strided_slice %342 {offsets = [0, 64], sizes = [16, 32], strides = [1, 1]} : vector<16x128xf32> to vector<16x32xf32>
    %362 = math.tanh %361 : vector<16x32xf32>
    %363 = vector.extract_strided_slice %342 {offsets = [0, 96], sizes = [16, 32], strides = [1, 1]} : vector<16x128xf32> to vector<16x32xf32>
    %364 = arith.negf %363 : vector<16x32xf32>
    %365 = math.exp %364 : vector<16x32xf32>
    %cst_143 = arith.constant 1.000000e+00 : f32
    %366 = vector.broadcast %cst_143 : f32 to vector<16x32xf32>
    %367 = arith.addf %366, %365 : vector<16x32xf32>
    %368 = arith.divf %366, %367 : vector<16x32xf32>
    %369 = arith.mulf %360, %348 : vector<16x32xf32>
    %370 = arith.mulf %354, %362 : vector<16x32xf32>
    %371 = arith.addf %369, %370 : vector<16x32xf32>
    %372 = math.tanh %371 : vector<16x32xf32>
    %373 = arith.mulf %368, %372 : vector<16x32xf32>
    %c0_144 = arith.constant 0 : index
    %c0_145 = arith.constant 0 : index
    %374 = vector.load %arg9[%c0_144, %c0_145] : memref<16x32xf32, #tpu.memory_space<vmem>>, vector<16x32xf32>
    %375 = vector.extract_strided_slice %347 {offsets = [0, 0], sizes = [16, 32], strides = [1, 1]} : vector<16x128xf32> to vector<16x32xf32>
    %376 = arith.negf %375 : vector<16x32xf32>
    %377 = math.exp %376 : vector<16x32xf32>
    %cst_146 = arith.constant 1.000000e+00 : f32
    %378 = vector.broadcast %cst_146 : f32 to vector<16x32xf32>
    %379 = arith.addf %378, %377 : vector<16x32xf32>
    %380 = arith.divf %378, %379 : vector<16x32xf32>
    %381 = vector.extract_strided_slice %347 {offsets = [0, 32], sizes = [16, 32], strides = [1, 1]} : vector<16x128xf32> to vector<16x32xf32>
    %382 = arith.negf %381 : vector<16x32xf32>
    %383 = math.exp %382 : vector<16x32xf32>
    %cst_147 = arith.constant 1.000000e+00 : f32
    %384 = vector.broadcast %cst_147 : f32 to vector<16x32xf32>
    %385 = arith.addf %384, %383 : vector<16x32xf32>
    %386 = arith.divf %384, %385 : vector<16x32xf32>
    %387 = vector.extract_strided_slice %347 {offsets = [0, 64], sizes = [16, 32], strides = [1, 1]} : vector<16x128xf32> to vector<16x32xf32>
    %388 = math.tanh %387 : vector<16x32xf32>
    %389 = vector.extract_strided_slice %347 {offsets = [0, 96], sizes = [16, 32], strides = [1, 1]} : vector<16x128xf32> to vector<16x32xf32>
    %390 = arith.negf %389 : vector<16x32xf32>
    %391 = math.exp %390 : vector<16x32xf32>
    %cst_148 = arith.constant 1.000000e+00 : f32
    %392 = vector.broadcast %cst_148 : f32 to vector<16x32xf32>
    %393 = arith.addf %392, %391 : vector<16x32xf32>
    %394 = arith.divf %392, %393 : vector<16x32xf32>
    %395 = arith.mulf %386, %374 : vector<16x32xf32>
    %396 = arith.mulf %380, %388 : vector<16x32xf32>
    %397 = arith.addf %395, %396 : vector<16x32xf32>
    %398 = math.tanh %397 : vector<16x32xf32>
    %399 = arith.mulf %394, %398 : vector<16x32xf32>
    %c0_149 = arith.constant 0 : index
    %c0_150 = arith.constant 0 : index
    %400 = vector.load %arg6[%c0_149, %c0_150] : memref<16x32xf32, #tpu.memory_space<vmem>>, vector<16x32xf32>
    tpu.vector_store %arg6[%c0_149, %c0_150], %373 {strides = array<i32>} : memref<16x32xf32, #tpu.memory_space<vmem>>, vector<16x32xf32>,
    %c0_151 = arith.constant 0 : index
    %c0_152 = arith.constant 0 : index
    %401 = vector.load %arg7[%c0_151, %c0_152] : memref<16x32xf32, #tpu.memory_space<vmem>>, vector<16x32xf32>
    tpu.vector_store %arg7[%c0_151, %c0_152], %371 {strides = array<i32>} : memref<16x32xf32, #tpu.memory_space<vmem>>, vector<16x32xf32>,
    %c0_153 = arith.constant 0 : index
    %c0_154 = arith.constant 0 : index
    %402 = vector.load %arg8[%c0_153, %c0_154] : memref<16x32xf32, #tpu.memory_space<vmem>>, vector<16x32xf32>
    tpu.vector_store %arg8[%c0_153, %c0_154], %399 {strides = array<i32>} : memref<16x32xf32, #tpu.memory_space<vmem>>, vector<16x32xf32>,
    %c0_155 = arith.constant 0 : index
    %c0_156 = arith.constant 0 : index
    %403 = vector.load %arg9[%c0_155, %c0_156] : memref<16x32xf32, #tpu.memory_space<vmem>>, vector<16x32xf32>
    tpu.vector_store %arg9[%c0_155, %c0_156], %397 {strides = array<i32>} : memref<16x32xf32, #tpu.memory_space<vmem>>, vector<16x32xf32>,
    %404 = arith.truncf %373 : vector<16x32xf32> to vector<16x32xbf16>
    %405 = arith.index_cast %c4_i32 : i32 to index
    %c0_157 = arith.constant 0 : index
    %c0_158 = arith.constant 0 : index
    %406 = vector.load %arg4[%405, %c0_157, %c0_158] : memref<8x16x32xbf16, #tpu.memory_space<vmem>>, vector<1x16x32xbf16>
    %407 = vector.shape_cast %406 : vector<1x16x32xbf16> to vector<16x32xbf16>
    %408 = vector.shape_cast %404 : vector<16x32xbf16> to vector<1x16x32xbf16>
    tpu.vector_store %arg4[%405, %c0_157, %c0_158], %408 {strides = array<i32>} : memref<8x16x32xbf16, #tpu.memory_space<vmem>>, vector<1x16x32xbf16>,
    %409 = arith.truncf %399 : vector<16x32xf32> to vector<16x32xbf16>
    %410 = arith.index_cast %332 : i32 to index
    %c0_159 = arith.constant 0 : index
    %c0_160 = arith.constant 0 : index
    %411 = vector.load %arg5[%410, %c0_159, %c0_160] : memref<8x16x32xbf16, #tpu.memory_space<vmem>>, vector<1x16x32xbf16>
    %412 = vector.shape_cast %411 : vector<1x16x32xbf16> to vector<16x32xbf16>
    %413 = vector.shape_cast %409 : vector<16x32xbf16> to vector<1x16x32xbf16>
    tpu.vector_store %arg5[%410, %c0_159, %c0_160], %413 {strides = array<i32>} : memref<8x16x32xbf16, #tpu.memory_space<vmem>>, vector<1x16x32xbf16>,
    %c5_i32 = arith.constant 5 : i32
    %c7_i32_161 = arith.constant 7 : i32
    %414 = arith.subi %c7_i32_161, %c5_i32 : i32
    %c0_162 = arith.constant 0 : index
    %c0_163 = arith.constant 0 : index
    %415 = vector.load %arg6[%c0_162, %c0_163] : memref<16x32xf32, #tpu.memory_space<vmem>>, vector<16x32xf32>
    %c0_164 = arith.constant 0 : index
    %c0_165 = arith.constant 0 : index
    %416 = vector.load %arg8[%c0_164, %c0_165] : memref<16x32xf32, #tpu.memory_space<vmem>>, vector<16x32xf32>
    %417 = tpu.concatenate %415, %416 in 1 : vector<16x32xf32>, vector<16x32xf32> -> vector<16x64xf32>
    %418 = arith.truncf %417 : vector<16x64xf32> to vector<16x64xbf16>
    %cst_166 = arith.constant dense<0.000000e+00> : vector<16x256xf32>
    %419 = tpu.matmul %418, %3, %cst_166 {dimension_numbers = #tpu.dot_dimension_numbers<[1], [0], [0], [1], [0, 0, 1, 1], [], []>} : vector<16x64xbf16>, vector<64x256xbf16>, vector<16x256xf32> -> vector<16x256xf32>
    %420 = arith.index_cast %c5_i32 : i32 to index
    %c0_167 = arith.constant 0 : index
    %c0_168 = arith.constant 0 : index
    %421 = vector.load %arg1[%420, %c0_167, %c0_168] : memref<8x16x128xf32, #tpu.memory_space<vmem>>, vector<1x16x128xf32>
    %422 = vector.shape_cast %421 : vector<1x16x128xf32> to vector<16x128xf32>
    %423 = vector.extract_strided_slice %419 {offsets = [0, 0], sizes = [16, 128], strides = [1, 1]} : vector<16x256xf32> to vector<16x128xf32>
    %424 = arith.addf %422, %423 : vector<16x128xf32>
    %425 = arith.index_cast %414 : i32 to index
    %c0_169 = arith.constant 0 : index
    %c0_170 = arith.constant 0 : index
    %426 = vector.load %arg2[%425, %c0_169, %c0_170] : memref<8x16x128xf32, #tpu.memory_space<vmem>>, vector<1x16x128xf32>
    %427 = vector.shape_cast %426 : vector<1x16x128xf32> to vector<16x128xf32>
    %428 = vector.extract_strided_slice %419 {offsets = [0, 128], sizes = [16, 128], strides = [1, 1]} : vector<16x256xf32> to vector<16x128xf32>
    %429 = arith.addf %427, %428 : vector<16x128xf32>
    %c0_171 = arith.constant 0 : index
    %c0_172 = arith.constant 0 : index
    %430 = vector.load %arg7[%c0_171, %c0_172] : memref<16x32xf32, #tpu.memory_space<vmem>>, vector<16x32xf32>
    %431 = vector.extract_strided_slice %424 {offsets = [0, 0], sizes = [16, 32], strides = [1, 1]} : vector<16x128xf32> to vector<16x32xf32>
    %432 = arith.negf %431 : vector<16x32xf32>
    %433 = math.exp %432 : vector<16x32xf32>
    %cst_173 = arith.constant 1.000000e+00 : f32
    %434 = vector.broadcast %cst_173 : f32 to vector<16x32xf32>
    %435 = arith.addf %434, %433 : vector<16x32xf32>
    %436 = arith.divf %434, %435 : vector<16x32xf32>
    %437 = vector.extract_strided_slice %424 {offsets = [0, 32], sizes = [16, 32], strides = [1, 1]} : vector<16x128xf32> to vector<16x32xf32>
    %438 = arith.negf %437 : vector<16x32xf32>
    %439 = math.exp %438 : vector<16x32xf32>
    %cst_174 = arith.constant 1.000000e+00 : f32
    %440 = vector.broadcast %cst_174 : f32 to vector<16x32xf32>
    %441 = arith.addf %440, %439 : vector<16x32xf32>
    %442 = arith.divf %440, %441 : vector<16x32xf32>
    %443 = vector.extract_strided_slice %424 {offsets = [0, 64], sizes = [16, 32], strides = [1, 1]} : vector<16x128xf32> to vector<16x32xf32>
    %444 = math.tanh %443 : vector<16x32xf32>
    %445 = vector.extract_strided_slice %424 {offsets = [0, 96], sizes = [16, 32], strides = [1, 1]} : vector<16x128xf32> to vector<16x32xf32>
    %446 = arith.negf %445 : vector<16x32xf32>
    %447 = math.exp %446 : vector<16x32xf32>
    %cst_175 = arith.constant 1.000000e+00 : f32
    %448 = vector.broadcast %cst_175 : f32 to vector<16x32xf32>
    %449 = arith.addf %448, %447 : vector<16x32xf32>
    %450 = arith.divf %448, %449 : vector<16x32xf32>
    %451 = arith.mulf %442, %430 : vector<16x32xf32>
    %452 = arith.mulf %436, %444 : vector<16x32xf32>
    %453 = arith.addf %451, %452 : vector<16x32xf32>
    %454 = math.tanh %453 : vector<16x32xf32>
    %455 = arith.mulf %450, %454 : vector<16x32xf32>
    %c0_176 = arith.constant 0 : index
    %c0_177 = arith.constant 0 : index
    %456 = vector.load %arg9[%c0_176, %c0_177] : memref<16x32xf32, #tpu.memory_space<vmem>>, vector<16x32xf32>
    %457 = vector.extract_strided_slice %429 {offsets = [0, 0], sizes = [16, 32], strides = [1, 1]} : vector<16x128xf32> to vector<16x32xf32>
    %458 = arith.negf %457 : vector<16x32xf32>
    %459 = math.exp %458 : vector<16x32xf32>
    %cst_178 = arith.constant 1.000000e+00 : f32
    %460 = vector.broadcast %cst_178 : f32 to vector<16x32xf32>
    %461 = arith.addf %460, %459 : vector<16x32xf32>
    %462 = arith.divf %460, %461 : vector<16x32xf32>
    %463 = vector.extract_strided_slice %429 {offsets = [0, 32], sizes = [16, 32], strides = [1, 1]} : vector<16x128xf32> to vector<16x32xf32>
    %464 = arith.negf %463 : vector<16x32xf32>
    %465 = math.exp %464 : vector<16x32xf32>
    %cst_179 = arith.constant 1.000000e+00 : f32
    %466 = vector.broadcast %cst_179 : f32 to vector<16x32xf32>
    %467 = arith.addf %466, %465 : vector<16x32xf32>
    %468 = arith.divf %466, %467 : vector<16x32xf32>
    %469 = vector.extract_strided_slice %429 {offsets = [0, 64], sizes = [16, 32], strides = [1, 1]} : vector<16x128xf32> to vector<16x32xf32>
    %470 = math.tanh %469 : vector<16x32xf32>
    %471 = vector.extract_strided_slice %429 {offsets = [0, 96], sizes = [16, 32], strides = [1, 1]} : vector<16x128xf32> to vector<16x32xf32>
    %472 = arith.negf %471 : vector<16x32xf32>
    %473 = math.exp %472 : vector<16x32xf32>
    %cst_180 = arith.constant 1.000000e+00 : f32
    %474 = vector.broadcast %cst_180 : f32 to vector<16x32xf32>
    %475 = arith.addf %474, %473 : vector<16x32xf32>
    %476 = arith.divf %474, %475 : vector<16x32xf32>
    %477 = arith.mulf %468, %456 : vector<16x32xf32>
    %478 = arith.mulf %462, %470 : vector<16x32xf32>
    %479 = arith.addf %477, %478 : vector<16x32xf32>
    %480 = math.tanh %479 : vector<16x32xf32>
    %481 = arith.mulf %476, %480 : vector<16x32xf32>
    %c0_181 = arith.constant 0 : index
    %c0_182 = arith.constant 0 : index
    %482 = vector.load %arg6[%c0_181, %c0_182] : memref<16x32xf32, #tpu.memory_space<vmem>>, vector<16x32xf32>
    tpu.vector_store %arg6[%c0_181, %c0_182], %455 {strides = array<i32>} : memref<16x32xf32, #tpu.memory_space<vmem>>, vector<16x32xf32>,
    %c0_183 = arith.constant 0 : index
    %c0_184 = arith.constant 0 : index
    %483 = vector.load %arg7[%c0_183, %c0_184] : memref<16x32xf32, #tpu.memory_space<vmem>>, vector<16x32xf32>
    tpu.vector_store %arg7[%c0_183, %c0_184], %453 {strides = array<i32>} : memref<16x32xf32, #tpu.memory_space<vmem>>, vector<16x32xf32>,
    %c0_185 = arith.constant 0 : index
    %c0_186 = arith.constant 0 : index
    %484 = vector.load %arg8[%c0_185, %c0_186] : memref<16x32xf32, #tpu.memory_space<vmem>>, vector<16x32xf32>
    tpu.vector_store %arg8[%c0_185, %c0_186], %481 {strides = array<i32>} : memref<16x32xf32, #tpu.memory_space<vmem>>, vector<16x32xf32>,
    %c0_187 = arith.constant 0 : index
    %c0_188 = arith.constant 0 : index
    %485 = vector.load %arg9[%c0_187, %c0_188] : memref<16x32xf32, #tpu.memory_space<vmem>>, vector<16x32xf32>
    tpu.vector_store %arg9[%c0_187, %c0_188], %479 {strides = array<i32>} : memref<16x32xf32, #tpu.memory_space<vmem>>, vector<16x32xf32>,
    %486 = arith.truncf %455 : vector<16x32xf32> to vector<16x32xbf16>
    %487 = arith.index_cast %c5_i32 : i32 to index
    %c0_189 = arith.constant 0 : index
    %c0_190 = arith.constant 0 : index
    %488 = vector.load %arg4[%487, %c0_189, %c0_190] : memref<8x16x32xbf16, #tpu.memory_space<vmem>>, vector<1x16x32xbf16>
    %489 = vector.shape_cast %488 : vector<1x16x32xbf16> to vector<16x32xbf16>
    %490 = vector.shape_cast %486 : vector<16x32xbf16> to vector<1x16x32xbf16>
    tpu.vector_store %arg4[%487, %c0_189, %c0_190], %490 {strides = array<i32>} : memref<8x16x32xbf16, #tpu.memory_space<vmem>>, vector<1x16x32xbf16>,
    %491 = arith.truncf %481 : vector<16x32xf32> to vector<16x32xbf16>
    %492 = arith.index_cast %414 : i32 to index
    %c0_191 = arith.constant 0 : index
    %c0_192 = arith.constant 0 : index
    %493 = vector.load %arg5[%492, %c0_191, %c0_192] : memref<8x16x32xbf16, #tpu.memory_space<vmem>>, vector<1x16x32xbf16>
    %494 = vector.shape_cast %493 : vector<1x16x32xbf16> to vector<16x32xbf16>
    %495 = vector.shape_cast %491 : vector<16x32xbf16> to vector<1x16x32xbf16>
    tpu.vector_store %arg5[%492, %c0_191, %c0_192], %495 {strides = array<i32>} : memref<8x16x32xbf16, #tpu.memory_space<vmem>>, vector<1x16x32xbf16>,
    %c6_i32 = arith.constant 6 : i32
    %c7_i32_193 = arith.constant 7 : i32
    %496 = arith.subi %c7_i32_193, %c6_i32 : i32
    %c0_194 = arith.constant 0 : index
    %c0_195 = arith.constant 0 : index
    %497 = vector.load %arg6[%c0_194, %c0_195] : memref<16x32xf32, #tpu.memory_space<vmem>>, vector<16x32xf32>
    %c0_196 = arith.constant 0 : index
    %c0_197 = arith.constant 0 : index
    %498 = vector.load %arg8[%c0_196, %c0_197] : memref<16x32xf32, #tpu.memory_space<vmem>>, vector<16x32xf32>
    %499 = tpu.concatenate %497, %498 in 1 : vector<16x32xf32>, vector<16x32xf32> -> vector<16x64xf32>
    %500 = arith.truncf %499 : vector<16x64xf32> to vector<16x64xbf16>
    %cst_198 = arith.constant dense<0.000000e+00> : vector<16x256xf32>
    %501 = tpu.matmul %500, %3, %cst_198 {dimension_numbers = #tpu.dot_dimension_numbers<[1], [0], [0], [1], [0, 0, 1, 1], [], []>} : vector<16x64xbf16>, vector<64x256xbf16>, vector<16x256xf32> -> vector<16x256xf32>
    %502 = arith.index_cast %c6_i32 : i32 to index
    %c0_199 = arith.constant 0 : index
    %c0_200 = arith.constant 0 : index
    %503 = vector.load %arg1[%502, %c0_199, %c0_200] : memref<8x16x128xf32, #tpu.memory_space<vmem>>, vector<1x16x128xf32>
    %504 = vector.shape_cast %503 : vector<1x16x128xf32> to vector<16x128xf32>
    %505 = vector.extract_strided_slice %501 {offsets = [0, 0], sizes = [16, 128], strides = [1, 1]} : vector<16x256xf32> to vector<16x128xf32>
    %506 = arith.addf %504, %505 : vector<16x128xf32>
    %507 = arith.index_cast %496 : i32 to index
    %c0_201 = arith.constant 0 : index
    %c0_202 = arith.constant 0 : index
    %508 = vector.load %arg2[%507, %c0_201, %c0_202] : memref<8x16x128xf32, #tpu.memory_space<vmem>>, vector<1x16x128xf32>
    %509 = vector.shape_cast %508 : vector<1x16x128xf32> to vector<16x128xf32>
    %510 = vector.extract_strided_slice %501 {offsets = [0, 128], sizes = [16, 128], strides = [1, 1]} : vector<16x256xf32> to vector<16x128xf32>
    %511 = arith.addf %509, %510 : vector<16x128xf32>
    %c0_203 = arith.constant 0 : index
    %c0_204 = arith.constant 0 : index
    %512 = vector.load %arg7[%c0_203, %c0_204] : memref<16x32xf32, #tpu.memory_space<vmem>>, vector<16x32xf32>
    %513 = vector.extract_strided_slice %506 {offsets = [0, 0], sizes = [16, 32], strides = [1, 1]} : vector<16x128xf32> to vector<16x32xf32>
    %514 = arith.negf %513 : vector<16x32xf32>
    %515 = math.exp %514 : vector<16x32xf32>
    %cst_205 = arith.constant 1.000000e+00 : f32
    %516 = vector.broadcast %cst_205 : f32 to vector<16x32xf32>
    %517 = arith.addf %516, %515 : vector<16x32xf32>
    %518 = arith.divf %516, %517 : vector<16x32xf32>
    %519 = vector.extract_strided_slice %506 {offsets = [0, 32], sizes = [16, 32], strides = [1, 1]} : vector<16x128xf32> to vector<16x32xf32>
    %520 = arith.negf %519 : vector<16x32xf32>
    %521 = math.exp %520 : vector<16x32xf32>
    %cst_206 = arith.constant 1.000000e+00 : f32
    %522 = vector.broadcast %cst_206 : f32 to vector<16x32xf32>
    %523 = arith.addf %522, %521 : vector<16x32xf32>
    %524 = arith.divf %522, %523 : vector<16x32xf32>
    %525 = vector.extract_strided_slice %506 {offsets = [0, 64], sizes = [16, 32], strides = [1, 1]} : vector<16x128xf32> to vector<16x32xf32>
    %526 = math.tanh %525 : vector<16x32xf32>
    %527 = vector.extract_strided_slice %506 {offsets = [0, 96], sizes = [16, 32], strides = [1, 1]} : vector<16x128xf32> to vector<16x32xf32>
    %528 = arith.negf %527 : vector<16x32xf32>
    %529 = math.exp %528 : vector<16x32xf32>
    %cst_207 = arith.constant 1.000000e+00 : f32
    %530 = vector.broadcast %cst_207 : f32 to vector<16x32xf32>
    %531 = arith.addf %530, %529 : vector<16x32xf32>
    %532 = arith.divf %530, %531 : vector<16x32xf32>
    %533 = arith.mulf %524, %512 : vector<16x32xf32>
    %534 = arith.mulf %518, %526 : vector<16x32xf32>
    %535 = arith.addf %533, %534 : vector<16x32xf32>
    %536 = math.tanh %535 : vector<16x32xf32>
    %537 = arith.mulf %532, %536 : vector<16x32xf32>
    %c0_208 = arith.constant 0 : index
    %c0_209 = arith.constant 0 : index
    %538 = vector.load %arg9[%c0_208, %c0_209] : memref<16x32xf32, #tpu.memory_space<vmem>>, vector<16x32xf32>
    %539 = vector.extract_strided_slice %511 {offsets = [0, 0], sizes = [16, 32], strides = [1, 1]} : vector<16x128xf32> to vector<16x32xf32>
    %540 = arith.negf %539 : vector<16x32xf32>
    %541 = math.exp %540 : vector<16x32xf32>
    %cst_210 = arith.constant 1.000000e+00 : f32
    %542 = vector.broadcast %cst_210 : f32 to vector<16x32xf32>
    %543 = arith.addf %542, %541 : vector<16x32xf32>
    %544 = arith.divf %542, %543 : vector<16x32xf32>
    %545 = vector.extract_strided_slice %511 {offsets = [0, 32], sizes = [16, 32], strides = [1, 1]} : vector<16x128xf32> to vector<16x32xf32>
    %546 = arith.negf %545 : vector<16x32xf32>
    %547 = math.exp %546 : vector<16x32xf32>
    %cst_211 = arith.constant 1.000000e+00 : f32
    %548 = vector.broadcast %cst_211 : f32 to vector<16x32xf32>
    %549 = arith.addf %548, %547 : vector<16x32xf32>
    %550 = arith.divf %548, %549 : vector<16x32xf32>
    %551 = vector.extract_strided_slice %511 {offsets = [0, 64], sizes = [16, 32], strides = [1, 1]} : vector<16x128xf32> to vector<16x32xf32>
    %552 = math.tanh %551 : vector<16x32xf32>
    %553 = vector.extract_strided_slice %511 {offsets = [0, 96], sizes = [16, 32], strides = [1, 1]} : vector<16x128xf32> to vector<16x32xf32>
    %554 = arith.negf %553 : vector<16x32xf32>
    %555 = math.exp %554 : vector<16x32xf32>
    %cst_212 = arith.constant 1.000000e+00 : f32
    %556 = vector.broadcast %cst_212 : f32 to vector<16x32xf32>
    %557 = arith.addf %556, %555 : vector<16x32xf32>
    %558 = arith.divf %556, %557 : vector<16x32xf32>
    %559 = arith.mulf %550, %538 : vector<16x32xf32>
    %560 = arith.mulf %544, %552 : vector<16x32xf32>
    %561 = arith.addf %559, %560 : vector<16x32xf32>
    %562 = math.tanh %561 : vector<16x32xf32>
    %563 = arith.mulf %558, %562 : vector<16x32xf32>
    %c0_213 = arith.constant 0 : index
    %c0_214 = arith.constant 0 : index
    %564 = vector.load %arg6[%c0_213, %c0_214] : memref<16x32xf32, #tpu.memory_space<vmem>>, vector<16x32xf32>
    tpu.vector_store %arg6[%c0_213, %c0_214], %537 {strides = array<i32>} : memref<16x32xf32, #tpu.memory_space<vmem>>, vector<16x32xf32>,
    %c0_215 = arith.constant 0 : index
    %c0_216 = arith.constant 0 : index
    %565 = vector.load %arg7[%c0_215, %c0_216] : memref<16x32xf32, #tpu.memory_space<vmem>>, vector<16x32xf32>
    tpu.vector_store %arg7[%c0_215, %c0_216], %535 {strides = array<i32>} : memref<16x32xf32, #tpu.memory_space<vmem>>, vector<16x32xf32>,
    %c0_217 = arith.constant 0 : index
    %c0_218 = arith.constant 0 : index
    %566 = vector.load %arg8[%c0_217, %c0_218] : memref<16x32xf32, #tpu.memory_space<vmem>>, vector<16x32xf32>
    tpu.vector_store %arg8[%c0_217, %c0_218], %563 {strides = array<i32>} : memref<16x32xf32, #tpu.memory_space<vmem>>, vector<16x32xf32>,
    %c0_219 = arith.constant 0 : index
    %c0_220 = arith.constant 0 : index
    %567 = vector.load %arg9[%c0_219, %c0_220] : memref<16x32xf32, #tpu.memory_space<vmem>>, vector<16x32xf32>
    tpu.vector_store %arg9[%c0_219, %c0_220], %561 {strides = array<i32>} : memref<16x32xf32, #tpu.memory_space<vmem>>, vector<16x32xf32>,
    %568 = arith.truncf %537 : vector<16x32xf32> to vector<16x32xbf16>
    %569 = arith.index_cast %c6_i32 : i32 to index
    %c0_221 = arith.constant 0 : index
    %c0_222 = arith.constant 0 : index
    %570 = vector.load %arg4[%569, %c0_221, %c0_222] : memref<8x16x32xbf16, #tpu.memory_space<vmem>>, vector<1x16x32xbf16>
    %571 = vector.shape_cast %570 : vector<1x16x32xbf16> to vector<16x32xbf16>
    %572 = vector.shape_cast %568 : vector<16x32xbf16> to vector<1x16x32xbf16>
    tpu.vector_store %arg4[%569, %c0_221, %c0_222], %572 {strides = array<i32>} : memref<8x16x32xbf16, #tpu.memory_space<vmem>>, vector<1x16x32xbf16>,
    %573 = arith.truncf %563 : vector<16x32xf32> to vector<16x32xbf16>
    %574 = arith.index_cast %496 : i32 to index
    %c0_223 = arith.constant 0 : index
    %c0_224 = arith.constant 0 : index
    %575 = vector.load %arg5[%574, %c0_223, %c0_224] : memref<8x16x32xbf16, #tpu.memory_space<vmem>>, vector<1x16x32xbf16>
    %576 = vector.shape_cast %575 : vector<1x16x32xbf16> to vector<16x32xbf16>
    %577 = vector.shape_cast %573 : vector<16x32xbf16> to vector<1x16x32xbf16>
    tpu.vector_store %arg5[%574, %c0_223, %c0_224], %577 {strides = array<i32>} : memref<8x16x32xbf16, #tpu.memory_space<vmem>>, vector<1x16x32xbf16>,
    %c7_i32_225 = arith.constant 7 : i32
    %c7_i32_226 = arith.constant 7 : i32
    %578 = arith.subi %c7_i32_226, %c7_i32_225 : i32
    %c0_227 = arith.constant 0 : index
    %c0_228 = arith.constant 0 : index
    %579 = vector.load %arg6[%c0_227, %c0_228] : memref<16x32xf32, #tpu.memory_space<vmem>>, vector<16x32xf32>
    %c0_229 = arith.constant 0 : index
    %c0_230 = arith.constant 0 : index
    %580 = vector.load %arg8[%c0_229, %c0_230] : memref<16x32xf32, #tpu.memory_space<vmem>>, vector<16x32xf32>
    %581 = tpu.concatenate %579, %580 in 1 : vector<16x32xf32>, vector<16x32xf32> -> vector<16x64xf32>
    %582 = arith.truncf %581 : vector<16x64xf32> to vector<16x64xbf16>
    %cst_231 = arith.constant dense<0.000000e+00> : vector<16x256xf32>
    %583 = tpu.matmul %582, %3, %cst_231 {dimension_numbers = #tpu.dot_dimension_numbers<[1], [0], [0], [1], [0, 0, 1, 1], [], []>} : vector<16x64xbf16>, vector<64x256xbf16>, vector<16x256xf32> -> vector<16x256xf32>
    %584 = arith.index_cast %c7_i32_225 : i32 to index
    %c0_232 = arith.constant 0 : index
    %c0_233 = arith.constant 0 : index
    %585 = vector.load %arg1[%584, %c0_232, %c0_233] : memref<8x16x128xf32, #tpu.memory_space<vmem>>, vector<1x16x128xf32>
    %586 = vector.shape_cast %585 : vector<1x16x128xf32> to vector<16x128xf32>
    %587 = vector.extract_strided_slice %583 {offsets = [0, 0], sizes = [16, 128], strides = [1, 1]} : vector<16x256xf32> to vector<16x128xf32>
    %588 = arith.addf %586, %587 : vector<16x128xf32>
    %589 = arith.index_cast %578 : i32 to index
    %c0_234 = arith.constant 0 : index
    %c0_235 = arith.constant 0 : index
    %590 = vector.load %arg2[%589, %c0_234, %c0_235] : memref<8x16x128xf32, #tpu.memory_space<vmem>>, vector<1x16x128xf32>
    %591 = vector.shape_cast %590 : vector<1x16x128xf32> to vector<16x128xf32>
    %592 = vector.extract_strided_slice %583 {offsets = [0, 128], sizes = [16, 128], strides = [1, 1]} : vector<16x256xf32> to vector<16x128xf32>
    %593 = arith.addf %591, %592 : vector<16x128xf32>
    %c0_236 = arith.constant 0 : index
    %c0_237 = arith.constant 0 : index
    %594 = vector.load %arg7[%c0_236, %c0_237] : memref<16x32xf32, #tpu.memory_space<vmem>>, vector<16x32xf32>
    %595 = vector.extract_strided_slice %588 {offsets = [0, 0], sizes = [16, 32], strides = [1, 1]} : vector<16x128xf32> to vector<16x32xf32>
    %596 = arith.negf %595 : vector<16x32xf32>
    %597 = math.exp %596 : vector<16x32xf32>
    %cst_238 = arith.constant 1.000000e+00 : f32
    %598 = vector.broadcast %cst_238 : f32 to vector<16x32xf32>
    %599 = arith.addf %598, %597 : vector<16x32xf32>
    %600 = arith.divf %598, %599 : vector<16x32xf32>
    %601 = vector.extract_strided_slice %588 {offsets = [0, 32], sizes = [16, 32], strides = [1, 1]} : vector<16x128xf32> to vector<16x32xf32>
    %602 = arith.negf %601 : vector<16x32xf32>
    %603 = math.exp %602 : vector<16x32xf32>
    %cst_239 = arith.constant 1.000000e+00 : f32
    %604 = vector.broadcast %cst_239 : f32 to vector<16x32xf32>
    %605 = arith.addf %604, %603 : vector<16x32xf32>
    %606 = arith.divf %604, %605 : vector<16x32xf32>
    %607 = vector.extract_strided_slice %588 {offsets = [0, 64], sizes = [16, 32], strides = [1, 1]} : vector<16x128xf32> to vector<16x32xf32>
    %608 = math.tanh %607 : vector<16x32xf32>
    %609 = vector.extract_strided_slice %588 {offsets = [0, 96], sizes = [16, 32], strides = [1, 1]} : vector<16x128xf32> to vector<16x32xf32>
    %610 = arith.negf %609 : vector<16x32xf32>
    %611 = math.exp %610 : vector<16x32xf32>
    %cst_240 = arith.constant 1.000000e+00 : f32
    %612 = vector.broadcast %cst_240 : f32 to vector<16x32xf32>
    %613 = arith.addf %612, %611 : vector<16x32xf32>
    %614 = arith.divf %612, %613 : vector<16x32xf32>
    %615 = arith.mulf %606, %594 : vector<16x32xf32>
    %616 = arith.mulf %600, %608 : vector<16x32xf32>
    %617 = arith.addf %615, %616 : vector<16x32xf32>
    %618 = math.tanh %617 : vector<16x32xf32>
    %619 = arith.mulf %614, %618 : vector<16x32xf32>
    %c0_241 = arith.constant 0 : index
    %c0_242 = arith.constant 0 : index
    %620 = vector.load %arg9[%c0_241, %c0_242] : memref<16x32xf32, #tpu.memory_space<vmem>>, vector<16x32xf32>
    %621 = vector.extract_strided_slice %593 {offsets = [0, 0], sizes = [16, 32], strides = [1, 1]} : vector<16x128xf32> to vector<16x32xf32>
    %622 = arith.negf %621 : vector<16x32xf32>
    %623 = math.exp %622 : vector<16x32xf32>
    %cst_243 = arith.constant 1.000000e+00 : f32
    %624 = vector.broadcast %cst_243 : f32 to vector<16x32xf32>
    %625 = arith.addf %624, %623 : vector<16x32xf32>
    %626 = arith.divf %624, %625 : vector<16x32xf32>
    %627 = vector.extract_strided_slice %593 {offsets = [0, 32], sizes = [16, 32], strides = [1, 1]} : vector<16x128xf32> to vector<16x32xf32>
    %628 = arith.negf %627 : vector<16x32xf32>
    %629 = math.exp %628 : vector<16x32xf32>
    %cst_244 = arith.constant 1.000000e+00 : f32
    %630 = vector.broadcast %cst_244 : f32 to vector<16x32xf32>
    %631 = arith.addf %630, %629 : vector<16x32xf32>
    %632 = arith.divf %630, %631 : vector<16x32xf32>
    %633 = vector.extract_strided_slice %593 {offsets = [0, 64], sizes = [16, 32], strides = [1, 1]} : vector<16x128xf32> to vector<16x32xf32>
    %634 = math.tanh %633 : vector<16x32xf32>
    %635 = vector.extract_strided_slice %593 {offsets = [0, 96], sizes = [16, 32], strides = [1, 1]} : vector<16x128xf32> to vector<16x32xf32>
    %636 = arith.negf %635 : vector<16x32xf32>
    %637 = math.exp %636 : vector<16x32xf32>
    %cst_245 = arith.constant 1.000000e+00 : f32
    %638 = vector.broadcast %cst_245 : f32 to vector<16x32xf32>
    %639 = arith.addf %638, %637 : vector<16x32xf32>
    %640 = arith.divf %638, %639 : vector<16x32xf32>
    %641 = arith.mulf %632, %620 : vector<16x32xf32>
    %642 = arith.mulf %626, %634 : vector<16x32xf32>
    %643 = arith.addf %641, %642 : vector<16x32xf32>
    %644 = math.tanh %643 : vector<16x32xf32>
    %645 = arith.mulf %640, %644 : vector<16x32xf32>
    %c0_246 = arith.constant 0 : index
    %c0_247 = arith.constant 0 : index
    %646 = vector.load %arg6[%c0_246, %c0_247] : memref<16x32xf32, #tpu.memory_space<vmem>>, vector<16x32xf32>
    tpu.vector_store %arg6[%c0_246, %c0_247], %619 {strides = array<i32>} : memref<16x32xf32, #tpu.memory_space<vmem>>, vector<16x32xf32>,
    %c0_248 = arith.constant 0 : index
    %c0_249 = arith.constant 0 : index
    %647 = vector.load %arg7[%c0_248, %c0_249] : memref<16x32xf32, #tpu.memory_space<vmem>>, vector<16x32xf32>
    tpu.vector_store %arg7[%c0_248, %c0_249], %617 {strides = array<i32>} : memref<16x32xf32, #tpu.memory_space<vmem>>, vector<16x32xf32>,
    %c0_250 = arith.constant 0 : index
    %c0_251 = arith.constant 0 : index
    %648 = vector.load %arg8[%c0_250, %c0_251] : memref<16x32xf32, #tpu.memory_space<vmem>>, vector<16x32xf32>
    tpu.vector_store %arg8[%c0_250, %c0_251], %645 {strides = array<i32>} : memref<16x32xf32, #tpu.memory_space<vmem>>, vector<16x32xf32>,
    %c0_252 = arith.constant 0 : index
    %c0_253 = arith.constant 0 : index
    %649 = vector.load %arg9[%c0_252, %c0_253] : memref<16x32xf32, #tpu.memory_space<vmem>>, vector<16x32xf32>
    tpu.vector_store %arg9[%c0_252, %c0_253], %643 {strides = array<i32>} : memref<16x32xf32, #tpu.memory_space<vmem>>, vector<16x32xf32>,
    %650 = arith.truncf %619 : vector<16x32xf32> to vector<16x32xbf16>
    %651 = arith.index_cast %c7_i32_225 : i32 to index
    %c0_254 = arith.constant 0 : index
    %c0_255 = arith.constant 0 : index
    %652 = vector.load %arg4[%651, %c0_254, %c0_255] : memref<8x16x32xbf16, #tpu.memory_space<vmem>>, vector<1x16x32xbf16>
    %653 = vector.shape_cast %652 : vector<1x16x32xbf16> to vector<16x32xbf16>
    %654 = vector.shape_cast %650 : vector<16x32xbf16> to vector<1x16x32xbf16>
    tpu.vector_store %arg4[%651, %c0_254, %c0_255], %654 {strides = array<i32>} : memref<8x16x32xbf16, #tpu.memory_space<vmem>>, vector<1x16x32xbf16>,
    %655 = arith.truncf %645 : vector<16x32xf32> to vector<16x32xbf16>
    %656 = arith.index_cast %578 : i32 to index
    %c0_256 = arith.constant 0 : index
    %c0_257 = arith.constant 0 : index
    %657 = vector.load %arg5[%656, %c0_256, %c0_257] : memref<8x16x32xbf16, #tpu.memory_space<vmem>>, vector<1x16x32xbf16>
    %658 = vector.shape_cast %657 : vector<1x16x32xbf16> to vector<16x32xbf16>
    %659 = vector.shape_cast %655 : vector<16x32xbf16> to vector<1x16x32xbf16>
    tpu.vector_store %arg5[%656, %c0_256, %c0_257], %659 {strides = array<i32>} : memref<8x16x32xbf16, #tpu.memory_space<vmem>>, vector<1x16x32xbf16>,
    %c8_i32 = arith.constant 8 : i32
    return
  }
  func.func @transform_0(%arg0: i32) -> (i32, i32, i32) {
    %c0_i32 = arith.constant 0 : i32
    %c0_i32_0 = arith.constant 0 : i32
    %c0_i32_1 = arith.constant 0 : i32
    return %arg0, %c0_i32, %c0_i32_0 : i32, i32, i32
  }
  func.func @transform_1(%arg0: i32) -> (i32, i32, i32) {
    %c0_i32 = arith.constant 0 : i32
    %0 = arith.subi %c0_i32, %arg0 : i32
    %c0_i32_0 = arith.constant 0 : i32
    %c0_i32_1 = arith.constant 0 : i32
    %c0_i32_2 = arith.constant 0 : i32
    return %0, %c0_i32_0, %c0_i32_1 : i32, i32, i32
  }
  func.func @transform_2(%arg0: i32) -> (i32, i32) {
    %c0_i32 = arith.constant 0 : i32
    %c0_i32_0 = arith.constant 0 : i32
    %c0_i32_1 = arith.constant 0 : i32
    return %c0_i32, %c0_i32_0 : i32, i32
  }
  func.func @transform_3(%arg0: i32) -> (i32, i32, i32) {
    %c0_i32 = arith.constant 0 : i32
    %c0_i32_0 = arith.constant 0 : i32
    %c0_i32_1 = arith.constant 0 : i32
    return %arg0, %c0_i32, %c0_i32_0 : i32, i32, i32
  }
  func.func @transform_4(%arg0: i32) -> (i32, i32, i32) {
    %c0_i32 = arith.constant 0 : i32
    %0 = arith.subi %c0_i32, %arg0 : i32
    %c0_i32_0 = arith.constant 0 : i32
    %c0_i32_1 = arith.constant 0 : i32
    %c0_i32_2 = arith.constant 0 : i32
    return %0, %c0_i32_0, %c0_i32_1 : i32, i32, i32
  }
}

module attributes {stable_mosaic.version = 11 : i64} {
  func.func @kernel(%arg0: i32, %arg1: memref<8x16x32xbf16, #tpu.memory_space<vmem>>, %arg2: memref<8x16x32xbf16, #tpu.memory_space<vmem>>, %arg3: memref<32x128xbf16, #tpu.memory_space<vmem>>, %arg4: memref<32x128xbf16, #tpu.memory_space<vmem>>, %arg5: memref<32x128xbf16, #tpu.memory_space<vmem>>, %arg6: memref<32x128xbf16, #tpu.memory_space<vmem>>, %arg7: memref<1x128xf32, #tpu.memory_space<vmem>>, %arg8: memref<1x128xf32, #tpu.memory_space<vmem>>, %arg9: memref<8x16x128xf32, #tpu.memory_space<vmem>>, %arg10: memref<8x16x128xf32, #tpu.memory_space<vmem>>) attributes {dimension_semantics = [#tpu.dimension_semantics<parallel>], iteration_bounds = array<i64: 1>, scalar_prefetch = 0 : i64, scratch_operands = 0 : i64, tpu.core_type = #tpu.core_type<tc>, window_params = [{transform_indices = @transform_0, window_bounds = array<i64: 8, 16, 32>}, {transform_indices = @transform_1, window_bounds = array<i64: 8, 16, 32>}, {pipeline_mode = #tpu.pipeline_mode<synchronous>, transform_indices = @transform_2, window_bounds = array<i64: 32, 128>}, {pipeline_mode = #tpu.pipeline_mode<synchronous>, transform_indices = @transform_3, window_bounds = array<i64: 32, 128>}, {pipeline_mode = #tpu.pipeline_mode<synchronous>, transform_indices = @transform_4, window_bounds = array<i64: 32, 128>}, {pipeline_mode = #tpu.pipeline_mode<synchronous>, transform_indices = @transform_5, window_bounds = array<i64: 32, 128>}, {pipeline_mode = #tpu.pipeline_mode<synchronous>, transform_indices = @transform_6, window_bounds = array<i64: 1, 128>}, {pipeline_mode = #tpu.pipeline_mode<synchronous>, transform_indices = @transform_7, window_bounds = array<i64: 1, 128>}, {transform_indices = @transform_8, window_bounds = array<i64: 8, 16, 128>}, {transform_indices = @transform_9, window_bounds = array<i64: 8, 16, 128>}]} {
    %c0 = arith.constant 0 : index
    %c0_0 = arith.constant 0 : index
    %c0_1 = arith.constant 0 : index
    %0 = vector.load %arg1[%c0, %c0_0, %c0_1] : memref<8x16x32xbf16, #tpu.memory_space<vmem>>, vector<8x16x32xbf16>
    %1 = vector.shape_cast %0 : vector<8x16x32xbf16> to vector<128x32xbf16>
    %c0_2 = arith.constant 0 : index
    %c0_3 = arith.constant 0 : index
    %2 = vector.load %arg3[%c0_2, %c0_3] : memref<32x128xbf16, #tpu.memory_space<vmem>>, vector<32x128xbf16>
    %cst = arith.constant dense<0.000000e+00> : vector<128x128xf32>
    %3 = tpu.matmul %1, %2, %cst {dimension_numbers = #tpu.dot_dimension_numbers<[1], [0], [0], [1], [0, 0, 1, 1], [], []>} : vector<128x32xbf16>, vector<32x128xbf16>, vector<128x128xf32> -> vector<128x128xf32>
    %c0_4 = arith.constant 0 : index
    %c0_5 = arith.constant 0 : index
    %4 = vector.load %arg5[%c0_4, %c0_5] : memref<32x128xbf16, #tpu.memory_space<vmem>>, vector<32x128xbf16>
    %cst_6 = arith.constant dense<0.000000e+00> : vector<128x128xf32>
    %5 = tpu.matmul %1, %4, %cst_6 {dimension_numbers = #tpu.dot_dimension_numbers<[1], [0], [0], [1], [0, 0, 1, 1], [], []>} : vector<128x32xbf16>, vector<32x128xbf16>, vector<128x128xf32> -> vector<128x128xf32>
    %c0_7 = arith.constant 0 : index
    %c0_8 = arith.constant 0 : index
    %c0_9 = arith.constant 0 : index
    %6 = vector.load %arg2[%c0_7, %c0_8, %c0_9] : memref<8x16x32xbf16, #tpu.memory_space<vmem>>, vector<8x16x32xbf16>
    %7 = vector.shape_cast %6 : vector<8x16x32xbf16> to vector<128x32xbf16>
    %c0_10 = arith.constant 0 : index
    %c0_11 = arith.constant 0 : index
    %8 = vector.load %arg4[%c0_10, %c0_11] : memref<32x128xbf16, #tpu.memory_space<vmem>>, vector<32x128xbf16>
    %cst_12 = arith.constant dense<0.000000e+00> : vector<128x128xf32>
    %9 = tpu.matmul %7, %8, %cst_12 {dimension_numbers = #tpu.dot_dimension_numbers<[1], [0], [0], [1], [0, 0, 1, 1], [], []>} : vector<128x32xbf16>, vector<32x128xbf16>, vector<128x128xf32> -> vector<128x128xf32>
    %c0_13 = arith.constant 0 : index
    %c0_14 = arith.constant 0 : index
    %10 = vector.load %arg6[%c0_13, %c0_14] : memref<32x128xbf16, #tpu.memory_space<vmem>>, vector<32x128xbf16>
    %cst_15 = arith.constant dense<0.000000e+00> : vector<128x128xf32>
    %11 = tpu.matmul %7, %10, %cst_15 {dimension_numbers = #tpu.dot_dimension_numbers<[1], [0], [0], [1], [0, 0, 1, 1], [], []>} : vector<128x32xbf16>, vector<32x128xbf16>, vector<128x128xf32> -> vector<128x128xf32>
    %12 = arith.addf %3, %9 : vector<128x128xf32>
    %13 = arith.addf %5, %11 : vector<128x128xf32>
    %c0_16 = arith.constant 0 : index
    %c0_17 = arith.constant 0 : index
    %14 = vector.load %arg7[%c0_16, %c0_17] : memref<1x128xf32, #tpu.memory_space<vmem>>, vector<1x128xf32>
    %15 = vector.broadcast %14 : vector<1x128xf32> to vector<128x128xf32>
    %16 = arith.addf %12, %15 : vector<128x128xf32>
    %17 = vector.shape_cast %16 : vector<128x128xf32> to vector<8x16x128xf32>
    %c0_18 = arith.constant 0 : index
    %c0_19 = arith.constant 0 : index
    %c0_20 = arith.constant 0 : index
    %18 = vector.load %arg9[%c0_18, %c0_19, %c0_20] : memref<8x16x128xf32, #tpu.memory_space<vmem>>, vector<8x16x128xf32>
    tpu.vector_store %arg9[%c0_18, %c0_19, %c0_20], %17 {strides = array<i32>} : memref<8x16x128xf32, #tpu.memory_space<vmem>>, vector<8x16x128xf32>,
    %c0_21 = arith.constant 0 : index
    %c0_22 = arith.constant 0 : index
    %19 = vector.load %arg8[%c0_21, %c0_22] : memref<1x128xf32, #tpu.memory_space<vmem>>, vector<1x128xf32>
    %20 = vector.broadcast %19 : vector<1x128xf32> to vector<128x128xf32>
    %21 = arith.addf %13, %20 : vector<128x128xf32>
    %22 = vector.shape_cast %21 : vector<128x128xf32> to vector<8x16x128xf32>
    %c0_23 = arith.constant 0 : index
    %c0_24 = arith.constant 0 : index
    %c0_25 = arith.constant 0 : index
    %23 = vector.load %arg10[%c0_23, %c0_24, %c0_25] : memref<8x16x128xf32, #tpu.memory_space<vmem>>, vector<8x16x128xf32>
    tpu.vector_store %arg10[%c0_23, %c0_24, %c0_25], %22 {strides = array<i32>} : memref<8x16x128xf32, #tpu.memory_space<vmem>>, vector<8x16x128xf32>,
    return
  }
  func.func @transform_0(%arg0: i32) -> (i32, i32, i32) {
    %c0_i32 = arith.constant 0 : i32
    %c0_i32_0 = arith.constant 0 : i32
    %c0_i32_1 = arith.constant 0 : i32
    return %arg0, %c0_i32, %c0_i32_0 : i32, i32, i32
  }
  func.func @transform_1(%arg0: i32) -> (i32, i32, i32) {
    %c0_i32 = arith.constant 0 : i32
    %c0_i32_0 = arith.constant 0 : i32
    %c0_i32_1 = arith.constant 0 : i32
    return %arg0, %c0_i32, %c0_i32_0 : i32, i32, i32
  }
  func.func @transform_2(%arg0: i32) -> (i32, i32) {
    %c0_i32 = arith.constant 0 : i32
    %c0_i32_0 = arith.constant 0 : i32
    %c0_i32_1 = arith.constant 0 : i32
    return %c0_i32, %c0_i32_0 : i32, i32
  }
  func.func @transform_3(%arg0: i32) -> (i32, i32) {
    %c0_i32 = arith.constant 0 : i32
    %c0_i32_0 = arith.constant 0 : i32
    %c0_i32_1 = arith.constant 0 : i32
    return %c0_i32, %c0_i32_0 : i32, i32
  }
  func.func @transform_4(%arg0: i32) -> (i32, i32) {
    %c0_i32 = arith.constant 0 : i32
    %c0_i32_0 = arith.constant 0 : i32
    %c0_i32_1 = arith.constant 0 : i32
    return %c0_i32, %c0_i32_0 : i32, i32
  }
  func.func @transform_5(%arg0: i32) -> (i32, i32) {
    %c0_i32 = arith.constant 0 : i32
    %c0_i32_0 = arith.constant 0 : i32
    %c0_i32_1 = arith.constant 0 : i32
    return %c0_i32, %c0_i32_0 : i32, i32
  }
  func.func @transform_6(%arg0: i32) -> (i32, i32) {
    %c0_i32 = arith.constant 0 : i32
    %c0_i32_0 = arith.constant 0 : i32
    %c0_i32_1 = arith.constant 0 : i32
    return %c0_i32, %c0_i32_0 : i32, i32
  }
  func.func @transform_7(%arg0: i32) -> (i32, i32) {
    %c0_i32 = arith.constant 0 : i32
    %c0_i32_0 = arith.constant 0 : i32
    %c0_i32_1 = arith.constant 0 : i32
    return %c0_i32, %c0_i32_0 : i32, i32
  }
  func.func @transform_8(%arg0: i32) -> (i32, i32, i32) {
    %c0_i32 = arith.constant 0 : i32
    %c0_i32_0 = arith.constant 0 : i32
    %c0_i32_1 = arith.constant 0 : i32
    return %arg0, %c0_i32, %c0_i32_0 : i32, i32, i32
  }
  func.func @transform_9(%arg0: i32) -> (i32, i32, i32) {
    %c0_i32 = arith.constant 0 : i32
    %c0_i32_0 = arith.constant 0 : i32
    %c0_i32_1 = arith.constant 0 : i32
    return %arg0, %c0_i32, %c0_i32_0 : i32, i32, i32
  }
}

module attributes {stable_mosaic.version = 11 : i64} {
  func.func @_head_kernel(%arg0: i32, %arg1: memref<128x32xbf16, #tpu.memory_space<vmem>>, %arg2: memref<128x32xbf16, #tpu.memory_space<vmem>>, %arg3: memref<32x32xbf16, #tpu.memory_space<vmem>>, %arg4: memref<32x32xbf16, #tpu.memory_space<vmem>>, %arg5: memref<1x32xf32, #tpu.memory_space<vmem>>, %arg6: memref<32x128xbf16, #tpu.memory_space<vmem>>, %arg7: memref<1x128xf32, #tpu.memory_space<vmem>>, %arg8: memref<128x128xf32, #tpu.memory_space<vmem>>) attributes {dimension_semantics = [#tpu.dimension_semantics<parallel>], iteration_bounds = array<i64: 1>, scalar_prefetch = 0 : i64, scratch_operands = 0 : i64, tpu.core_type = #tpu.core_type<tc>, window_params = [{transform_indices = @transform_0, window_bounds = array<i64: 128, 32>}, {transform_indices = @transform_1, window_bounds = array<i64: 128, 32>}, {pipeline_mode = #tpu.pipeline_mode<synchronous>, transform_indices = @transform_2, window_bounds = array<i64: 32, 32>}, {pipeline_mode = #tpu.pipeline_mode<synchronous>, transform_indices = @transform_3, window_bounds = array<i64: 32, 32>}, {pipeline_mode = #tpu.pipeline_mode<synchronous>, transform_indices = @transform_4, window_bounds = array<i64: 1, 32>}, {pipeline_mode = #tpu.pipeline_mode<synchronous>, transform_indices = @transform_5, window_bounds = array<i64: 32, 128>}, {pipeline_mode = #tpu.pipeline_mode<synchronous>, transform_indices = @transform_6, window_bounds = array<i64: 1, 128>}, {transform_indices = @transform_7, window_bounds = array<i64: 128, 128>}]} {
    %c0 = arith.constant 0 : index
    %c0_0 = arith.constant 0 : index
    %0 = vector.load %arg1[%c0, %c0_0] : memref<128x32xbf16, #tpu.memory_space<vmem>>, vector<128x32xbf16>
    %c0_1 = arith.constant 0 : index
    %c0_2 = arith.constant 0 : index
    %1 = vector.load %arg3[%c0_1, %c0_2] : memref<32x32xbf16, #tpu.memory_space<vmem>>, vector<32x32xbf16>
    %cst = arith.constant dense<0.000000e+00> : vector<128x32xf32>
    %2 = tpu.matmul %0, %1, %cst {dimension_numbers = #tpu.dot_dimension_numbers<[1], [0], [0], [1], [0, 0, 1, 1], [], []>} : vector<128x32xbf16>, vector<32x32xbf16>, vector<128x32xf32> -> vector<128x32xf32>
    %c0_3 = arith.constant 0 : index
    %c0_4 = arith.constant 0 : index
    %3 = vector.load %arg2[%c0_3, %c0_4] : memref<128x32xbf16, #tpu.memory_space<vmem>>, vector<128x32xbf16>
    %c0_5 = arith.constant 0 : index
    %c0_6 = arith.constant 0 : index
    %4 = vector.load %arg4[%c0_5, %c0_6] : memref<32x32xbf16, #tpu.memory_space<vmem>>, vector<32x32xbf16>
    %cst_7 = arith.constant dense<0.000000e+00> : vector<128x32xf32>
    %5 = tpu.matmul %3, %4, %cst_7 {dimension_numbers = #tpu.dot_dimension_numbers<[1], [0], [0], [1], [0, 0, 1, 1], [], []>} : vector<128x32xbf16>, vector<32x32xbf16>, vector<128x32xf32> -> vector<128x32xf32>
    %6 = arith.addf %2, %5 : vector<128x32xf32>
    %c0_8 = arith.constant 0 : index
    %c0_9 = arith.constant 0 : index
    %7 = vector.load %arg5[%c0_8, %c0_9] : memref<1x32xf32, #tpu.memory_space<vmem>>, vector<1x32xf32>
    %8 = vector.broadcast %7 : vector<1x32xf32> to vector<128x32xf32>
    %9 = arith.addf %6, %8 : vector<128x32xf32>
    %cst_10 = arith.constant 0.000000e+00 : f32
    %10 = vector.broadcast %cst_10 : f32 to vector<128x32xf32>
    %11 = arith.cmpf ogt, %9, %10 : vector<128x32xf32>
    %cst_11 = arith.constant 0.000000e+00 : f32
    %12 = vector.broadcast %cst_11 : f32 to vector<128x32xf32>
    %13 = arith.minimumf %9, %12 : vector<128x32xf32>
    %14 = math.exp %13 : vector<128x32xf32>
    %cst_12 = arith.constant 1.000000e+00 : f32
    %15 = vector.broadcast %cst_12 : f32 to vector<128x32xf32>
    %16 = arith.subf %14, %15 : vector<128x32xf32>
    %17 = arith.select %11, %9, %16 : vector<128x32xi1>, vector<128x32xf32>
    %18 = arith.truncf %17 : vector<128x32xf32> to vector<128x32xbf16>
    %c0_13 = arith.constant 0 : index
    %c0_14 = arith.constant 0 : index
    %19 = vector.load %arg6[%c0_13, %c0_14] : memref<32x128xbf16, #tpu.memory_space<vmem>>, vector<32x128xbf16>
    %cst_15 = arith.constant dense<0.000000e+00> : vector<128x128xf32>
    %20 = tpu.matmul %18, %19, %cst_15 {dimension_numbers = #tpu.dot_dimension_numbers<[1], [0], [0], [1], [0, 0, 1, 1], [], []>} : vector<128x32xbf16>, vector<32x128xbf16>, vector<128x128xf32> -> vector<128x128xf32>
    %c0_16 = arith.constant 0 : index
    %c0_17 = arith.constant 0 : index
    %21 = vector.load %arg7[%c0_16, %c0_17] : memref<1x128xf32, #tpu.memory_space<vmem>>, vector<1x128xf32>
    %22 = vector.broadcast %21 : vector<1x128xf32> to vector<128x128xf32>
    %23 = arith.addf %20, %22 : vector<128x128xf32>
    %c0_18 = arith.constant 0 : index
    %c0_19 = arith.constant 0 : index
    %24 = vector.load %arg8[%c0_18, %c0_19] : memref<128x128xf32, #tpu.memory_space<vmem>>, vector<128x128xf32>
    tpu.vector_store %arg8[%c0_18, %c0_19], %23 {strides = array<i32>} : memref<128x128xf32, #tpu.memory_space<vmem>>, vector<128x128xf32>,
    return
  }
  func.func @transform_0(%arg0: i32) -> (i32, i32) {
    %c0_i32 = arith.constant 0 : i32
    %c0_i32_0 = arith.constant 0 : i32
    return %arg0, %c0_i32 : i32, i32
  }
  func.func @transform_1(%arg0: i32) -> (i32, i32) {
    %c0_i32 = arith.constant 0 : i32
    %c0_i32_0 = arith.constant 0 : i32
    return %arg0, %c0_i32 : i32, i32
  }
  func.func @transform_2(%arg0: i32) -> (i32, i32) {
    %c0_i32 = arith.constant 0 : i32
    %c0_i32_0 = arith.constant 0 : i32
    %c0_i32_1 = arith.constant 0 : i32
    return %c0_i32, %c0_i32_0 : i32, i32
  }
  func.func @transform_3(%arg0: i32) -> (i32, i32) {
    %c0_i32 = arith.constant 0 : i32
    %c0_i32_0 = arith.constant 0 : i32
    %c0_i32_1 = arith.constant 0 : i32
    return %c0_i32, %c0_i32_0 : i32, i32
  }
  func.func @transform_4(%arg0: i32) -> (i32, i32) {
    %c0_i32 = arith.constant 0 : i32
    %c0_i32_0 = arith.constant 0 : i32
    %c0_i32_1 = arith.constant 0 : i32
    return %c0_i32, %c0_i32_0 : i32, i32
  }
  func.func @transform_5(%arg0: i32) -> (i32, i32) {
    %c0_i32 = arith.constant 0 : i32
    %c0_i32_0 = arith.constant 0 : i32
    %c0_i32_1 = arith.constant 0 : i32
    return %c0_i32, %c0_i32_0 : i32, i32
  }
  func.func @transform_6(%arg0: i32) -> (i32, i32) {
    %c0_i32 = arith.constant 0 : i32
    %c0_i32_0 = arith.constant 0 : i32
    %c0_i32_1 = arith.constant 0 : i32
    return %c0_i32, %c0_i32_0 : i32, i32
  }
  func.func @transform_7(%arg0: i32) -> (i32, i32) {
    %c0_i32 = arith.constant 0 : i32
    %c0_i32_0 = arith.constant 0 : i32
    return %arg0, %c0_i32 : i32, i32
  }
}

</mosaic_0001>

<llo_original>
// kernel: glove_bilstm_forward.5
$region0: #{glove_bilstm_forward.5}
  #allocation0 [shape = 'u32[]', space=smem, size = 0x4, offset = 0x4, fixed_abs, tag = 'smem constant byte address 0x4 - core index']
  #allocation1 [shape = 'u32[144,128]{1,0:T(1,128)}', space=vmem, size = 0x12000, scoped, tag = 'internal scratch']
  %s0 = inlined_call_operand.vmem [shape: bf16[8,16,32], index: 0, kind: input, shape index: {}]
  %s1 = inlined_call_operand.vmem [shape: bf16[32,128], index: 1, kind: input, shape index: {}]
  %s2 = inlined_call_operand.vmem [shape: bf16[32,128], index: 2, kind: input, shape index: {}]
  %s3 = inlined_call_operand.vmem [shape: f32[1,128], index: 3, kind: input, shape index: {}]
  %s4 = inlined_call_operand.vmem [shape: f32[1,128], index: 4, kind: input, shape index: {}]
  %s5 = inlined_call_operand.vmem [shape: f32[8,16,128], index: 5, kind: output, shape index: {0}]
  %s6 = inlined_call_operand.vmem [shape: f32[8,16,128], index: 6, kind: output, shape index: {1}]
  %7 = xla_tuple %s5, %s6
  %s8 = sld [smem:[#allocation0]]
  $region38: #{glove_bilstm_forward.5} parent=0
    _
  %s10 = ssub.s32 1, %s8
  %s11 = scalar_select 0, %s10, %s8
  // Predicated region
  $region2: #{glove_bilstm_forward.5} parent=0 // pred_check
    _
  $region3: #{glove_bilstm_forward.5} parent=0 // pred_check_branch
    %13 = sbr.rel (0) target = $region5
  $region4: #{glove_bilstm_forward.5} parent=0 // pred_region
    _
  $region5: #{glove_bilstm_forward.5} parent=0 // pred_fallthru
    _
  // Predicated region
  $region6: #{glove_bilstm_forward.5} parent=0 // pred_check
    _
  $region7: #{glove_bilstm_forward.5} parent=0 // pred_check_branch
    %15 = sbr.rel (0) target = $region9
  $region8: #{glove_bilstm_forward.5} parent=0 // pred_region
    _
  $region9: #{glove_bilstm_forward.5} parent=0 // pred_fallthru
    _
  // Predicated region
  $region10: #{glove_bilstm_forward.5} parent=0 // pred_check
    _
  $region11: #{glove_bilstm_forward.5} parent=0 // pred_check_branch
    %17 = sbr.rel (0) target = $region13
  $region12: #{glove_bilstm_forward.5} parent=0 // pred_region
    _
  $region13: #{glove_bilstm_forward.5} parent=0 // pred_fallthru
    _
  // Predicated region
  $region14: #{glove_bilstm_forward.5} parent=0 // pred_check
    _
  $region15: #{glove_bilstm_forward.5} parent=0 // pred_check_branch
    %19 = sbr.rel (0) target = $region17
  $region16: #{glove_bilstm_forward.5} parent=0 // pred_region
    _
  $region17: #{glove_bilstm_forward.5} parent=0 // pred_fallthru
    _
  // Predicated region
  $region18: #{glove_bilstm_forward.5} parent=0 // pred_check
    _
  $region19: #{glove_bilstm_forward.5} parent=0 // pred_check_branch
    %21 = sbr.rel (0) target = $region21
  $region20: #{glove_bilstm_forward.5} parent=0 // pred_region
    _
  $region21: #{glove_bilstm_forward.5} parent=0 // pred_fallthru
    _
  %v23 = vld [vmem:[%s0] sm:$0xf]
  %v24 = vld [vmem:[%s0 + $0x4] sm:$0xf]
  %v25 = vld [vmem:[%s0 + $0x8] sm:$0xf]
  %v26 = vld [vmem:[%s0 + $0xc] sm:$0xf]
  %v27 = vld [vmem:[%s0 + $0x10] sm:$0xf]
  %v28 = vld [vmem:[%s0 + $0x14] sm:$0xf]
  %v29 = vld [vmem:[%s0 + $0x18] sm:$0xf]
  %v30 = vld [vmem:[%s0 + $0x1c] sm:$0xf]
  %v31 = vld [vmem:[%s0 + $0x20] sm:$0xf]
  %v32 = vld [vmem:[%s0 + $0x24] sm:$0xf]
  %v33 = vld [vmem:[%s0 + $0x28] sm:$0xf]
  %v34 = vld [vmem:[%s0 + $0x2c] sm:$0xf]
  %v35 = vld [vmem:[%s0 + $0x30] sm:$0xf]
  %v36 = vld [vmem:[%s0 + $0x34] sm:$0xf]
  %v37 = vld [vmem:[%s0 + $0x38] sm:$0xf]
  %v38 = vld [vmem:[%s0 + $0x3c] sm:$0xf]
  %v39 = vld [vmem:[%s1] sm:$0xf]
  %v40 = vld [vmem:[%s1 + $0x4] sm:$0xf]
  %v41 = vld [vmem:[%s1 + $0x8] sm:$0xf]
  %v42 = vld [vmem:[%s1 + $0xc] sm:$0xf]
  %v43 = vld [vmem:[%s2] sm:$0xf]
  %v44 = vld [vmem:[%s2 + $0x4] sm:$0xf]
  %v45 = vld [vmem:[%s2 + $0x8] sm:$0xf]
  %v46 = vld [vmem:[%s2 + $0xc] sm:$0xf]
  %v47 = vld [vmem:[%s3] sm:$0x1]
  %v49 = vlaneseq
  %v50 = vshrl.u32 %v49, 7
  %v51 = vsub.s32 0, %v50
  %v52 = vrot.slane %v47, %v51
  %v70 = vunpack.c.l.b16 %v23
  %v71 = vunpack.c.l.b16 %v24
  %v72 = vunpack.c.l.b16 %v25
  %v73 = vunpack.c.l.b16 %v26
  %v74 = vunpack.c.l.b16 %v27
  %v75 = vunpack.c.l.b16 %v28
  %v76 = vunpack.c.l.b16 %v29
  %v77 = vunpack.c.l.b16 %v30
  %v78 = vunpack.c.l.b16 %v31
  %v79 = vunpack.c.l.b16 %v32
  %v80 = vunpack.c.l.b16 %v33
  %v81 = vunpack.c.l.b16 %v34
  %v82 = vunpack.c.l.b16 %v35
  %v83 = vunpack.c.l.b16 %v36
  %v84 = vunpack.c.l.b16 %v37
  %v85 = vunpack.c.l.b16 %v38
  %v86 = vpack.c.b16 %v71, %v70
  %v87 = vpack.c.b16 %v73, %v72
  %v88 = vpack.c.b16 %v75, %v74
  %v89 = vpack.c.b16 %v77, %v76
  %v90 = vpack.c.b16 %v79, %v78
  %v91 = vpack.c.b16 %v81, %v80
  %v92 = vpack.c.b16 %v83, %v82
  %v93 = vpack.c.b16 %v85, %v84
  %v98 = vunpack.c.l.b16 %v39
  %v99 = vunpack.c.l.b16 %v40
  %v100 = vunpack.c.l.b16 %v41
  %v101 = vunpack.c.l.b16 %v42
  %v102 = vpack.c.b16 %v99, %v98
  %v103 = vpack.c.b16 %v101, %v100
  %vm106 = vcmask 261120
  %v108 = vsel %vm106, %v86, 0
  %v111 = vsel %vm106, %v87, 0
  %v114 = vsel %vm106, %v88, 0
  %v117 = vsel %vm106, %v89, 0
  %v120 = vsel %vm106, %v90, 0
  %v123 = vsel %vm106, %v91, 0
  %v126 = vsel %vm106, %v92, 0
  %v129 = vsel %vm106, %v93, 0
  %131 = vmatprep.subr.bf16.mxu0 0
  %132 = vmatpush1.bf16.msra.mxu0 %v102
  %133 = vmatprep.subr.bf16.mxu0 0
  %134 = vmatpush1.bf16.msra.mxu0 %v103
  %135 = vmatprep.subr.bf16.mxu0 0
  %136 = vmatpush1.bf16.msra.mxu0 0
  %137 = vmatprep.subr.bf16.mxu0 0
  %138 = vmatpush1.bf16.msra.mxu0 0
  %139 = vmatprep.subr.bf16.mxu0 0
  %140 = vmatpush1.bf16.msra.mxu0 0
  %141 = vmatprep.subr.bf16.mxu0 0
  %142 = vmatpush1.bf16.msra.mxu0 0
  %143 = vmatprep.subr.bf16.mxu0 0
  %144 = vmatpush1.bf16.msra.mxu0 0
  %145 = vmatprep.subr.bf16.mxu0 0
  %146 = vmatpush1.bf16.msra.mxu0 0
  %147 = vmatprep.subr.bf16.mxu0 0
  %148 = vmatpush1.bf16.msra.mxu0 0
  %149 = vmatprep.subr.bf16.mxu0 0
  %150 = vmatpush1.bf16.msra.mxu0 0
  %151 = vmatprep.subr.bf16.mxu0 0
  %152 = vmatpush1.bf16.msra.mxu0 0
  %153 = vmatprep.subr.bf16.mxu0 0
  %154 = vmatpush1.bf16.msra.mxu0 0
  %155 = vmatprep.subr.bf16.mxu0 0
  %156 = vmatpush1.bf16.msra.mxu0 0
  %157 = vmatprep.subr.bf16.mxu0 0
  %158 = vmatpush1.bf16.msra.mxu0 0
  %159 = vmatprep.subr.bf16.mxu0 0
  %160 = vmatpush1.bf16.msra.mxu0 0
  %161 = vmatprep.subr.bf16.mxu0 0
  %162 = vmatpush1.bf16.msra.mxu0 0
  %163 = vmatprep.mubr.bf16.mxu0 0
  %164 = vmatmul.mubr.bf16.gmra.mrb[0].mxu0 %v108
  %v165 = vpop.f32.mrb[0].mxu0
  %v166 = vadd.f32 %v52, %v165
  %v167 = vpop.f32.mrb[0].mxu0
  %v168 = vpop.f32.mrb[0].mxu0
  %v169 = vadd.f32 %v52, %v168
  %v170 = vpop.f32.mrb[0].mxu0
  %171 = vmatprep.mubr.bf16.mxu0 0
  %172 = vmatmul.mubr.bf16.gmra.mrb[0].mxu0 %v111
  %v173 = vpop.f32.mrb[0].mxu0
  %v174 = vadd.f32 %v52, %v173
  %v175 = vpop.f32.mrb[0].mxu0
  %v176 = vpop.f32.mrb[0].mxu0
  %v177 = vadd.f32 %v52, %v176
  %v178 = vpop.f32.mrb[0].mxu0
  %179 = vmatprep.mubr.bf16.mxu0 0
  %180 = vmatmul.mubr.bf16.gmra.mrb[0].mxu0 %v114
  %v181 = vpop.f32.mrb[0].mxu0
  %v182 = vadd.f32 %v52, %v181
  %v183 = vpop.f32.mrb[0].mxu0
  %v184 = vpop.f32.mrb[0].mxu0
  %v185 = vadd.f32 %v52, %v184
  %v186 = vpop.f32.mrb[0].mxu0
  %187 = vmatprep.mubr.bf16.mxu0 0
  %188 = vmatmul.mubr.bf16.gmra.mrb[0].mxu0 %v117
  %v189 = vpop.f32.mrb[0].mxu0
  %v190 = vadd.f32 %v52, %v189
  %v191 = vpop.f32.mrb[0].mxu0
  %v192 = vpop.f32.mrb[0].mxu0
  %v193 = vadd.f32 %v52, %v192
  %v194 = vpop.f32.mrb[0].mxu0
  %195 = vmatprep.mubr.bf16.mxu0 0
  %196 = vmatmul.mubr.bf16.gmra.mrb[0].mxu0 %v120
  %v197 = vpop.f32.mrb[0].mxu0
  %v198 = vadd.f32 %v52, %v197
  %v199 = vpop.f32.mrb[0].mxu0
  %v200 = vpop.f32.mrb[0].mxu0
  %v201 = vadd.f32 %v52, %v200
  %v202 = vpop.f32.mrb[0].mxu0
  %203 = vmatprep.mubr.bf16.mxu0 0
  %204 = vmatmul.mubr.bf16.gmra.mrb[0].mxu0 %v123
  %v205 = vpop.f32.mrb[0].mxu0
  %v206 = vadd.f32 %v52, %v205
  %v207 = vpop.f32.mrb[0].mxu0
  %v208 = vpop.f32.mrb[0].mxu0
  %v209 = vadd.f32 %v52, %v208
  %v210 = vpop.f32.mrb[0].mxu0
  %211 = vmatprep.mubr.bf16.mxu0 0
  %212 = vmatmul.mubr.bf16.gmra.mrb[0].mxu0 %v126
  %v213 = vpop.f32.mrb[0].mxu0
  %v214 = vadd.f32 %v52, %v213
  %v215 = vpop.f32.mrb[0].mxu0
  %v216 = vpop.f32.mrb[0].mxu0
  %v217 = vadd.f32 %v52, %v216
  %v218 = vpop.f32.mrb[0].mxu0
  %219 = vmatprep.mubr.bf16.mxu0 0
  %220 = vmatmul.mubr.bf16.gmra.mrb[0].mxu0 %v129
  %v221 = vpop.f32.mrb[0].mxu0
  %v222 = vadd.f32 %v52, %v221
  %v223 = vpop.f32.mrb[0].mxu0
  %v224 = vpop.f32.mrb[0].mxu0
  %v225 = vadd.f32 %v52, %v224
  %v226 = vpop.f32.mrb[0].mxu0
  %227 = vdwg.mxu0
  %228 = vst [vmem:[%s5] sm:$0xff] %v166
  %229 = vst [vmem:[%s5 + $0x8] sm:$0xff] %v169
  %230 = vst [vmem:[%s5 + $0x10] sm:$0xff] %v174
  %231 = vst [vmem:[%s5 + $0x18] sm:$0xff] %v177
  %232 = vst [vmem:[%s5 + $0x20] sm:$0xff] %v182
  %233 = vst [vmem:[%s5 + $0x28] sm:$0xff] %v185
  %234 = vst [vmem:[%s5 + $0x30] sm:$0xff] %v190
  %235 = vst [vmem:[%s5 + $0x38] sm:$0xff] %v193
  %236 = vst [vmem:[%s5 + $0x40] sm:$0xff] %v198
  %237 = vst [vmem:[%s5 + $0x48] sm:$0xff] %v201
  %238 = vst [vmem:[%s5 + $0x50] sm:$0xff] %v206
  %239 = vst [vmem:[%s5 + $0x58] sm:$0xff] %v209
  %240 = vst [vmem:[%s5 + $0x60] sm:$0xff] %v214
  %241 = vst [vmem:[%s5 + $0x68] sm:$0xff] %v217
  %242 = vst [vmem:[%s5 + $0x70] sm:$0xff] %v222
  %243 = vst [vmem:[%s5 + $0x78] sm:$0xff] %v225
  %v244 = vld [vmem:[%s4] sm:$0x1]
  %v246 = vlaneseq
  %v247 = vshrl.u32 %v246, 7
  %v248 = vsub.s32 0, %v247
  %v249 = vrot.slane %v244, %v248
  %v255 = vunpack.c.l.b16 %v43
  %v256 = vunpack.c.l.b16 %v44
  %v257 = vunpack.c.l.b16 %v45
  %v258 = vunpack.c.l.b16 %v46
  %v259 = vpack.c.b16 %v256, %v255
  %v260 = vpack.c.b16 %v258, %v257
  %263 = vmatprep.subr.bf16.mxu0 0
  %264 = vmatpush1.bf16.msra.mxu0 %v259
  %265 = vmatprep.subr.bf16.mxu0 0
  %266 = vmatpush1.bf16.msra.mxu0 %v260
  %267 = vmatprep.subr.bf16.mxu0 0
  %268 = vmatpush1.bf16.msra.mxu0 0
  %269 = vmatprep.subr.bf16.mxu0 0
  %270 = vmatpush1.bf16.msra.mxu0 0
  %271 = vmatprep.subr.bf16.mxu0 0
  %272 = vmatpush1.bf16.msra.mxu0 0
  %273 = vmatprep.subr.bf16.mxu0 0
  %274 = vmatpush1.bf16.msra.mxu0 0
  %275 = vmatprep.subr.bf16.mxu0 0
  %276 = vmatpush1.bf16.msra.mxu0 0
  %277 = vmatprep.subr.bf16.mxu0 0
  %278 = vmatpush1.bf16.msra.mxu0 0
  %279 = vmatprep.subr.bf16.mxu0 0
  %280 = vmatpush1.bf16.msra.mxu0 0
  %281 = vmatprep.subr.bf16.mxu0 0
  %282 = vmatpush1.bf16.msra.mxu0 0
  %283 = vmatprep.subr.bf16.mxu0 0
  %284 = vmatpush1.bf16.msra.mxu0 0
  %285 = vmatprep.subr.bf16.mxu0 0
  %286 = vmatpush1.bf16.msra.mxu0 0
  %287 = vmatprep.subr.bf16.mxu0 0
  %288 = vmatpush1.bf16.msra.mxu0 0
  %289 = vmatprep.subr.bf16.mxu0 0
  %290 = vmatpush1.bf16.msra.mxu0 0
  %291 = vmatprep.subr.bf16.mxu0 0
  %292 = vmatpush1.bf16.msra.mxu0 0
  %293 = vmatprep.subr.bf16.mxu0 0
  %294 = vmatpush1.bf16.msra.mxu0 0
  %295 = vmatprep.mubr.bf16.mxu0 0
  %296 = vmatmul.mubr.bf16.gmra.mrb[0].mxu0 %v108
  %v297 = vpop.f32.mrb[0].mxu0
  %v298 = vadd.f32 %v249, %v297
  %v299 = vpop.f32.mrb[0].mxu0
  %v300 = vpop.f32.mrb[0].mxu0
  %v301 = vadd.f32 %v249, %v300
  %v302 = vpop.f32.mrb[0].mxu0
  %303 = vmatprep.mubr.bf16.mxu0 0
  %304 = vmatmul.mubr.bf16.gmra.mrb[0].mxu0 %v111
  %v305 = vpop.f32.mrb[0].mxu0
  %v306 = vadd.f32 %v249, %v305
  %v307 = vpop.f32.mrb[0].mxu0
  %v308 = vpop.f32.mrb[0].mxu0
  %v309 = vadd.f32 %v249, %v308
  %v310 = vpop.f32.mrb[0].mxu0
  %311 = vmatprep.mubr.bf16.mxu0 0
  %312 = vmatmul.mubr.bf16.gmra.mrb[0].mxu0 %v114
  %v313 = vpop.f32.mrb[0].mxu0
  %v314 = vadd.f32 %v249, %v313
  %v315 = vpop.f32.mrb[0].mxu0
  %v316 = vpop.f32.mrb[0].mxu0
  %v317 = vadd.f32 %v249, %v316
  %v318 = vpop.f32.mrb[0].mxu0
  %319 = vmatprep.mubr.bf16.mxu0 0
  %320 = vmatmul.mubr.bf16.gmra.mrb[0].mxu0 %v117
  %v321 = vpop.f32.mrb[0].mxu0
  %v322 = vadd.f32 %v249, %v321
  %v323 = vpop.f32.mrb[0].mxu0
  %v324 = vpop.f32.mrb[0].mxu0
  %v325 = vadd.f32 %v249, %v324
  %v326 = vpop.f32.mrb[0].mxu0
  %327 = vmatprep.mubr.bf16.mxu0 0
  %328 = vmatmul.mubr.bf16.gmra.mrb[0].mxu0 %v120
  %v329 = vpop.f32.mrb[0].mxu0
  %v330 = vadd.f32 %v249, %v329
  %v331 = vpop.f32.mrb[0].mxu0
  %v332 = vpop.f32.mrb[0].mxu0
  %v333 = vadd.f32 %v249, %v332
  %v334 = vpop.f32.mrb[0].mxu0
  %335 = vmatprep.mubr.bf16.mxu0 0
  %336 = vmatmul.mubr.bf16.gmra.mrb[0].mxu0 %v123
  %v337 = vpop.f32.mrb[0].mxu0
  %v338 = vadd.f32 %v249, %v337
  %v339 = vpop.f32.mrb[0].mxu0
  %v340 = vpop.f32.mrb[0].mxu0
  %v341 = vadd.f32 %v249, %v340
  %v342 = vpop.f32.mrb[0].mxu0
  %343 = vmatprep.mubr.bf16.mxu0 0
  %344 = vmatmul.mubr.bf16.gmra.mrb[0].mxu0 %v126
  %v345 = vpop.f32.mrb[0].mxu0
  %v346 = vadd.f32 %v249, %v345
  %v347 = vpop.f32.mrb[0].mxu0
  %v348 = vpop.f32.mrb[0].mxu0
  %v349 = vadd.f32 %v249, %v348
  %v350 = vpop.f32.mrb[0].mxu0
  %351 = vmatprep.mubr.bf16.mxu0 0
  %352 = vmatmul.mubr.bf16.gmra.mrb[0].mxu0 %v129
  %v353 = vpop.f32.mrb[0].mxu0
  %v354 = vadd.f32 %v249, %v353
  %v355 = vpop.f32.mrb[0].mxu0
  %v356 = vpop.f32.mrb[0].mxu0
  %v357 = vadd.f32 %v249, %v356
  %v358 = vpop.f32.mrb[0].mxu0
  %359 = vdwg.mxu0
  %360 = vst [vmem:[%s6] sm:$0xff] %v298
  %361 = vst [vmem:[%s6 + $0x8] sm:$0xff] %v301
  %362 = vst [vmem:[%s6 + $0x10] sm:$0xff] %v306
  %363 = vst [vmem:[%s6 + $0x18] sm:$0xff] %v309
  %364 = vst [vmem:[%s6 + $0x20] sm:$0xff] %v314
  %365 = vst [vmem:[%s6 + $0x28] sm:$0xff] %v317
  %366 = vst [vmem:[%s6 + $0x30] sm:$0xff] %v322
  %367 = vst [vmem:[%s6 + $0x38] sm:$0xff] %v325
  %368 = vst [vmem:[%s6 + $0x40] sm:$0xff] %v330
  %369 = vst [vmem:[%s6 + $0x48] sm:$0xff] %v333
  %370 = vst [vmem:[%s6 + $0x50] sm:$0xff] %v338
  %371 = vst [vmem:[%s6 + $0x58] sm:$0xff] %v341
  %372 = vst [vmem:[%s6 + $0x60] sm:$0xff] %v346
  %373 = vst [vmem:[%s6 + $0x68] sm:$0xff] %v349
  %374 = vst [vmem:[%s6 + $0x70] sm:$0xff] %v354
  %375 = vst [vmem:[%s6 + $0x78] sm:$0xff] %v357
  // Predicated region
  $region22: #{glove_bilstm_forward.5} parent=0 // pred_check
    _
  $region23: #{glove_bilstm_forward.5} parent=0 // pred_check_branch
    %377 = sbr.rel (0) target = $region25
  $region24: #{glove_bilstm_forward.5} parent=0 // pred_region
    _
  $region25: #{glove_bilstm_forward.5} parent=0 // pred_fallthru
    _
  // Predicated region
  $region26: #{glove_bilstm_forward.5} parent=0 // pred_check
    _
  $region27: #{glove_bilstm_forward.5} parent=0 // pred_check_branch
    %379 = sbr.rel (0) target = $region29
  $region28: #{glove_bilstm_forward.5} parent=0 // pred_region
    _
  $region29: #{glove_bilstm_forward.5} parent=0 // pred_fallthru
    _
  // Predicated region
  $region30: #{glove_bilstm_forward.5} parent=0 // pred_check
    _
  $region31: #{glove_bilstm_forward.5} parent=0 // pred_check_branch
    %381 = sbr.rel (0) target = $region33
  $region32: #{glove_bilstm_forward.5} parent=0 // pred_region
    _
  $region33: #{glove_bilstm_forward.5} parent=0 // pred_fallthru
    _
  // Predicated region
  $region34: #{glove_bilstm_forward.5} parent=0 // pred_check
    _
  $region35: #{glove_bilstm_forward.5} parent=0 // pred_check_branch
    %383 = sbr.rel (0) target = $region37
  $region36: #{glove_bilstm_forward.5} parent=0 // pred_region
    _
  $region37: #{glove_bilstm_forward.5} parent=0 // pred_fallthru
    _

// kernel: glove_bilstm_forward.7
$region0: #{glove_bilstm_forward.7}
  #allocation0 [shape = 'u32[]', space=smem, size = 0x4, offset = 0x4, fixed_abs, tag = 'smem constant byte address 0x4 - core index']
  #allocation1 [shape = 'u32[144,128]{1,0:T(1,128)}', space=vmem, size = 0x12000, scoped, tag = 'internal scratch']
  %s0 = inlined_call_operand.vmem [shape: bf16[8,16,32], index: 0, kind: input, shape index: {}]
  %s1 = inlined_call_operand.vmem [shape: bf16[8,16,32], index: 1, kind: input, shape index: {}]
  %s2 = inlined_call_operand.vmem [shape: bf16[32,128], index: 2, kind: input, shape index: {}]
  %s3 = inlined_call_operand.vmem [shape: bf16[32,128], index: 3, kind: input, shape index: {}]
  %s4 = inlined_call_operand.vmem [shape: bf16[32,128], index: 4, kind: input, shape index: {}]
  %s5 = inlined_call_operand.vmem [shape: bf16[32,128], index: 5, kind: input, shape index: {}]
  %s6 = inlined_call_operand.vmem [shape: f32[1,128], index: 6, kind: input, shape index: {}]
  %s7 = inlined_call_operand.vmem [shape: f32[1,128], index: 7, kind: input, shape index: {}]
  %s8 = inlined_call_operand.vmem [shape: f32[8,16,128], index: 8, kind: output, shape index: {0}]
  %s9 = inlined_call_operand.vmem [shape: f32[8,16,128], index: 9, kind: output, shape index: {1}]
  %10 = xla_tuple %s8, %s9
  %s11 = sld [smem:[#allocation0]]
  $region50: #{glove_bilstm_forward.7} parent=0
    _
  %s13 = ssub.s32 1, %s11
  %s14 = scalar_select 0, %s13, %s11
  // Predicated region
  $region2: #{glove_bilstm_forward.7} parent=0 // pred_check
    _
  $region3: #{glove_bilstm_forward.7} parent=0 // pred_check_branch
    %16 = sbr.rel (0) target = $region5
  $region4: #{glove_bilstm_forward.7} parent=0 // pred_region
    _
  $region5: #{glove_bilstm_forward.7} parent=0 // pred_fallthru
    _
  // Predicated region
  $region6: #{glove_bilstm_forward.7} parent=0 // pred_check
    _
  $region7: #{glove_bilstm_forward.7} parent=0 // pred_check_branch
    %18 = sbr.rel (0) target = $region9
  $region8: #{glove_bilstm_forward.7} parent=0 // pred_region
    _
  $region9: #{glove_bilstm_forward.7} parent=0 // pred_fallthru
    _
  // Predicated region
  $region10: #{glove_bilstm_forward.7} parent=0 // pred_check
    _
  $region11: #{glove_bilstm_forward.7} parent=0 // pred_check_branch
    %20 = sbr.rel (0) target = $region13
  $region12: #{glove_bilstm_forward.7} parent=0 // pred_region
    _
  $region13: #{glove_bilstm_forward.7} parent=0 // pred_fallthru
    _
  // Predicated region
  $region14: #{glove_bilstm_forward.7} parent=0 // pred_check
    _
  $region15: #{glove_bilstm_forward.7} parent=0 // pred_check_branch
    %22 = sbr.rel (0) target = $region17
  $region16: #{glove_bilstm_forward.7} parent=0 // pred_region
    _
  $region17: #{glove_bilstm_forward.7} parent=0 // pred_fallthru
    _
  // Predicated region
  $region18: #{glove_bilstm_forward.7} parent=0 // pred_check
    _
  $region19: #{glove_bilstm_forward.7} parent=0 // pred_check_branch
    %24 = sbr.rel (0) target = $region21
  $region20: #{glove_bilstm_forward.7} parent=0 // pred_region
    _
  $region21: #{glove_bilstm_forward.7} parent=0 // pred_fallthru
    _
  // Predicated region
  $region22: #{glove_bilstm_forward.7} parent=0 // pred_check
    _
  $region23: #{glove_bilstm_forward.7} parent=0 // pred_check_branch
    %26 = sbr.rel (0) target = $region25
  $region24: #{glove_bilstm_forward.7} parent=0 // pred_region
    _
  $region25: #{glove_bilstm_forward.7} parent=0 // pred_fallthru
    _
  // Predicated region
  $region26: #{glove_bilstm_forward.7} parent=0 // pred_check
    _
  $region27: #{glove_bilstm_forward.7} parent=0 // pred_check_branch
    %28 = sbr.rel (0) target = $region29
  $region28: #{glove_bilstm_forward.7} parent=0 // pred_region
    _
  $region29: #{glove_bilstm_forward.7} parent=0 // pred_fallthru
    _
  // Predicated region
  $region30: #{glove_bilstm_forward.7} parent=0 // pred_check
    _
  $region31: #{glove_bilstm_forward.7} parent=0 // pred_check_branch
    %30 = sbr.rel (0) target = $region33
  $region32: #{glove_bilstm_forward.7} parent=0 // pred_region
    _
  $region33: #{glove_bilstm_forward.7} parent=0 // pred_fallthru
    _
  %v32 = vld [vmem:[%s0] sm:$0xf]
  %v33 = vld [vmem:[%s0 + $0x4] sm:$0xf]
  %v34 = vld [vmem:[%s0 + $0x8] sm:$0xf]
  %v35 = vld [vmem:[%s0 + $0xc] sm:$0xf]
  %v36 = vld [vmem:[%s0 + $0x10] sm:$0xf]
  %v37 = vld [vmem:[%s0 + $0x14] sm:$0xf]
  %v38 = vld [vmem:[%s0 + $0x18] sm:$0xf]
  %v39 = vld [vmem:[%s0 + $0x1c] sm:$0xf]
  %v40 = vld [vmem:[%s0 + $0x20] sm:$0xf]
  %v41 = vld [vmem:[%s0 + $0x24] sm:$0xf]
  %v42 = vld [vmem:[%s0 + $0x28] sm:$0xf]
  %v43 = vld [vmem:[%s0 + $0x2c] sm:$0xf]
  %v44 = vld [vmem:[%s0 + $0x30] sm:$0xf]
  %v45 = vld [vmem:[%s0 + $0x34] sm:$0xf]
  %v46 = vld [vmem:[%s0 + $0x38] sm:$0xf]
  %v47 = vld [vmem:[%s0 + $0x3c] sm:$0xf]
  %v48 = vld [vmem:[%s2] sm:$0xf]
  %v49 = vld [vmem:[%s2 + $0x4] sm:$0xf]
  %v50 = vld [vmem:[%s2 + $0x8] sm:$0xf]
  %v51 = vld [vmem:[%s2 + $0xc] sm:$0xf]
  %v52 = vld [vmem:[%s4] sm:$0xf]
  %v53 = vld [vmem:[%s4 + $0x4] sm:$0xf]
  %v54 = vld [vmem:[%s4 + $0x8] sm:$0xf]
  %v55 = vld [vmem:[%s4 + $0xc] sm:$0xf]
  %v56 = vld [vmem:[%s1] sm:$0xf]
  %v57 = vld [vmem:[%s1 + $0x4] sm:$0xf]
  %v58 = vld [vmem:[%s1 + $0x8] sm:$0xf]
  %v59 = vld [vmem:[%s1 + $0xc] sm:$0xf]
  %v60 = vld [vmem:[%s1 + $0x10] sm:$0xf]
  %v61 = vld [vmem:[%s1 + $0x14] sm:$0xf]
  %v62 = vld [vmem:[%s1 + $0x18] sm:$0xf]
  %v63 = vld [vmem:[%s1 + $0x1c] sm:$0xf]
  %v64 = vld [vmem:[%s1 + $0x20] sm:$0xf]
  %v65 = vld [vmem:[%s1 + $0x24] sm:$0xf]
  %v66 = vld [vmem:[%s1 + $0x28] sm:$0xf]
  %v67 = vld [vmem:[%s1 + $0x2c] sm:$0xf]
  %v68 = vld [vmem:[%s1 + $0x30] sm:$0xf]
  %v69 = vld [vmem:[%s1 + $0x34] sm:$0xf]
  %v70 = vld [vmem:[%s1 + $0x38] sm:$0xf]
  %v71 = vld [vmem:[%s1 + $0x3c] sm:$0xf]
  %v72 = vld [vmem:[%s3] sm:$0xf]
  %v73 = vld [vmem:[%s3 + $0x4] sm:$0xf]
  %v74 = vld [vmem:[%s3 + $0x8] sm:$0xf]
  %v75 = vld [vmem:[%s3 + $0xc] sm:$0xf]
  %v92 = vunpack.c.l.b16 %v56
  %v93 = vunpack.c.l.b16 %v57
  %v94 = vunpack.c.l.b16 %v58
  %v95 = vunpack.c.l.b16 %v59
  %v96 = vunpack.c.l.b16 %v60
  %v97 = vunpack.c.l.b16 %v61
  %v98 = vunpack.c.l.b16 %v62
  %v99 = vunpack.c.l.b16 %v63
  %v100 = vunpack.c.l.b16 %v64
  %v101 = vunpack.c.l.b16 %v65
  %v102 = vunpack.c.l.b16 %v66
  %v103 = vunpack.c.l.b16 %v67
  %v104 = vunpack.c.l.b16 %v68
  %v105 = vunpack.c.l.b16 %v69
  %v106 = vunpack.c.l.b16 %v70
  %v107 = vunpack.c.l.b16 %v71
  %v108 = vpack.c.b16 %v93, %v92
  %v109 = vpack.c.b16 %v95, %v94
  %v110 = vpack.c.b16 %v97, %v96
  %v111 = vpack.c.b16 %v99, %v98
  %v112 = vpack.c.b16 %v101, %v100
  %v113 = vpack.c.b16 %v103, %v102
  %v114 = vpack.c.b16 %v105, %v104
  %v115 = vpack.c.b16 %v107, %v106
  %v120 = vunpack.c.l.b16 %v72
  %v121 = vunpack.c.l.b16 %v73
  %v122 = vunpack.c.l.b16 %v74
  %v123 = vunpack.c.l.b16 %v75
  %v124 = vpack.c.b16 %v121, %v120
  %v125 = vpack.c.b16 %v123, %v122
  %vm128 = vcmask 261120
  %v130 = vsel %vm128, %v108, 0
  %v133 = vsel %vm128, %v109, 0
  %v136 = vsel %vm128, %v110, 0
  %v139 = vsel %vm128, %v111, 0
  %v142 = vsel %vm128, %v112, 0
  %v145 = vsel %vm128, %v113, 0
  %v148 = vsel %vm128, %v114, 0
  %v151 = vsel %vm128, %v115, 0
  %153 = vmatprep.subr.bf16.mxu0 0
  %154 = vmatpush1.bf16.msra.mxu0 %v124
  %155 = vmatprep.subr.bf16.mxu0 0
  %156 = vmatpush1.bf16.msra.mxu0 %v125
  %157 = vmatprep.subr.bf16.mxu0 0
  %158 = vmatpush1.bf16.msra.mxu0 0
  %159 = vmatprep.subr.bf16.mxu0 0
  %160 = vmatpush1.bf16.msra.mxu0 0
  %161 = vmatprep.subr.bf16.mxu0 0
  %162 = vmatpush1.bf16.msra.mxu0 0
  %163 = vmatprep.subr.bf16.mxu0 0
  %164 = vmatpush1.bf16.msra.mxu0 0
  %165 = vmatprep.subr.bf16.mxu0 0
  %166 = vmatpush1.bf16.msra.mxu0 0
  %167 = vmatprep.subr.bf16.mxu0 0
  %168 = vmatpush1.bf16.msra.mxu0 0
  %169 = vmatprep.subr.bf16.mxu0 0
  %170 = vmatpush1.bf16.msra.mxu0 0
  %171 = vmatprep.subr.bf16.mxu0 0
  %172 = vmatpush1.bf16.msra.mxu0 0
  %173 = vmatprep.subr.bf16.mxu0 0
  %174 = vmatpush1.bf16.msra.mxu0 0
  %175 = vmatprep.subr.bf16.mxu0 0
  %176 = vmatpush1.bf16.msra.mxu0 0
  %177 = vmatprep.subr.bf16.mxu0 0
  %178 = vmatpush1.bf16.msra.mxu0 0
  %179 = vmatprep.subr.bf16.mxu0 0
  %180 = vmatpush1.bf16.msra.mxu0 0
  %181 = vmatprep.subr.bf16.mxu0 0
  %182 = vmatpush1.bf16.msra.mxu0 0
  %183 = vmatprep.subr.bf16.mxu0 0
  %184 = vmatpush1.bf16.msra.mxu0 0
  %185 = vmatprep.mubr.bf16.mxu0 0
  %186 = vmatmul.mubr.bf16.gmra.mrb[0].mxu0 %v130
  %v187 = vpop.f32.mrb[0].mxu0
  %v188 = vadd.f32 0.0, %v187
  %v189 = vpop.f32.mrb[0].mxu0
  %v190 = vpop.f32.mrb[0].mxu0
  %v191 = vadd.f32 0.0, %v190
  %v192 = vpop.f32.mrb[0].mxu0
  %193 = vmatprep.mubr.bf16.mxu0 0
  %194 = vmatmul.mubr.bf16.gmra.mrb[0].mxu0 %v133
  %v195 = vpop.f32.mrb[0].mxu0
  %v196 = vadd.f32 0.0, %v195
  %v197 = vpop.f32.mrb[0].mxu0
  %v198 = vpop.f32.mrb[0].mxu0
  %v199 = vadd.f32 0.0, %v198
  %v200 = vpop.f32.mrb[0].mxu0
  %201 = vmatprep.mubr.bf16.mxu0 0
  %202 = vmatmul.mubr.bf16.gmra.mrb[0].mxu0 %v136
  %v203 = vpop.f32.mrb[0].mxu0
  %v204 = vadd.f32 0.0, %v203
  %v205 = vpop.f32.mrb[0].mxu0
  %v206 = vpop.f32.mrb[0].mxu0
  %v207 = vadd.f32 0.0, %v206
  %v208 = vpop.f32.mrb[0].mxu0
  %209 = vmatprep.mubr.bf16.mxu0 0
  %210 = vmatmul.mubr.bf16.gmra.mrb[0].mxu0 %v139
  %v211 = vpop.f32.mrb[0].mxu0
  %v212 = vadd.f32 0.0, %v211
  %v213 = vpop.f32.mrb[0].mxu0
  %v214 = vpop.f32.mrb[0].mxu0
  %v215 = vadd.f32 0.0, %v214
  %v216 = vpop.f32.mrb[0].mxu0
  %217 = vmatprep.mubr.bf16.mxu0 0
  %218 = vmatmul.mubr.bf16.gmra.mrb[0].mxu0 %v142
  %v219 = vpop.f32.mrb[0].mxu0
  %v220 = vadd.f32 0.0, %v219
  %v221 = vpop.f32.mrb[0].mxu0
  %v222 = vpop.f32.mrb[0].mxu0
  %v223 = vadd.f32 0.0, %v222
  %v224 = vpop.f32.mrb[0].mxu0
  %225 = vmatprep.mubr.bf16.mxu0 0
  %226 = vmatmul.mubr.bf16.gmra.mrb[0].mxu0 %v145
  %v227 = vpop.f32.mrb[0].mxu0
  %v228 = vadd.f32 0.0, %v227
  %v229 = vpop.f32.mrb[0].mxu0
  %v230 = vpop.f32.mrb[0].mxu0
  %v231 = vadd.f32 0.0, %v230
  %v232 = vpop.f32.mrb[0].mxu0
  %233 = vmatprep.mubr.bf16.mxu0 0
  %234 = vmatmul.mubr.bf16.gmra.mrb[0].mxu0 %v148
  %v235 = vpop.f32.mrb[0].mxu0
  %v236 = vadd.f32 0.0, %v235
  %v237 = vpop.f32.mrb[0].mxu0
  %v238 = vpop.f32.mrb[0].mxu0
  %v239 = vadd.f32 0.0, %v238
  %v240 = vpop.f32.mrb[0].mxu0
  %241 = vmatprep.mubr.bf16.mxu0 0
  %242 = vmatmul.mubr.bf16.gmra.mrb[0].mxu0 %v151
  %v243 = vpop.f32.mrb[0].mxu0
  %v244 = vadd.f32 0.0, %v243
  %v245 = vpop.f32.mrb[0].mxu0
  %v246 = vpop.f32.mrb[0].mxu0
  %v247 = vadd.f32 0.0, %v246
  %v248 = vpop.f32.mrb[0].mxu0
  %249 = vdwg.mxu0
  %v250 = vld [vmem:[%s5] sm:$0xf]
  %v251 = vld [vmem:[%s5 + $0x4] sm:$0xf]
  %v252 = vld [vmem:[%s5 + $0x8] sm:$0xf]
  %v253 = vld [vmem:[%s5 + $0xc] sm:$0xf]
  %v258 = vunpack.c.l.b16 %v250
  %v259 = vunpack.c.l.b16 %v251
  %v260 = vunpack.c.l.b16 %v252
  %v261 = vunpack.c.l.b16 %v253
  %v262 = vpack.c.b16 %v259, %v258
  %v263 = vpack.c.b16 %v261, %v260
  %266 = vmatprep.subr.bf16.mxu0 0
  %267 = vmatpush1.bf16.msra.mxu0 %v262
  %268 = vmatprep.subr.bf16.mxu0 0
  %269 = vmatpush1.bf16.msra.mxu0 %v263
  %270 = vmatprep.subr.bf16.mxu0 0
  %271 = vmatpush1.bf16.msra.mxu0 0
  %272 = vmatprep.subr.bf16.mxu0 0
  %273 = vmatpush1.bf16.msra.mxu0 0
  %274 = vmatprep.subr.bf16.mxu0 0
  %275 = vmatpush1.bf16.msra.mxu0 0
  %276 = vmatprep.subr.bf16.mxu0 0
  %277 = vmatpush1.bf16.msra.mxu0 0
  %278 = vmatprep.subr.bf16.mxu0 0
  %279 = vmatpush1.bf16.msra.mxu0 0
  %280 = vmatprep.subr.bf16.mxu0 0
  %281 = vmatpush1.bf16.msra.mxu0 0
  %282 = vmatprep.subr.bf16.mxu0 0
  %283 = vmatpush1.bf16.msra.mxu0 0
  %284 = vmatprep.subr.bf16.mxu0 0
  %285 = vmatpush1.bf16.msra.mxu0 0
  %286 = vmatprep.subr.bf16.mxu0 0
  %287 = vmatpush1.bf16.msra.mxu0 0
  %288 = vmatprep.subr.bf16.mxu0 0
  %289 = vmatpush1.bf16.msra.mxu0 0
  %290 = vmatprep.subr.bf16.mxu0 0
  %291 = vmatpush1.bf16.msra.mxu0 0
  %292 = vmatprep.subr.bf16.mxu0 0
  %293 = vmatpush1.bf16.msra.mxu0 0
  %294 = vmatprep.subr.bf16.mxu0 0
  %295 = vmatpush1.bf16.msra.mxu0 0
  %296 = vmatprep.subr.bf16.mxu0 0
  %297 = vmatpush1.bf16.msra.mxu0 0
  %298 = vmatprep.mubr.bf16.mxu0 0
  %299 = vmatmul.mubr.bf16.gmra.mrb[0].mxu0 %v130
  %v300 = vpop.f32.mrb[0].mxu0
  %v301 = vadd.f32 0.0, %v300
  %v302 = vpop.f32.mrb[0].mxu0
  %v303 = vpop.f32.mrb[0].mxu0
  %v304 = vadd.f32 0.0, %v303
  %v305 = vpop.f32.mrb[0].mxu0
  %306 = vmatprep.mubr.bf16.mxu0 0
  %307 = vmatmul.mubr.bf16.gmra.mrb[0].mxu0 %v133
  %v308 = vpop.f32.mrb[0].mxu0
  %v309 = vadd.f32 0.0, %v308
  %v310 = vpop.f32.mrb[0].mxu0
  %v311 = vpop.f32.mrb[0].mxu0
  %v312 = vadd.f32 0.0, %v311
  %v313 = vpop.f32.mrb[0].mxu0
  %314 = vmatprep.mubr.bf16.mxu0 0
  %315 = vmatmul.mubr.bf16.gmra.mrb[0].mxu0 %v136
  %v316 = vpop.f32.mrb[0].mxu0
  %v317 = vadd.f32 0.0, %v316
  %v318 = vpop.f32.mrb[0].mxu0
  %v319 = vpop.f32.mrb[0].mxu0
  %v320 = vadd.f32 0.0, %v319
  %v321 = vpop.f32.mrb[0].mxu0
  %322 = vmatprep.mubr.bf16.mxu0 0
  %323 = vmatmul.mubr.bf16.gmra.mrb[0].mxu0 %v139
  %v324 = vpop.f32.mrb[0].mxu0
  %v325 = vadd.f32 0.0, %v324
  %v326 = vpop.f32.mrb[0].mxu0
  %v327 = vpop.f32.mrb[0].mxu0
  %v328 = vadd.f32 0.0, %v327
  %v329 = vpop.f32.mrb[0].mxu0
  %330 = vmatprep.mubr.bf16.mxu0 0
  %331 = vmatmul.mubr.bf16.gmra.mrb[0].mxu0 %v142
  %v332 = vpop.f32.mrb[0].mxu0
  %v333 = vadd.f32 0.0, %v332
  %v334 = vpop.f32.mrb[0].mxu0
  %v335 = vpop.f32.mrb[0].mxu0
  %v336 = vadd.f32 0.0, %v335
  %v337 = vpop.f32.mrb[0].mxu0
  %338 = vmatprep.mubr.bf16.mxu0 0
  %339 = vmatmul.mubr.bf16.gmra.mrb[0].mxu0 %v145
  %v340 = vpop.f32.mrb[0].mxu0
  %v341 = vadd.f32 0.0, %v340
  %v342 = vpop.f32.mrb[0].mxu0
  %v343 = vpop.f32.mrb[0].mxu0
  %v344 = vadd.f32 0.0, %v343
  %v345 = vpop.f32.mrb[0].mxu0
  %346 = vmatprep.mubr.bf16.mxu0 0
  %347 = vmatmul.mubr.bf16.gmra.mrb[0].mxu0 %v148
  %v348 = vpop.f32.mrb[0].mxu0
  %v349 = vadd.f32 0.0, %v348
  %v350 = vpop.f32.mrb[0].mxu0
  %v351 = vpop.f32.mrb[0].mxu0
  %v352 = vadd.f32 0.0, %v351
  %v353 = vpop.f32.mrb[0].mxu0
  %354 = vmatprep.mubr.bf16.mxu0 0
  %355 = vmatmul.mubr.bf16.gmra.mrb[0].mxu0 %v151
  %v356 = vpop.f32.mrb[0].mxu0
  %v357 = vadd.f32 0.0, %v356
  %v358 = vpop.f32.mrb[0].mxu0
  %v359 = vpop.f32.mrb[0].mxu0
  %v360 = vadd.f32 0.0, %v359
  %v361 = vpop.f32.mrb[0].mxu0
  %362 = vdwg.mxu0
  %v379 = vunpack.c.l.b16 %v32
  %v380 = vunpack.c.l.b16 %v33
  %v381 = vunpack.c.l.b16 %v34
  %v382 = vunpack.c.l.b16 %v35
  %v383 = vunpack.c.l.b16 %v36
  %v384 = vunpack.c.l.b16 %v37
  %v385 = vunpack.c.l.b16 %v38
  %v386 = vunpack.c.l.b16 %v39
  %v387 = vunpack.c.l.b16 %v40
  %v388 = vunpack.c.l.b16 %v41
  %v389 = vunpack.c.l.b16 %v42
  %v390 = vunpack.c.l.b16 %v43
  %v391 = vunpack.c.l.b16 %v44
  %v392 = vunpack.c.l.b16 %v45
  %v393 = vunpack.c.l.b16 %v46
  %v394 = vunpack.c.l.b16 %v47
  %v395 = vpack.c.b16 %v380, %v379
  %v396 = vpack.c.b16 %v382, %v381
  %v397 = vpack.c.b16 %v384, %v383
  %v398 = vpack.c.b16 %v386, %v385
  %v399 = vpack.c.b16 %v388, %v387
  %v400 = vpack.c.b16 %v390, %v389
  %v401 = vpack.c.b16 %v392, %v391
  %v402 = vpack.c.b16 %v394, %v393
  %v407 = vunpack.c.l.b16 %v48
  %v408 = vunpack.c.l.b16 %v49
  %v409 = vunpack.c.l.b16 %v50
  %v410 = vunpack.c.l.b16 %v51
  %v411 = vpack.c.b16 %v408, %v407
  %v412 = vpack.c.b16 %v410, %v409
  %v416 = vsel %vm128, %v395, 0
  %v419 = vsel %vm128, %v396, 0
  %v422 = vsel %vm128, %v397, 0
  %v425 = vsel %vm128, %v398, 0
  %v428 = vsel %vm128, %v399, 0
  %v431 = vsel %vm128, %v400, 0
  %v434 = vsel %vm128, %v401, 0
  %v437 = vsel %vm128, %v402, 0
  %439 = vmatprep.subr.bf16.mxu0 0
  %440 = vmatpush1.bf16.msra.mxu0 %v411
  %441 = vmatprep.subr.bf16.mxu0 0
  %442 = vmatpush1.bf16.msra.mxu0 %v412
  %443 = vmatprep.subr.bf16.mxu0 0
  %444 = vmatpush1.bf16.msra.mxu0 0
  %445 = vmatprep.subr.bf16.mxu0 0
  %446 = vmatpush1.bf16.msra.mxu0 0
  %447 = vmatprep.subr.bf16.mxu0 0
  %448 = vmatpush1.bf16.msra.mxu0 0
  %449 = vmatprep.subr.bf16.mxu0 0
  %450 = vmatpush1.bf16.msra.mxu0 0
  %451 = vmatprep.subr.bf16.mxu0 0
  %452 = vmatpush1.bf16.msra.mxu0 0
  %453 = vmatprep.subr.bf16.mxu0 0
  %454 = vmatpush1.bf16.msra.mxu0 0
  %455 = vmatprep.subr.bf16.mxu0 0
  %456 = vmatpush1.bf16.msra.mxu0 0
  %457 = vmatprep.subr.bf16.mxu0 0
  %458 = vmatpush1.bf16.msra.mxu0 0
  %459 = vmatprep.subr.bf16.mxu0 0
  %460 = vmatpush1.bf16.msra.mxu0 0
  %461 = vmatprep.subr.bf16.mxu0 0
  %462 = vmatpush1.bf16.msra.mxu0 0
  %463 = vmatprep.subr.bf16.mxu0 0
  %464 = vmatpush1.bf16.msra.mxu0 0
  %465 = vmatprep.subr.bf16.mxu0 0
  %466 = vmatpush1.bf16.msra.mxu0 0
  %467 = vmatprep.subr.bf16.mxu0 0
  %468 = vmatpush1.bf16.msra.mxu0 0
  %469 = vmatprep.subr.bf16.mxu0 0
  %470 = vmatpush1.bf16.msra.mxu0 0
  %471 = vmatprep.mubr.bf16.mxu0 0
  %472 = vmatmul.mubr.bf16.gmra.mrb[0].mxu0 %v416
  %v473 = vpop.f32.mrb[0].mxu0
  %v474 = vadd.f32 %v188, %v473
  %v475 = vpop.f32.mrb[0].mxu0
  %v476 = vpop.f32.mrb[0].mxu0
  %v477 = vadd.f32 %v191, %v476
  %v478 = vpop.f32.mrb[0].mxu0
  %479 = vmatprep.mubr.bf16.mxu0 0
  %480 = vmatmul.mubr.bf16.gmra.mrb[0].mxu0 %v419
  %v481 = vpop.f32.mrb[0].mxu0
  %v482 = vadd.f32 %v196, %v481
  %v483 = vpop.f32.mrb[0].mxu0
  %v484 = vpop.f32.mrb[0].mxu0
  %v485 = vadd.f32 %v199, %v484
  %v486 = vpop.f32.mrb[0].mxu0
  %487 = vmatprep.mubr.bf16.mxu0 0
  %488 = vmatmul.mubr.bf16.gmra.mrb[0].mxu0 %v422
  %v489 = vpop.f32.mrb[0].mxu0
  %v490 = vadd.f32 %v204, %v489
  %v491 = vpop.f32.mrb[0].mxu0
  %v492 = vpop.f32.mrb[0].mxu0
  %v493 = vadd.f32 %v207, %v492
  %v494 = vpop.f32.mrb[0].mxu0
  %495 = vmatprep.mubr.bf16.mxu0 0
  %496 = vmatmul.mubr.bf16.gmra.mrb[0].mxu0 %v425
  %v497 = vpop.f32.mrb[0].mxu0
  %v498 = vadd.f32 %v212, %v497
  %v499 = vpop.f32.mrb[0].mxu0
  %v500 = vpop.f32.mrb[0].mxu0
  %v501 = vadd.f32 %v215, %v500
  %v502 = vpop.f32.mrb[0].mxu0
  %503 = vmatprep.mubr.bf16.mxu0 0
  %504 = vmatmul.mubr.bf16.gmra.mrb[0].mxu0 %v428
  %v505 = vpop.f32.mrb[0].mxu0
  %v506 = vadd.f32 %v220, %v505
  %v507 = vpop.f32.mrb[0].mxu0
  %v508 = vpop.f32.mrb[0].mxu0
  %v509 = vadd.f32 %v223, %v508
  %v510 = vpop.f32.mrb[0].mxu0
  %511 = vmatprep.mubr.bf16.mxu0 0
  %512 = vmatmul.mubr.bf16.gmra.mrb[0].mxu0 %v431
  %v513 = vpop.f32.mrb[0].mxu0
  %v514 = vadd.f32 %v228, %v513
  %v515 = vpop.f32.mrb[0].mxu0
  %v516 = vpop.f32.mrb[0].mxu0
  %v517 = vadd.f32 %v231, %v516
  %v518 = vpop.f32.mrb[0].mxu0
  %519 = vmatprep.mubr.bf16.mxu0 0
  %520 = vmatmul.mubr.bf16.gmra.mrb[0].mxu0 %v434
  %v521 = vpop.f32.mrb[0].mxu0
  %v522 = vadd.f32 %v236, %v521
  %v523 = vpop.f32.mrb[0].mxu0
  %v524 = vpop.f32.mrb[0].mxu0
  %v525 = vadd.f32 %v239, %v524
  %v526 = vpop.f32.mrb[0].mxu0
  %527 = vmatprep.mubr.bf16.mxu0 0
  %528 = vmatmul.mubr.bf16.gmra.mrb[0].mxu0 %v437
  %v529 = vpop.f32.mrb[0].mxu0
  %v530 = vadd.f32 %v244, %v529
  %v531 = vpop.f32.mrb[0].mxu0
  %v532 = vpop.f32.mrb[0].mxu0
  %v533 = vadd.f32 %v247, %v532
  %v534 = vpop.f32.mrb[0].mxu0
  %535 = vdwg.mxu0
  %v540 = vunpack.c.l.b16 %v52
  %v541 = vunpack.c.l.b16 %v53
  %v542 = vunpack.c.l.b16 %v54
  %v543 = vunpack.c.l.b16 %v55
  %v544 = vpack.c.b16 %v541, %v540
  %v545 = vpack.c.b16 %v543, %v542
  %548 = vmatprep.subr.bf16.mxu0 0
  %549 = vmatpush1.bf16.msra.mxu0 %v544
  %550 = vmatprep.subr.bf16.mxu0 0
  %551 = vmatpush1.bf16.msra.mxu0 %v545
  %552 = vmatprep.subr.bf16.mxu0 0
  %553 = vmatpush1.bf16.msra.mxu0 0
  %554 = vmatprep.subr.bf16.mxu0 0
  %555 = vmatpush1.bf16.msra.mxu0 0
  %556 = vmatprep.subr.bf16.mxu0 0
  %557 = vmatpush1.bf16.msra.mxu0 0
  %558 = vmatprep.subr.bf16.mxu0 0
  %559 = vmatpush1.bf16.msra.mxu0 0
  %560 = vmatprep.subr.bf16.mxu0 0
  %561 = vmatpush1.bf16.msra.mxu0 0
  %562 = vmatprep.subr.bf16.mxu0 0
  %563 = vmatpush1.bf16.msra.mxu0 0
  %564 = vmatprep.subr.bf16.mxu0 0
  %565 = vmatpush1.bf16.msra.mxu0 0
  %566 = vmatprep.subr.bf16.mxu0 0
  %567 = vmatpush1.bf16.msra.mxu0 0
  %568 = vmatprep.subr.bf16.mxu0 0
  %569 = vmatpush1.bf16.msra.mxu0 0
  %570 = vmatprep.subr.bf16.mxu0 0
  %571 = vmatpush1.bf16.msra.mxu0 0
  %572 = vmatprep.subr.bf16.mxu0 0
  %573 = vmatpush1.bf16.msra.mxu0 0
  %574 = vmatprep.subr.bf16.mxu0 0
  %575 = vmatpush1.bf16.msra.mxu0 0
  %576 = vmatprep.subr.bf16.mxu0 0
  %577 = vmatpush1.bf16.msra.mxu0 0
  %578 = vmatprep.subr.bf16.mxu0 0
  %579 = vmatpush1.bf16.msra.mxu0 0
  %580 = vmatprep.mubr.bf16.mxu0 0
  %581 = vmatmul.mubr.bf16.gmra.mrb[0].mxu0 %v416
  %v582 = vpop.f32.mrb[0].mxu0
  %v583 = vadd.f32 %v301, %v582
  %v584 = vpop.f32.mrb[0].mxu0
  %v585 = vpop.f32.mrb[0].mxu0
  %v586 = vadd.f32 %v304, %v585
  %v587 = vpop.f32.mrb[0].mxu0
  %588 = vmatprep.mubr.bf16.mxu0 0
  %589 = vmatmul.mubr.bf16.gmra.mrb[0].mxu0 %v419
  %v590 = vpop.f32.mrb[0].mxu0
  %v591 = vadd.f32 %v309, %v590
  %v592 = vpop.f32.mrb[0].mxu0
  %v593 = vpop.f32.mrb[0].mxu0
  %v594 = vadd.f32 %v312, %v593
  %v595 = vpop.f32.mrb[0].mxu0
  %596 = vmatprep.mubr.bf16.mxu0 0
  %597 = vmatmul.mubr.bf16.gmra.mrb[0].mxu0 %v422
  %v598 = vpop.f32.mrb[0].mxu0
  %v599 = vadd.f32 %v317, %v598
  %v600 = vpop.f32.mrb[0].mxu0
  %v601 = vpop.f32.mrb[0].mxu0
  %v602 = vadd.f32 %v320, %v601
  %v603 = vpop.f32.mrb[0].mxu0
  %604 = vmatprep.mubr.bf16.mxu0 0
  %605 = vmatmul.mubr.bf16.gmra.mrb[0].mxu0 %v425
  %v606 = vpop.f32.mrb[0].mxu0
  %v607 = vadd.f32 %v325, %v606
  %v608 = vpop.f32.mrb[0].mxu0
  %v609 = vpop.f32.mrb[0].mxu0
  %v610 = vadd.f32 %v328, %v609
  %v611 = vpop.f32.mrb[0].mxu0
  %612 = vmatprep.mubr.bf16.mxu0 0
  %613 = vmatmul.mubr.bf16.gmra.mrb[0].mxu0 %v428
  %v614 = vpop.f32.mrb[0].mxu0
  %v615 = vadd.f32 %v333, %v614
  %v616 = vpop.f32.mrb[0].mxu0
  %v617 = vpop.f32.mrb[0].mxu0
  %v618 = vadd.f32 %v336, %v617
  %v619 = vpop.f32.mrb[0].mxu0
  %620 = vmatprep.mubr.bf16.mxu0 0
  %621 = vmatmul.mubr.bf16.gmra.mrb[0].mxu0 %v431
  %v622 = vpop.f32.mrb[0].mxu0
  %v623 = vadd.f32 %v341, %v622
  %v624 = vpop.f32.mrb[0].mxu0
  %v625 = vpop.f32.mrb[0].mxu0
  %v626 = vadd.f32 %v344, %v625
  %v627 = vpop.f32.mrb[0].mxu0
  %628 = vmatprep.mubr.bf16.mxu0 0
  %629 = vmatmul.mubr.bf16.gmra.mrb[0].mxu0 %v434
  %v630 = vpop.f32.mrb[0].mxu0
  %v631 = vadd.f32 %v349, %v630
  %v632 = vpop.f32.mrb[0].mxu0
  %v633 = vpop.f32.mrb[0].mxu0
  %v634 = vadd.f32 %v352, %v633
  %v635 = vpop.f32.mrb[0].mxu0
  %636 = vmatprep.mubr.bf16.mxu0 0
  %637 = vmatmul.mubr.bf16.gmra.mrb[0].mxu0 %v437
  %v638 = vpop.f32.mrb[0].mxu0
  %v639 = vadd.f32 %v357, %v638
  %v640 = vpop.f32.mrb[0].mxu0
  %v641 = vpop.f32.mrb[0].mxu0
  %v642 = vadd.f32 %v360, %v641
  %v643 = vpop.f32.mrb[0].mxu0
  %644 = vdwg.mxu0
  %v645 = vld [vmem:[%s6] sm:$0x1]
  %v647 = vlaneseq
  %v648 = vshrl.u32 %v647, 7
  %v649 = vsub.s32 0, %v648
  %v650 = vrot.slane %v645, %v649
  %v652 = vadd.f32 %v474, %v650
  %v653 = vadd.f32 %v477, %v650
  %v654 = vadd.f32 %v482, %v650
  %v655 = vadd.f32 %v485, %v650
  %v656 = vadd.f32 %v490, %v650
  %v657 = vadd.f32 %v493, %v650
  %v658 = vadd.f32 %v498, %v650
  %v659 = vadd.f32 %v501, %v650
  %v660 = vadd.f32 %v506, %v650
  %v661 = vadd.f32 %v509, %v650
  %v662 = vadd.f32 %v514, %v650
  %v663 = vadd.f32 %v517, %v650
  %v664 = vadd.f32 %v522, %v650
  %v665 = vadd.f32 %v525, %v650
  %v666 = vadd.f32 %v530, %v650
  %v667 = vadd.f32 %v533, %v650
  %668 = vst [vmem:[%s8] sm:$0xff] %v652
  %669 = vst [vmem:[%s8 + $0x8] sm:$0xff] %v653
  %670 = vst [vmem:[%s8 + $0x10] sm:$0xff] %v654
  %671 = vst [vmem:[%s8 + $0x18] sm:$0xff] %v655
  %672 = vst [vmem:[%s8 + $0x20] sm:$0xff] %v656
  %673 = vst [vmem:[%s8 + $0x28] sm:$0xff] %v657
  %674 = vst [vmem:[%s8 + $0x30] sm:$0xff] %v658
  %675 = vst [vmem:[%s8 + $0x38] sm:$0xff] %v659
  %676 = vst [vmem:[%s8 + $0x40] sm:$0xff] %v660
  %677 = vst [vmem:[%s8 + $0x48] sm:$0xff] %v661
  %678 = vst [vmem:[%s8 + $0x50] sm:$0xff] %v662
  %679 = vst [vmem:[%s8 + $0x58] sm:$0xff] %v663
  %680 = vst [vmem:[%s8 + $0x60] sm:$0xff] %v664
  %681 = vst [vmem:[%s8 + $0x68] sm:$0xff] %v665
  %682 = vst [vmem:[%s8 + $0x70] sm:$0xff] %v666
  %683 = vst [vmem:[%s8 + $0x78] sm:$0xff] %v667
  %v684 = vld [vmem:[%s7] sm:$0x1]
  %v686 = vlaneseq
  %v687 = vshrl.u32 %v686, 7
  %v688 = vsub.s32 0, %v687
  %v689 = vrot.slane %v684, %v688
  %v691 = vadd.f32 %v583, %v689
  %v692 = vadd.f32 %v586, %v689
  %v693 = vadd.f32 %v591, %v689
  %v694 = vadd.f32 %v594, %v689
  %v695 = vadd.f32 %v599, %v689
  %v696 = vadd.f32 %v602, %v689
  %v697 = vadd.f32 %v607, %v689
  %v698 = vadd.f32 %v610, %v689
  %v699 = vadd.f32 %v615, %v689
  %v700 = vadd.f32 %v618, %v689
  %v701 = vadd.f32 %v623, %v689
  %v702 = vadd.f32 %v626, %v689
  %v703 = vadd.f32 %v631, %v689
  %v704 = vadd.f32 %v634, %v689
  %v705 = vadd.f32 %v639, %v689
  %v706 = vadd.f32 %v642, %v689
  %707 = vst [vmem:[%s9] sm:$0xff] %v691
  %708 = vst [vmem:[%s9 + $0x8] sm:$0xff] %v692
  %709 = vst [vmem:[%s9 + $0x10] sm:$0xff] %v693
  %710 = vst [vmem:[%s9 + $0x18] sm:$0xff] %v694
  %711 = vst [vmem:[%s9 + $0x20] sm:$0xff] %v695
  %712 = vst [vmem:[%s9 + $0x28] sm:$0xff] %v696
  %713 = vst [vmem:[%s9 + $0x30] sm:$0xff] %v697
  %714 = vst [vmem:[%s9 + $0x38] sm:$0xff] %v698
  %715 = vst [vmem:[%s9 + $0x40] sm:$0xff] %v699
  %716 = vst [vmem:[%s9 + $0x48] sm:$0xff] %v700
  %717 = vst [vmem:[%s9 + $0x50] sm:$0xff] %v701
  %718 = vst [vmem:[%s9 + $0x58] sm:$0xff] %v702
  %719 = vst [vmem:[%s9 + $0x60] sm:$0xff] %v703
  %720 = vst [vmem:[%s9 + $0x68] sm:$0xff] %v704
  %721 = vst [vmem:[%s9 + $0x70] sm:$0xff] %v705
  %722 = vst [vmem:[%s9 + $0x78] sm:$0xff] %v706
  // Predicated region
  $region34: #{glove_bilstm_forward.7} parent=0 // pred_check
    _
  $region35: #{glove_bilstm_forward.7} parent=0 // pred_check_branch
    %724 = sbr.rel (0) target = $region37
  $region36: #{glove_bilstm_forward.7} parent=0 // pred_region
    _
  $region37: #{glove_bilstm_forward.7} parent=0 // pred_fallthru
    _
  // Predicated region
  $region38: #{glove_bilstm_forward.7} parent=0 // pred_check
    _
  $region39: #{glove_bilstm_forward.7} parent=0 // pred_check_branch
    %726 = sbr.rel (0) target = $region41
  $region40: #{glove_bilstm_forward.7} parent=0 // pred_region
    _
  $region41: #{glove_bilstm_forward.7} parent=0 // pred_fallthru
    _
  // Predicated region
  $region42: #{glove_bilstm_forward.7} parent=0 // pred_check
    _
  $region43: #{glove_bilstm_forward.7} parent=0 // pred_check_branch
    %728 = sbr.rel (0) target = $region45
  $region44: #{glove_bilstm_forward.7} parent=0 // pred_region
    _
  $region45: #{glove_bilstm_forward.7} parent=0 // pred_fallthru
    _
  // Predicated region
  $region46: #{glove_bilstm_forward.7} parent=0 // pred_check
    _
  $region47: #{glove_bilstm_forward.7} parent=0 // pred_check_branch
    %730 = sbr.rel (0) target = $region49
  $region48: #{glove_bilstm_forward.7} parent=0 // pred_region
    _
  $region49: #{glove_bilstm_forward.7} parent=0 // pred_fallthru
    _

// kernel: glove_bilstm_forward.9
$region0: #{glove_bilstm_forward.9}
  #allocation0 [shape = 'u32[]', space=smem, size = 0x4, offset = 0x4, fixed_abs, tag = 'smem constant byte address 0x4 - core index']
  #allocation1 [shape = 'u32[144,128]{1,0:T(1,128)}', space=vmem, size = 0x12000, scoped, tag = 'internal scratch']
  %s0 = inlined_call_operand.vmem [shape: bf16[128,32], index: 0, kind: input, shape index: {}]
  %s1 = inlined_call_operand.vmem [shape: bf16[128,32], index: 1, kind: input, shape index: {}]
  %s2 = inlined_call_operand.vmem [shape: bf16[32,32], index: 2, kind: input, shape index: {}]
  %s3 = inlined_call_operand.vmem [shape: bf16[32,32], index: 3, kind: input, shape index: {}]
  %s4 = inlined_call_operand.vmem [shape: f32[1,32], index: 4, kind: input, shape index: {}]
  %s5 = inlined_call_operand.vmem [shape: bf16[32,128], index: 5, kind: input, shape index: {}]
  %s6 = inlined_call_operand.vmem [shape: f32[1,128], index: 6, kind: input, shape index: {}]
  %s7 = inlined_call_operand.vmem [shape: f32[128,128], index: 7, kind: output, shape index: {}]
  %s8 = sld [smem:[#allocation0]]
  $region38: #{glove_bilstm_forward.9} parent=0
    _
  %s10 = ssub.s32 1, %s8
  %s11 = scalar_select 0, %s10, %s8
  // Predicated region
  $region2: #{glove_bilstm_forward.9} parent=0 // pred_check
    _
  $region3: #{glove_bilstm_forward.9} parent=0 // pred_check_branch
    %13 = sbr.rel (0) target = $region5
  $region4: #{glove_bilstm_forward.9} parent=0 // pred_region
    _
  $region5: #{glove_bilstm_forward.9} parent=0 // pred_fallthru
    _
  // Predicated region
  $region6: #{glove_bilstm_forward.9} parent=0 // pred_check
    _
  $region7: #{glove_bilstm_forward.9} parent=0 // pred_check_branch
    %15 = sbr.rel (0) target = $region9
  $region8: #{glove_bilstm_forward.9} parent=0 // pred_region
    _
  $region9: #{glove_bilstm_forward.9} parent=0 // pred_fallthru
    _
  // Predicated region
  $region10: #{glove_bilstm_forward.9} parent=0 // pred_check
    _
  $region11: #{glove_bilstm_forward.9} parent=0 // pred_check_branch
    %17 = sbr.rel (0) target = $region13
  $region12: #{glove_bilstm_forward.9} parent=0 // pred_region
    _
  $region13: #{glove_bilstm_forward.9} parent=0 // pred_fallthru
    _
  // Predicated region
  $region14: #{glove_bilstm_forward.9} parent=0 // pred_check
    _
  $region15: #{glove_bilstm_forward.9} parent=0 // pred_check_branch
    %19 = sbr.rel (0) target = $region17
  $region16: #{glove_bilstm_forward.9} parent=0 // pred_region
    _
  $region17: #{glove_bilstm_forward.9} parent=0 // pred_fallthru
    _
  // Predicated region
  $region18: #{glove_bilstm_forward.9} parent=0 // pred_check
    _
  $region19: #{glove_bilstm_forward.9} parent=0 // pred_check_branch
    %21 = sbr.rel (0) target = $region21
  $region20: #{glove_bilstm_forward.9} parent=0 // pred_region
    _
  $region21: #{glove_bilstm_forward.9} parent=0 // pred_fallthru
    _
  // Predicated region
  $region22: #{glove_bilstm_forward.9} parent=0 // pred_check
    _
  $region23: #{glove_bilstm_forward.9} parent=0 // pred_check_branch
    %23 = sbr.rel (0) target = $region25
  $region24: #{glove_bilstm_forward.9} parent=0 // pred_region
    _
  $region25: #{glove_bilstm_forward.9} parent=0 // pred_fallthru
    _
  // Predicated region
  $region26: #{glove_bilstm_forward.9} parent=0 // pred_check
    _
  $region27: #{glove_bilstm_forward.9} parent=0 // pred_check_branch
    %25 = sbr.rel (0) target = $region29
  $region28: #{glove_bilstm_forward.9} parent=0 // pred_region
    _
  $region29: #{glove_bilstm_forward.9} parent=0 // pred_fallthru
    _
  %v27 = vld [vmem:[%s0] sm:$0xf]
  %v28 = vld [vmem:[%s0 + $0x4] sm:$0xf]
  %v29 = vld [vmem:[%s0 + $0x8] sm:$0xf]
  %v30 = vld [vmem:[%s0 + $0xc] sm:$0xf]
  %v31 = vld [vmem:[%s0 + $0x10] sm:$0xf]
  %v32 = vld [vmem:[%s0 + $0x14] sm:$0xf]
  %v33 = vld [vmem:[%s0 + $0x18] sm:$0xf]
  %v34 = vld [vmem:[%s0 + $0x1c] sm:$0xf]
  %v35 = vld [vmem:[%s0 + $0x20] sm:$0xf]
  %v36 = vld [vmem:[%s0 + $0x24] sm:$0xf]
  %v37 = vld [vmem:[%s0 + $0x28] sm:$0xf]
  %v38 = vld [vmem:[%s0 + $0x2c] sm:$0xf]
  %v39 = vld [vmem:[%s0 + $0x30] sm:$0xf]
  %v40 = vld [vmem:[%s0 + $0x34] sm:$0xf]
  %v41 = vld [vmem:[%s0 + $0x38] sm:$0xf]
  %v42 = vld [vmem:[%s0 + $0x3c] sm:$0xf]
  %v43 = vld [vmem:[%s2] sm:$0xf]
  %v44 = vld [vmem:[%s2 + $0x4] sm:$0xf]
  %v45 = vld [vmem:[%s2 + $0x8] sm:$0xf]
  %v46 = vld [vmem:[%s2 + $0xc] sm:$0xf]
  %v47 = vld [vmem:[%s1] sm:$0xf]
  %v48 = vld [vmem:[%s1 + $0x4] sm:$0xf]
  %v49 = vld [vmem:[%s1 + $0x8] sm:$0xf]
  %v50 = vld [vmem:[%s1 + $0xc] sm:$0xf]
  %v51 = vld [vmem:[%s1 + $0x10] sm:$0xf]
  %v52 = vld [vmem:[%s1 + $0x14] sm:$0xf]
  %v53 = vld [vmem:[%s1 + $0x18] sm:$0xf]
  %v54 = vld [vmem:[%s1 + $0x1c] sm:$0xf]
  %v55 = vld [vmem:[%s1 + $0x20] sm:$0xf]
  %v56 = vld [vmem:[%s1 + $0x24] sm:$0xf]
  %v57 = vld [vmem:[%s1 + $0x28] sm:$0xf]
  %v58 = vld [vmem:[%s1 + $0x2c] sm:$0xf]
  %v59 = vld [vmem:[%s1 + $0x30] sm:$0xf]
  %v60 = vld [vmem:[%s1 + $0x34] sm:$0xf]
  %v61 = vld [vmem:[%s1 + $0x38] sm:$0xf]
  %v62 = vld [vmem:[%s1 + $0x3c] sm:$0xf]
  %v63 = vld [vmem:[%s3] sm:$0xf]
  %v64 = vld [vmem:[%s3 + $0x4] sm:$0xf]
  %v65 = vld [vmem:[%s3 + $0x8] sm:$0xf]
  %v66 = vld [vmem:[%s3 + $0xc] sm:$0xf]
  %v83 = vunpack.c.l.b16 %v47
  %v84 = vunpack.c.l.b16 %v48
  %v85 = vunpack.c.l.b16 %v49
  %v86 = vunpack.c.l.b16 %v50
  %v87 = vunpack.c.l.b16 %v51
  %v88 = vunpack.c.l.b16 %v52
  %v89 = vunpack.c.l.b16 %v53
  %v90 = vunpack.c.l.b16 %v54
  %v91 = vunpack.c.l.b16 %v55
  %v92 = vunpack.c.l.b16 %v56
  %v93 = vunpack.c.l.b16 %v57
  %v94 = vunpack.c.l.b16 %v58
  %v95 = vunpack.c.l.b16 %v59
  %v96 = vunpack.c.l.b16 %v60
  %v97 = vunpack.c.l.b16 %v61
  %v98 = vunpack.c.l.b16 %v62
  %v99 = vpack.c.b16 %v84, %v83
  %v100 = vpack.c.b16 %v86, %v85
  %v101 = vpack.c.b16 %v88, %v87
  %v102 = vpack.c.b16 %v90, %v89
  %v103 = vpack.c.b16 %v92, %v91
  %v104 = vpack.c.b16 %v94, %v93
  %v105 = vpack.c.b16 %v96, %v95
  %v106 = vpack.c.b16 %v98, %v97
  %v111 = vunpack.c.l.b16 %v63
  %v112 = vunpack.c.l.b16 %v64
  %v113 = vunpack.c.l.b16 %v65
  %v114 = vunpack.c.l.b16 %v66
  %v115 = vpack.c.b16 %v112, %v111
  %v116 = vpack.c.b16 %v114, %v113
  %vm119 = vcmask 261120
  %v121 = vsel %vm119, %v99, 0
  %v124 = vsel %vm119, %v100, 0
  %v127 = vsel %vm119, %v101, 0
  %v130 = vsel %vm119, %v102, 0
  %v133 = vsel %vm119, %v103, 0
  %v136 = vsel %vm119, %v104, 0
  %v139 = vsel %vm119, %v105, 0
  %v142 = vsel %vm119, %v106, 0
  %144 = vmatprep.subr.bf16.mxu0 0
  %145 = vmatpush1.bf16.msra.mxu0 %v115
  %146 = vmatprep.subr.bf16.mxu0 0
  %147 = vmatpush1.bf16.msra.mxu0 %v116
  %148 = vmatprep.subr.bf16.mxu0 0
  %149 = vmatpush1.bf16.msra.mxu0 0
  %150 = vmatprep.subr.bf16.mxu0 0
  %151 = vmatpush1.bf16.msra.mxu0 0
  %152 = vmatprep.subr.bf16.mxu0 0
  %153 = vmatpush1.bf16.msra.mxu0 0
  %154 = vmatprep.subr.bf16.mxu0 0
  %155 = vmatpush1.bf16.msra.mxu0 0
  %156 = vmatprep.subr.bf16.mxu0 0
  %157 = vmatpush1.bf16.msra.mxu0 0
  %158 = vmatprep.subr.bf16.mxu0 0
  %159 = vmatpush1.bf16.msra.mxu0 0
  %160 = vmatprep.subr.bf16.mxu0 0
  %161 = vmatpush1.bf16.msra.mxu0 0
  %162 = vmatprep.subr.bf16.mxu0 0
  %163 = vmatpush1.bf16.msra.mxu0 0
  %164 = vmatprep.subr.bf16.mxu0 0
  %165 = vmatpush1.bf16.msra.mxu0 0
  %166 = vmatprep.subr.bf16.mxu0 0
  %167 = vmatpush1.bf16.msra.mxu0 0
  %168 = vmatprep.subr.bf16.mxu0 0
  %169 = vmatpush1.bf16.msra.mxu0 0
  %170 = vmatprep.subr.bf16.mxu0 0
  %171 = vmatpush1.bf16.msra.mxu0 0
  %172 = vmatprep.subr.bf16.mxu0 0
  %173 = vmatpush1.bf16.msra.mxu0 0
  %174 = vmatprep.subr.bf16.mxu0 0
  %175 = vmatpush1.bf16.msra.mxu0 0
  %176 = vmatprep.mubr.bf16.mxu0 0
  %177 = vmatmul.mubr.bf16.gmra.mrb[0].mxu0 %v121
  %v178 = vpop.f32.mrb[0].mxu0
  %v179 = vadd.f32 0.0, %v178
  %v180 = vpop.f32.mrb[0].mxu0
  %v181 = vpop.f32.mrb[0].mxu0
  %v182 = vadd.f32 0.0, %v181
  %v183 = vpop.f32.mrb[0].mxu0
  %184 = vmatprep.mubr.bf16.mxu0 0
  %185 = vmatmul.mubr.bf16.gmra.mrb[0].mxu0 %v124
  %v186 = vpop.f32.mrb[0].mxu0
  %v187 = vadd.f32 0.0, %v186
  %v188 = vpop.f32.mrb[0].mxu0
  %v189 = vpop.f32.mrb[0].mxu0
  %v190 = vadd.f32 0.0, %v189
  %v191 = vpop.f32.mrb[0].mxu0
  %192 = vmatprep.mubr.bf16.mxu0 0
  %193 = vmatmul.mubr.bf16.gmra.mrb[0].mxu0 %v127
  %v194 = vpop.f32.mrb[0].mxu0
  %v195 = vadd.f32 0.0, %v194
  %v196 = vpop.f32.mrb[0].mxu0
  %v197 = vpop.f32.mrb[0].mxu0
  %v198 = vadd.f32 0.0, %v197
  %v199 = vpop.f32.mrb[0].mxu0
  %200 = vmatprep.mubr.bf16.mxu0 0
  %201 = vmatmul.mubr.bf16.gmra.mrb[0].mxu0 %v130
  %v202 = vpop.f32.mrb[0].mxu0
  %v203 = vadd.f32 0.0, %v202
  %v204 = vpop.f32.mrb[0].mxu0
  %v205 = vpop.f32.mrb[0].mxu0
  %v206 = vadd.f32 0.0, %v205
  %v207 = vpop.f32.mrb[0].mxu0
  %208 = vmatprep.mubr.bf16.mxu0 0
  %209 = vmatmul.mubr.bf16.gmra.mrb[0].mxu0 %v133
  %v210 = vpop.f32.mrb[0].mxu0
  %v211 = vadd.f32 0.0, %v210
  %v212 = vpop.f32.mrb[0].mxu0
  %v213 = vpop.f32.mrb[0].mxu0
  %v214 = vadd.f32 0.0, %v213
  %v215 = vpop.f32.mrb[0].mxu0
  %216 = vmatprep.mubr.bf16.mxu0 0
  %217 = vmatmul.mubr.bf16.gmra.mrb[0].mxu0 %v136
  %v218 = vpop.f32.mrb[0].mxu0
  %v219 = vadd.f32 0.0, %v218
  %v220 = vpop.f32.mrb[0].mxu0
  %v221 = vpop.f32.mrb[0].mxu0
  %v222 = vadd.f32 0.0, %v221
  %v223 = vpop.f32.mrb[0].mxu0
  %224 = vmatprep.mubr.bf16.mxu0 0
  %225 = vmatmul.mubr.bf16.gmra.mrb[0].mxu0 %v139
  %v226 = vpop.f32.mrb[0].mxu0
  %v227 = vadd.f32 0.0, %v226
  %v228 = vpop.f32.mrb[0].mxu0
  %v229 = vpop.f32.mrb[0].mxu0
  %v230 = vadd.f32 0.0, %v229
  %v231 = vpop.f32.mrb[0].mxu0
  %232 = vmatprep.mubr.bf16.mxu0 0
  %233 = vmatmul.mubr.bf16.gmra.mrb[0].mxu0 %v142
  %v234 = vpop.f32.mrb[0].mxu0
  %v235 = vadd.f32 0.0, %v234
  %v236 = vpop.f32.mrb[0].mxu0
  %v237 = vpop.f32.mrb[0].mxu0
  %v238 = vadd.f32 0.0, %v237
  %v239 = vpop.f32.mrb[0].mxu0
  %240 = vdwg.mxu0
  %v257 = vunpack.c.l.b16 %v27
  %v258 = vunpack.c.l.b16 %v28
  %v259 = vunpack.c.l.b16 %v29
  %v260 = vunpack.c.l.b16 %v30
  %v261 = vunpack.c.l.b16 %v31
  %v262 = vunpack.c.l.b16 %v32
  %v263 = vunpack.c.l.b16 %v33
  %v264 = vunpack.c.l.b16 %v34
  %v265 = vunpack.c.l.b16 %v35
  %v266 = vunpack.c.l.b16 %v36
  %v267 = vunpack.c.l.b16 %v37
  %v268 = vunpack.c.l.b16 %v38
  %v269 = vunpack.c.l.b16 %v39
  %v270 = vunpack.c.l.b16 %v40
  %v271 = vunpack.c.l.b16 %v41
  %v272 = vunpack.c.l.b16 %v42
  %v273 = vpack.c.b16 %v258, %v257
  %v274 = vpack.c.b16 %v260, %v259
  %v275 = vpack.c.b16 %v262, %v261
  %v276 = vpack.c.b16 %v264, %v263
  %v277 = vpack.c.b16 %v266, %v265
  %v278 = vpack.c.b16 %v268, %v267
  %v279 = vpack.c.b16 %v270, %v269
  %v280 = vpack.c.b16 %v272, %v271
  %v285 = vunpack.c.l.b16 %v43
  %v286 = vunpack.c.l.b16 %v44
  %v287 = vunpack.c.l.b16 %v45
  %v288 = vunpack.c.l.b16 %v46
  %v289 = vpack.c.b16 %v286, %v285
  %v290 = vpack.c.b16 %v288, %v287
  %v294 = vsel %vm119, %v273, 0
  %v297 = vsel %vm119, %v274, 0
  %v300 = vsel %vm119, %v275, 0
  %v303 = vsel %vm119, %v276, 0
  %v306 = vsel %vm119, %v277, 0
  %v309 = vsel %vm119, %v278, 0
  %v312 = vsel %vm119, %v279, 0
  %v315 = vsel %vm119, %v280, 0
  %317 = vmatprep.subr.bf16.mxu0 0
  %318 = vmatpush1.bf16.msra.mxu0 %v289
  %319 = vmatprep.subr.bf16.mxu0 0
  %320 = vmatpush1.bf16.msra.mxu0 %v290
  %321 = vmatprep.subr.bf16.mxu0 0
  %322 = vmatpush1.bf16.msra.mxu0 0
  %323 = vmatprep.subr.bf16.mxu0 0
  %324 = vmatpush1.bf16.msra.mxu0 0
  %325 = vmatprep.subr.bf16.mxu0 0
  %326 = vmatpush1.bf16.msra.mxu0 0
  %327 = vmatprep.subr.bf16.mxu0 0
  %328 = vmatpush1.bf16.msra.mxu0 0
  %329 = vmatprep.subr.bf16.mxu0 0
  %330 = vmatpush1.bf16.msra.mxu0 0
  %331 = vmatprep.subr.bf16.mxu0 0
  %332 = vmatpush1.bf16.msra.mxu0 0
  %333 = vmatprep.subr.bf16.mxu0 0
  %334 = vmatpush1.bf16.msra.mxu0 0
  %335 = vmatprep.subr.bf16.mxu0 0
  %336 = vmatpush1.bf16.msra.mxu0 0
  %337 = vmatprep.subr.bf16.mxu0 0
  %338 = vmatpush1.bf16.msra.mxu0 0
  %339 = vmatprep.subr.bf16.mxu0 0
  %340 = vmatpush1.bf16.msra.mxu0 0
  %341 = vmatprep.subr.bf16.mxu0 0
  %342 = vmatpush1.bf16.msra.mxu0 0
  %343 = vmatprep.subr.bf16.mxu0 0
  %344 = vmatpush1.bf16.msra.mxu0 0
  %345 = vmatprep.subr.bf16.mxu0 0
  %346 = vmatpush1.bf16.msra.mxu0 0
  %347 = vmatprep.subr.bf16.mxu0 0
  %348 = vmatpush1.bf16.msra.mxu0 0
  %349 = vmatprep.mubr.bf16.mxu0 0
  %350 = vmatmul.mubr.bf16.gmra.mrb[0].mxu0 %v294
  %v351 = vpop.f32.mrb[0].mxu0
  %v352 = vadd.f32 %v179, %v351
  %v353 = vpop.f32.mrb[0].mxu0
  %v354 = vpop.f32.mrb[0].mxu0
  %v355 = vadd.f32 %v182, %v354
  %v356 = vpop.f32.mrb[0].mxu0
  %357 = vmatprep.mubr.bf16.mxu0 0
  %358 = vmatmul.mubr.bf16.gmra.mrb[0].mxu0 %v297
  %v359 = vpop.f32.mrb[0].mxu0
  %v360 = vadd.f32 %v187, %v359
  %v361 = vpop.f32.mrb[0].mxu0
  %v362 = vpop.f32.mrb[0].mxu0
  %v363 = vadd.f32 %v190, %v362
  %v364 = vpop.f32.mrb[0].mxu0
  %365 = vmatprep.mubr.bf16.mxu0 0
  %366 = vmatmul.mubr.bf16.gmra.mrb[0].mxu0 %v300
  %v367 = vpop.f32.mrb[0].mxu0
  %v368 = vadd.f32 %v195, %v367
  %v369 = vpop.f32.mrb[0].mxu0
  %v370 = vpop.f32.mrb[0].mxu0
  %v371 = vadd.f32 %v198, %v370
  %v372 = vpop.f32.mrb[0].mxu0
  %373 = vmatprep.mubr.bf16.mxu0 0
  %374 = vmatmul.mubr.bf16.gmra.mrb[0].mxu0 %v303
  %v375 = vpop.f32.mrb[0].mxu0
  %v376 = vadd.f32 %v203, %v375
  %v377 = vpop.f32.mrb[0].mxu0
  %v378 = vpop.f32.mrb[0].mxu0
  %v379 = vadd.f32 %v206, %v378
  %v380 = vpop.f32.mrb[0].mxu0
  %381 = vmatprep.mubr.bf16.mxu0 0
  %382 = vmatmul.mubr.bf16.gmra.mrb[0].mxu0 %v306
  %v383 = vpop.f32.mrb[0].mxu0
  %v384 = vadd.f32 %v211, %v383
  %v385 = vpop.f32.mrb[0].mxu0
  %v386 = vpop.f32.mrb[0].mxu0
  %v387 = vadd.f32 %v214, %v386
  %v388 = vpop.f32.mrb[0].mxu0
  %389 = vmatprep.mubr.bf16.mxu0 0
  %390 = vmatmul.mubr.bf16.gmra.mrb[0].mxu0 %v309
  %v391 = vpop.f32.mrb[0].mxu0
  %v392 = vadd.f32 %v219, %v391
  %v393 = vpop.f32.mrb[0].mxu0
  %v394 = vpop.f32.mrb[0].mxu0
  %v395 = vadd.f32 %v222, %v394
  %v396 = vpop.f32.mrb[0].mxu0
  %397 = vmatprep.mubr.bf16.mxu0 0
  %398 = vmatmul.mubr.bf16.gmra.mrb[0].mxu0 %v312
  %v399 = vpop.f32.mrb[0].mxu0
  %v400 = vadd.f32 %v227, %v399
  %v401 = vpop.f32.mrb[0].mxu0
  %v402 = vpop.f32.mrb[0].mxu0
  %v403 = vadd.f32 %v230, %v402
  %v404 = vpop.f32.mrb[0].mxu0
  %405 = vmatprep.mubr.bf16.mxu0 0
  %406 = vmatmul.mubr.bf16.gmra.mrb[0].mxu0 %v315
  %v407 = vpop.f32.mrb[0].mxu0
  %v408 = vadd.f32 %v235, %v407
  %v409 = vpop.f32.mrb[0].mxu0
  %v410 = vpop.f32.mrb[0].mxu0
  %v411 = vadd.f32 %v238, %v410
  %v412 = vpop.f32.mrb[0].mxu0
  %413 = vdwg.mxu0
  %v414 = vld [vmem:[%s4] sm:$0x1]
  %v416 = vlaneseq
  %v417 = vshrl.u32 %v416, 7
  %v418 = vsub.s32 0, %v417
  %v419 = vrot.slane %v414, %v418
  %v421 = vadd.f32 %v352, %v419
  %v422 = vadd.f32 %v355, %v419
  %v423 = vadd.f32 %v360, %v419
  %v424 = vadd.f32 %v363, %v419
  %v425 = vadd.f32 %v368, %v419
  %v426 = vadd.f32 %v371, %v419
  %v427 = vadd.f32 %v376, %v419
  %v428 = vadd.f32 %v379, %v419
  %v429 = vadd.f32 %v384, %v419
  %v430 = vadd.f32 %v387, %v419
  %v431 = vadd.f32 %v392, %v419
  %v432 = vadd.f32 %v395, %v419
  %v433 = vadd.f32 %v400, %v419
  %v434 = vadd.f32 %v403, %v419
  %v435 = vadd.f32 %v408, %v419
  %v436 = vadd.f32 %v411, %v419
  %vm437 = vcmp.gt.f32.partialorder %v421, 0.0
  %vm438 = vcmp.gt.f32.partialorder %v422, 0.0
  %vm439 = vcmp.gt.f32.partialorder %v423, 0.0
  %vm440 = vcmp.gt.f32.partialorder %v424, 0.0
  %vm441 = vcmp.gt.f32.partialorder %v425, 0.0
  %vm442 = vcmp.gt.f32.partialorder %v426, 0.0
  %vm443 = vcmp.gt.f32.partialorder %v427, 0.0
  %vm444 = vcmp.gt.f32.partialorder %v428, 0.0
  %vm445 = vcmp.gt.f32.partialorder %v429, 0.0
  %vm446 = vcmp.gt.f32.partialorder %v430, 0.0
  %vm447 = vcmp.gt.f32.partialorder %v431, 0.0
  %vm448 = vcmp.gt.f32.partialorder %v432, 0.0
  %vm449 = vcmp.gt.f32.partialorder %v433, 0.0
  %vm450 = vcmp.gt.f32.partialorder %v434, 0.0
  %vm451 = vcmp.gt.f32.partialorder %v435, 0.0
  %vm452 = vcmp.gt.f32.partialorder %v436, 0.0
  %v453 = vmin.f32 %v421, 0.0
  %v454 = vmin.f32 %v422, 0.0
  %v455 = vmin.f32 %v423, 0.0
  %v456 = vmin.f32 %v424, 0.0
  %v457 = vmin.f32 %v425, 0.0
  %v458 = vmin.f32 %v426, 0.0
  %v459 = vmin.f32 %v427, 0.0
  %v460 = vmin.f32 %v428, 0.0
  %v461 = vmin.f32 %v429, 0.0
  %v462 = vmin.f32 %v430, 0.0
  %v463 = vmin.f32 %v431, 0.0
  %v464 = vmin.f32 %v432, 0.0
  %v465 = vmin.f32 %v433, 0.0
  %v466 = vmin.f32 %v434, 0.0
  %v467 = vmin.f32 %v435, 0.0
  %v468 = vmin.f32 %v436, 0.0
  %v469 = vmul.f32 %v453, 1.442695
  %v470 = vpow.pop %v469
  %v471 = vmul.f32 %v454, 1.442695
  %v472 = vpow.pop %v471
  %v473 = vmul.f32 %v455, 1.442695
  %v474 = vpow.pop %v473
  %v475 = vmul.f32 %v456, 1.442695
  %v476 = vpow.pop %v475
  %v477 = vmul.f32 %v457, 1.442695
  %v478 = vpow.pop %v477
  %v479 = vmul.f32 %v458, 1.442695
  %v480 = vpow.pop %v479
  %v481 = vmul.f32 %v459, 1.442695
  %v482 = vpow.pop %v481
  %v483 = vmul.f32 %v460, 1.442695
  %v484 = vpow.pop %v483
  %v485 = vmul.f32 %v461, 1.442695
  %v486 = vpow.pop %v485
  %v487 = vmul.f32 %v462, 1.442695
  %v488 = vpow.pop %v487
  %v489 = vmul.f32 %v463, 1.442695
  %v490 = vpow.pop %v489
  %v491 = vmul.f32 %v464, 1.442695
  %v492 = vpow.pop %v491
  %v493 = vmul.f32 %v465, 1.442695
  %v494 = vpow.pop %v493
  %v495 = vmul.f32 %v466, 1.442695
  %v496 = vpow.pop %v495
  %v497 = vmul.f32 %v467, 1.442695
  %v498 = vpow.pop %v497
  %v499 = vmul.f32 %v468, 1.442695
  %v500 = vpow.pop %v499
  %v501 = vsub.f32 %v470, 1.0
  %v502 = vsub.f32 %v472, 1.0
  %v503 = vsub.f32 %v474, 1.0
  %v504 = vsub.f32 %v476, 1.0
  %v505 = vsub.f32 %v478, 1.0
  %v506 = vsub.f32 %v480, 1.0
  %v507 = vsub.f32 %v482, 1.0
  %v508 = vsub.f32 %v484, 1.0
  %v509 = vsub.f32 %v486, 1.0
  %v510 = vsub.f32 %v488, 1.0
  %v511 = vsub.f32 %v490, 1.0
  %v512 = vsub.f32 %v492, 1.0
  %v513 = vsub.f32 %v494, 1.0
  %v514 = vsub.f32 %v496, 1.0
  %v515 = vsub.f32 %v498, 1.0
  %v516 = vsub.f32 %v500, 1.0
  %v517 = vsel %vm437, %v421, %v501
  %v518 = vsel %vm438, %v422, %v502
  %v519 = vsel %vm439, %v423, %v503
  %v520 = vsel %vm440, %v424, %v504
  %v521 = vsel %vm441, %v425, %v505
  %v522 = vsel %vm442, %v426, %v506
  %v523 = vsel %vm443, %v427, %v507
  %v524 = vsel %vm444, %v428, %v508
  %v525 = vsel %vm445, %v429, %v509
  %v526 = vsel %vm446, %v430, %v510
  %v527 = vsel %vm447, %v431, %v511
  %v528 = vsel %vm448, %v432, %v512
  %v529 = vsel %vm449, %v433, %v513
  %v530 = vsel %vm450, %v434, %v514
  %v531 = vsel %vm451, %v435, %v515
  %v532 = vsel %vm452, %v436, %v516
  %v533 = vpack.c.bf16 %v518, %v517
  %v534 = vpack.c.bf16 %v520, %v519
  %v535 = vpack.c.bf16 %v522, %v521
  %v536 = vpack.c.bf16 %v524, %v523
  %v537 = vpack.c.bf16 %v526, %v525
  %v538 = vpack.c.bf16 %v528, %v527
  %v539 = vpack.c.bf16 %v530, %v529
  %v540 = vpack.c.bf16 %v532, %v531
  %v541 = vld [vmem:[%s5] sm:$0xf]
  %v542 = vld [vmem:[%s5 + $0x4] sm:$0xf]
  %v543 = vld [vmem:[%s5 + $0x8] sm:$0xf]
  %v544 = vld [vmem:[%s5 + $0xc] sm:$0xf]
  %v545 = vld [vmem:[%s6] sm:$0x1]
  %v547 = vlaneseq
  %v548 = vshrl.u32 %v547, 7
  %v549 = vsub.s32 0, %v548
  %v550 = vrot.slane %v545, %v549
  %v556 = vunpack.c.l.b16 %v541
  %v557 = vunpack.c.l.b16 %v542
  %v558 = vunpack.c.l.b16 %v543
  %v559 = vunpack.c.l.b16 %v544
  %v560 = vpack.c.b16 %v557, %v556
  %v561 = vpack.c.b16 %v559, %v558
  %v565 = vsel %vm119, %v533, 0
  %v568 = vsel %vm119, %v534, 0
  %v571 = vsel %vm119, %v535, 0
  %v574 = vsel %vm119, %v536, 0
  %v577 = vsel %vm119, %v537, 0
  %v580 = vsel %vm119, %v538, 0
  %v583 = vsel %vm119, %v539, 0
  %v586 = vsel %vm119, %v540, 0
  %588 = vmatprep.subr.bf16.mxu0 0
  %589 = vmatpush1.bf16.msra.mxu0 %v560
  %590 = vmatprep.subr.bf16.mxu0 0
  %591 = vmatpush1.bf16.msra.mxu0 %v561
  %592 = vmatprep.subr.bf16.mxu0 0
  %593 = vmatpush1.bf16.msra.mxu0 0
  %594 = vmatprep.subr.bf16.mxu0 0
  %595 = vmatpush1.bf16.msra.mxu0 0
  %596 = vmatprep.subr.bf16.mxu0 0
  %597 = vmatpush1.bf16.msra.mxu0 0
  %598 = vmatprep.subr.bf16.mxu0 0
  %599 = vmatpush1.bf16.msra.mxu0 0
  %600 = vmatprep.subr.bf16.mxu0 0
  %601 = vmatpush1.bf16.msra.mxu0 0
  %602 = vmatprep.subr.bf16.mxu0 0
  %603 = vmatpush1.bf16.msra.mxu0 0
  %604 = vmatprep.subr.bf16.mxu0 0
  %605 = vmatpush1.bf16.msra.mxu0 0
  %606 = vmatprep.subr.bf16.mxu0 0
  %607 = vmatpush1.bf16.msra.mxu0 0
  %608 = vmatprep.subr.bf16.mxu0 0
  %609 = vmatpush1.bf16.msra.mxu0 0
  %610 = vmatprep.subr.bf16.mxu0 0
  %611 = vmatpush1.bf16.msra.mxu0 0
  %612 = vmatprep.subr.bf16.mxu0 0
  %613 = vmatpush1.bf16.msra.mxu0 0
  %614 = vmatprep.subr.bf16.mxu0 0
  %615 = vmatpush1.bf16.msra.mxu0 0
  %616 = vmatprep.subr.bf16.mxu0 0
  %617 = vmatpush1.bf16.msra.mxu0 0
  %618 = vmatprep.subr.bf16.mxu0 0
  %619 = vmatpush1.bf16.msra.mxu0 0
  %620 = vmatprep.mubr.bf16.mxu0 0
  %621 = vmatmul.mubr.bf16.gmra.mrb[0].mxu0 %v565
  %v622 = vpop.f32.mrb[0].mxu0
  %v623 = vadd.f32 %v550, %v622
  %v624 = vpop.f32.mrb[0].mxu0
  %v625 = vpop.f32.mrb[0].mxu0
  %v626 = vadd.f32 %v550, %v625
  %v627 = vpop.f32.mrb[0].mxu0
  %628 = vmatprep.mubr.bf16.mxu0 0
  %629 = vmatmul.mubr.bf16.gmra.mrb[0].mxu0 %v568
  %v630 = vpop.f32.mrb[0].mxu0
  %v631 = vadd.f32 %v550, %v630
  %v632 = vpop.f32.mrb[0].mxu0
  %v633 = vpop.f32.mrb[0].mxu0
  %v634 = vadd.f32 %v550, %v633
  %v635 = vpop.f32.mrb[0].mxu0
  %636 = vmatprep.mubr.bf16.mxu0 0
  %637 = vmatmul.mubr.bf16.gmra.mrb[0].mxu0 %v571
  %v638 = vpop.f32.mrb[0].mxu0
  %v639 = vadd.f32 %v550, %v638
  %v640 = vpop.f32.mrb[0].mxu0
  %v641 = vpop.f32.mrb[0].mxu0
  %v642 = vadd.f32 %v550, %v641
  %v643 = vpop.f32.mrb[0].mxu0
  %644 = vmatprep.mubr.bf16.mxu0 0
  %645 = vmatmul.mubr.bf16.gmra.mrb[0].mxu0 %v574
  %v646 = vpop.f32.mrb[0].mxu0
  %v647 = vadd.f32 %v550, %v646
  %v648 = vpop.f32.mrb[0].mxu0
  %v649 = vpop.f32.mrb[0].mxu0
  %v650 = vadd.f32 %v550, %v649
  %v651 = vpop.f32.mrb[0].mxu0
  %652 = vmatprep.mubr.bf16.mxu0 0
  %653 = vmatmul.mubr.bf16.gmra.mrb[0].mxu0 %v577
  %v654 = vpop.f32.mrb[0].mxu0
  %v655 = vadd.f32 %v550, %v654
  %v656 = vpop.f32.mrb[0].mxu0
  %v657 = vpop.f32.mrb[0].mxu0
  %v658 = vadd.f32 %v550, %v657
  %v659 = vpop.f32.mrb[0].mxu0
  %660 = vmatprep.mubr.bf16.mxu0 0
  %661 = vmatmul.mubr.bf16.gmra.mrb[0].mxu0 %v580
  %v662 = vpop.f32.mrb[0].mxu0
  %v663 = vadd.f32 %v550, %v662
  %v664 = vpop.f32.mrb[0].mxu0
  %v665 = vpop.f32.mrb[0].mxu0
  %v666 = vadd.f32 %v550, %v665
  %v667 = vpop.f32.mrb[0].mxu0
  %668 = vmatprep.mubr.bf16.mxu0 0
  %669 = vmatmul.mubr.bf16.gmra.mrb[0].mxu0 %v583
  %v670 = vpop.f32.mrb[0].mxu0
  %v671 = vadd.f32 %v550, %v670
  %v672 = vpop.f32.mrb[0].mxu0
  %v673 = vpop.f32.mrb[0].mxu0
  %v674 = vadd.f32 %v550, %v673
  %v675 = vpop.f32.mrb[0].mxu0
  %676 = vmatprep.mubr.bf16.mxu0 0
  %677 = vmatmul.mubr.bf16.gmra.mrb[0].mxu0 %v586
  %v678 = vpop.f32.mrb[0].mxu0
  %v679 = vadd.f32 %v550, %v678
  %v680 = vpop.f32.mrb[0].mxu0
  %v681 = vpop.f32.mrb[0].mxu0
  %v682 = vadd.f32 %v550, %v681
  %v683 = vpop.f32.mrb[0].mxu0
  %684 = vdwg.mxu0
  %685 = vst [vmem:[%s7] sm:$0xff] %v623
  %686 = vst [vmem:[%s7 + $0x8] sm:$0xff] %v626
  %687 = vst [vmem:[%s7 + $0x10] sm:$0xff] %v631
  %688 = vst [vmem:[%s7 + $0x18] sm:$0xff] %v634
  %689 = vst [vmem:[%s7 + $0x20] sm:$0xff] %v639
  %690 = vst [vmem:[%s7 + $0x28] sm:$0xff] %v642
  %691 = vst [vmem:[%s7 + $0x30] sm:$0xff] %v647
  %692 = vst [vmem:[%s7 + $0x38] sm:$0xff] %v650
  %693 = vst [vmem:[%s7 + $0x40] sm:$0xff] %v655
  %694 = vst [vmem:[%s7 + $0x48] sm:$0xff] %v658
  %695 = vst [vmem:[%s7 + $0x50] sm:$0xff] %v663
  %696 = vst [vmem:[%s7 + $0x58] sm:$0xff] %v666
  %697 = vst [vmem:[%s7 + $0x60] sm:$0xff] %v671
  %698 = vst [vmem:[%s7 + $0x68] sm:$0xff] %v674
  %699 = vst [vmem:[%s7 + $0x70] sm:$0xff] %v679
  %700 = vst [vmem:[%s7 + $0x78] sm:$0xff] %v682
  // Predicated region
  $region30: #{glove_bilstm_forward.9} parent=0 // pred_check
    _
  $region31: #{glove_bilstm_forward.9} parent=0 // pred_check_branch
    %702 = sbr.rel (0) target = $region33
  $region32: #{glove_bilstm_forward.9} parent=0 // pred_region
    _
  $region33: #{glove_bilstm_forward.9} parent=0 // pred_fallthru
    _
  // Predicated region
  $region34: #{glove_bilstm_forward.9} parent=0 // pred_check
    _
  $region35: #{glove_bilstm_forward.9} parent=0 // pred_check_branch
    %704 = sbr.rel (0) target = $region37
  $region36: #{glove_bilstm_forward.9} parent=0 // pred_region
    _
  $region37: #{glove_bilstm_forward.9} parent=0 // pred_fallthru
    _

// kernel: glove_bilstm_forward.6
$region0: #{glove_bilstm_forward.6}
  #allocation0 [shape = 'u32[]', space=smem, size = 0x4, offset = 0x4, fixed_abs, tag = 'smem constant byte address 0x4 - core index']
  #allocation1 [shape = 'u32[144,128]{1,0:T(1,128)}', space=vmem, size = 0x12000, scoped, tag = 'internal scratch']
  #allocation2 [shape = 'f32[16,32]{1,0:T(8,128)}', space=vmem, size = 0x2000, scoped, tag = 'scratch operand']
  #allocation3 [shape = 'f32[16,32]{1,0:T(8,128)}', space=vmem, size = 0x2000, scoped, tag = 'scratch operand']
  #allocation4 [shape = 'f32[16,32]{1,0:T(8,128)}', space=vmem, size = 0x2000, scoped, tag = 'scratch operand']
  #allocation5 [shape = 'f32[16,32]{1,0:T(8,128)}', space=vmem, size = 0x2000, scoped, tag = 'scratch operand']
  %s0 = inlined_call_operand.vmem [shape: f32[8,16,128], index: 0, kind: input, shape index: {}]
  %s1 = inlined_call_operand.vmem [shape: f32[8,16,128], index: 1, kind: input, shape index: {}]
  %s2 = inlined_call_operand.vmem [shape: bf16[64,256], index: 2, kind: input, shape index: {}]
  %s3 = inlined_call_operand.vmem [shape: bf16[8,16,32], index: 3, kind: output, shape index: {0}]
  %s4 = inlined_call_operand.vmem [shape: bf16[8,16,32], index: 4, kind: output, shape index: {1}]
  %5 = xla_tuple %s3, %s4
  %s6 = sld [smem:[#allocation0]]
  $region34: #{glove_bilstm_forward.6} parent=0
    _
  %s8 = ssub.s32 1, %s6
  %s9 = scalar_select 0, %s8, %s6
  // Predicated region
  $region2: #{glove_bilstm_forward.6} parent=0 // pred_check
    _
  $region3: #{glove_bilstm_forward.6} parent=0 // pred_check_branch
    %11 = sbr.rel (0) target = $region5
  $region4: #{glove_bilstm_forward.6} parent=0 // pred_region
    _
  $region5: #{glove_bilstm_forward.6} parent=0 // pred_fallthru
    _
  // Predicated region
  $region6: #{glove_bilstm_forward.6} parent=0 // pred_check
    _
  $region7: #{glove_bilstm_forward.6} parent=0 // pred_check_branch
    %13 = sbr.rel (0) target = $region9
  $region8: #{glove_bilstm_forward.6} parent=0 // pred_region
    %s14 = ssub.s32 0, 0
    %s15 = smul.u32 8, %s14
    %p16 = scmp.lt.s32.totalorder %s15, 7
    %s17 = scalar_select %p16, %s15, 7
    %s18 = smul.addr %s17, 2
    %s19 = smul.addr %s18, 8
    %s20 = scalar_lea.vmem %s1, %s19
    %s21 = ssub.s32 0, 0
    %s22 = smul.u32 8, %s21
  $region9: #{glove_bilstm_forward.6} parent=0 // pred_fallthru
    _
  // Predicated region
  $region10: #{glove_bilstm_forward.6} parent=0 // pred_check
    _
  $region11: #{glove_bilstm_forward.6} parent=0 // pred_check_branch
    %24 = sbr.rel (0) target = $region13
  $region12: #{glove_bilstm_forward.6} parent=0 // pred_region
    _
  $region13: #{glove_bilstm_forward.6} parent=0 // pred_fallthru
    _
  %s25 = ssub.s32 0, 0
  %s26 = smul.u32 8, %s25
  %p27 = scmp.lt.s32.totalorder %s26, 7
  %s28 = scalar_select %p27, %s26, 7
  %s29 = smul.addr %s28, 2
  %s30 = smul.addr %s29, 8
  %s31 = scalar_lea.vmem %s1, %s30
  %s32 = ssub.s32 0, 0
  %s33 = smul.u32 8, %s32
  %p34 = scmp.lt.s32.totalorder %s33, 7
  %s35 = scalar_select %p34, %s33, 7
  %s36 = smul.addr %s35, 2
  %s37 = smul.addr %s36, 4
  %s38 = scalar_lea.vmem %s4, %s37
  %s39 = ssub.s32 0, 0
  %s40 = smul.u32 8, %s39
  %p41 = scmp.lt.s32.totalorder %s40, 7
  %s42 = scalar_select %p41, %s40, 7
  %s43 = smul.addr %s42, 2
  %s44 = smul.addr %s43, 8
  %s45 = scalar_lea.vmem %s1, %s44
  %s46 = ssub.s32 0, 0
  %s47 = smul.u32 8, %s46
  %s48 = ssub.s32 0, 0
  %s49 = smul.u32 8, %s48
  %p50 = scmp.lt.s32.totalorder %s49, 7
  %s51 = scalar_select %p50, %s49, 7
  %s52 = smul.addr %s51, 2
  %s53 = smul.addr %s52, 4
  %s54 = scalar_lea.vmem %s4, %s53
  %s55 = ssub.s32 0, 0
  %s56 = smul.u32 8, %s55
  %p58 = scmp.eq.s32.totalorder 0, 0
  // Predicated region
  $region14: #{glove_bilstm_forward.6} parent=0 // pred_check
    %p59 = pneg %p58
  $region15: #{glove_bilstm_forward.6} parent=0 // pred_check_branch
    %61 = sbr.rel (%p59) target = $region17
  $region16: #{glove_bilstm_forward.6} parent=0 // pred_region
    %vm62 = vcmask 261120
    %63 = vst.msk [vmem:[#allocation2] sm:$0xff] %vm62, 0.0
    %64 = vst.msk [vmem:[#allocation2 + $0x8] sm:$0xff] %vm62, 0.0
    %65 = vst.msk [vmem:[#allocation3] sm:$0xff] %vm62, 0.0
    %66 = vst.msk [vmem:[#allocation3 + $0x8] sm:$0xff] %vm62, 0.0
    %67 = vst.msk [vmem:[#allocation4] sm:$0xff] %vm62, 0.0
    %68 = vst.msk [vmem:[#allocation4 + $0x8] sm:$0xff] %vm62, 0.0
    %69 = vst.msk [vmem:[#allocation5] sm:$0xff] %vm62, 0.0
    %70 = vst.msk [vmem:[#allocation5 + $0x8] sm:$0xff] %vm62, 0.0
  $region17: #{glove_bilstm_forward.6} parent=0 // pred_fallthru
    _
  %v71 = vld [vmem:[%s2] sm:$0xff]
  %v72 = vld [vmem:[%s2 + $0x8] sm:$0xff]
  %v73 = vld [vmem:[%s2 + $0x10] sm:$0xff]
  %v74 = vld [vmem:[%s2 + $0x18] sm:$0xff]
  %v75 = vld [vmem:[%s2 + $0x20] sm:$0xff]
  %v76 = vld [vmem:[%s2 + $0x28] sm:$0xff]
  %v77 = vld [vmem:[%s2 + $0x30] sm:$0xff]
  %v78 = vld [vmem:[%s2 + $0x38] sm:$0xff]
  %v79 = vld [vmem:[#allocation2] sm:$0xff]
  %v80 = vld [vmem:[#allocation2 + $0x8] sm:$0xff]
  %v81 = vld [vmem:[#allocation4] sm:$0xff]
  %v82 = vld [vmem:[#allocation4 + $0x8] sm:$0xff]
  %85 = vrot.lane.b32.xlu0 %v81, 32
  %v86 = vpop.permute.xlu0 %85
  %87 = vrot.lane.b32.xlu0 %v82, 32
  %v88 = vpop.permute.xlu0 %87
  %vm91 = vcmask 261120
  %v92 = vsel %vm91, %v79, %v86
  %v93 = vsel %vm91, %v80, %v88
  %v94 = vpack.c.bf16 %v93, %v92
  %v103 = vunpack.c.l.b16 %v71
  %v104 = vunpack.c.h.b16 %v71
  %v105 = vunpack.c.l.b16 %v72
  %v106 = vunpack.c.h.b16 %v72
  %v107 = vunpack.c.l.b16 %v73
  %v108 = vunpack.c.h.b16 %v73
  %v109 = vunpack.c.l.b16 %v74
  %v110 = vunpack.c.h.b16 %v74
  %v111 = vunpack.c.l.b16 %v75
  %v112 = vunpack.c.h.b16 %v75
  %v113 = vunpack.c.l.b16 %v76
  %v114 = vunpack.c.h.b16 %v76
  %v115 = vunpack.c.l.b16 %v77
  %v116 = vunpack.c.h.b16 %v77
  %v117 = vunpack.c.l.b16 %v78
  %v118 = vunpack.c.h.b16 %v78
  %v119 = vpack.c.b16 %v105, %v103
  %v120 = vpack.c.b16 %v106, %v104
  %v121 = vpack.c.b16 %v109, %v107
  %v122 = vpack.c.b16 %v110, %v108
  %v123 = vpack.c.b16 %v113, %v111
  %v124 = vpack.c.b16 %v114, %v112
  %v125 = vpack.c.b16 %v117, %v115
  %v126 = vpack.c.b16 %v118, %v116
  %vm135 = vcmask 523264
  %v137 = vsel %vm135, %v94, 0
  %139 = vmatprep.subr.bf16.mxu0 %v120
  %140 = vmatpush1.bf16.msra.mxu0 %v119
  %141 = vmatprep.subr.bf16.mxu0 %v122
  %142 = vmatpush1.bf16.msra.mxu0 %v121
  %143 = vmatprep.subr.bf16.mxu0 %v124
  %144 = vmatpush1.bf16.msra.mxu0 %v123
  %145 = vmatprep.subr.bf16.mxu0 %v126
  %146 = vmatpush1.bf16.msra.mxu0 %v125
  %147 = vmatprep.subr.bf16.mxu0 0
  %148 = vmatpush1.bf16.msra.mxu0 0
  %149 = vmatprep.subr.bf16.mxu0 0
  %150 = vmatpush1.bf16.msra.mxu0 0
  %151 = vmatprep.subr.bf16.mxu0 0
  %152 = vmatpush1.bf16.msra.mxu0 0
  %153 = vmatprep.subr.bf16.mxu0 0
  %154 = vmatpush1.bf16.msra.mxu0 0
  %155 = vmatprep.subr.bf16.mxu0 0
  %156 = vmatpush1.bf16.msra.mxu0 0
  %157 = vmatprep.subr.bf16.mxu0 0
  %158 = vmatpush1.bf16.msra.mxu0 0
  %159 = vmatprep.subr.bf16.mxu0 0
  %160 = vmatpush1.bf16.msra.mxu0 0
  %161 = vmatprep.subr.bf16.mxu0 0
  %162 = vmatpush1.bf16.msra.mxu0 0
  %163 = vmatprep.subr.bf16.mxu0 0
  %164 = vmatpush1.bf16.msra.mxu0 0
  %165 = vmatprep.subr.bf16.mxu0 0
  %166 = vmatpush1.bf16.msra.mxu0 0
  %167 = vmatprep.subr.bf16.mxu0 0
  %168 = vmatpush1.bf16.msra.mxu0 0
  %169 = vmatprep.subr.bf16.mxu0 0
  %170 = vmatpush1.bf16.msra.mxu0 0
  %171 = vmatprep.mubr.bf16.mxu0 0
  %172 = vmatmul.mubr.bf16.gmra.mrb[0].mxu0 %v137
  %v173 = vpop.f32.mrb[0].mxu0
  %v174 = vadd.f32 0.0, %v173
  %v175 = vpop.f32.mrb[0].mxu0
  %v176 = vadd.f32 0.0, %v175
  %v177 = vpop.f32.mrb[0].mxu0
  %v178 = vadd.f32 0.0, %v177
  %v179 = vpop.f32.mrb[0].mxu0
  %v180 = vadd.f32 0.0, %v179
  %181 = vdwg.mxu0
  %v182 = vld [vmem:[%s0] sm:$0xff]
  %v183 = vld [vmem:[%s0 + $0x8] sm:$0xff]
  %v184 = vadd.f32 %v182, %v174
  %v185 = vadd.f32 %v183, %v178
  %s186 = scalar_lea.vmem %s45, 112
  %v187 = vld [vmem:[%s186] sm:$0xff]
  %v188 = vld [vmem:[%s186 + $0x8] sm:$0xff]
  %v189 = vadd.f32 %v187, %v176
  %v190 = vadd.f32 %v188, %v180
  %v191 = vld [vmem:[#allocation3] sm:$0xff]
  %v192 = vld [vmem:[#allocation3 + $0x8] sm:$0xff]
  %v193 = vxor.u32 %v184, 2147483648
  %v194 = vxor.u32 %v185, 2147483648
  %v195 = vmul.f32 %v193, 1.442695
  %v196 = vpow.pop %v195
  %v197 = vmul.f32 %v194, 1.442695
  %v198 = vpow.pop %v197
  %v199 = vadd.f32 %v196, 1.0
  %v200 = vadd.f32 %v198, 1.0
  %v201 = vrcp.pop %v199
  %v202 = vmul.f32 1.0, %v201
  %v203 = vrcp.pop %v200
  %v204 = vmul.f32 1.0, %v203
  %v205 = vtanh.pop %v184
  %v206 = vtanh.pop %v185
  %209 = vrot.lane.b32.xlu0 %v191, 32
  %v210 = vpop.permute.xlu0 %209
  %211 = vrot.lane.b32.xlu0 %v192, 32
  %v212 = vpop.permute.xlu0 %211
  %v215 = vmul.f32 %v202, %v210
  %v216 = vmul.f32 %v204, %v212
  %219 = vrot.lane.b32.xlu0 %v205, 64
  %v220 = vpop.permute.xlu0 %219
  %221 = vrot.lane.b32.xlu0 %v206, 64
  %v222 = vpop.permute.xlu0 %221
  %v225 = vmul.f32 %v202, %v220
  %v226 = vmul.f32 %v204, %v222
  %229 = vrot.lane.b32.xlu0 %v225, 32
  %v230 = vpop.permute.xlu0 %229
  %231 = vrot.lane.b32.xlu0 %v226, 32
  %v232 = vpop.permute.xlu0 %231
  %v235 = vadd.f32 %v215, %v230
  %v236 = vadd.f32 %v216, %v232
  %v237 = vtanh.pop %v235
  %v238 = vtanh.pop %v236
  %241 = vrot.lane.b32.xlu0 %v237, 64
  %v242 = vpop.permute.xlu0 %241
  %243 = vrot.lane.b32.xlu0 %v238, 64
  %v244 = vpop.permute.xlu0 %243
  %v247 = vmul.f32 %v202, %v242
  %v248 = vmul.f32 %v204, %v244
  %v249 = vld [vmem:[#allocation5] sm:$0xff]
  %v250 = vld [vmem:[#allocation5 + $0x8] sm:$0xff]
  %v251 = vxor.u32 %v189, 2147483648
  %v252 = vxor.u32 %v190, 2147483648
  %v253 = vmul.f32 %v251, 1.442695
  %v254 = vpow.pop %v253
  %v255 = vmul.f32 %v252, 1.442695
  %v256 = vpow.pop %v255
  %v257 = vadd.f32 %v254, 1.0
  %v258 = vadd.f32 %v256, 1.0
  %v259 = vrcp.pop %v257
  %v260 = vmul.f32 1.0, %v259
  %v261 = vrcp.pop %v258
  %v262 = vmul.f32 1.0, %v261
  %v263 = vtanh.pop %v189
  %v264 = vtanh.pop %v190
  %267 = vrot.lane.b32.xlu0 %v249, 32
  %v268 = vpop.permute.xlu0 %267
  %269 = vrot.lane.b32.xlu0 %v250, 32
  %v270 = vpop.permute.xlu0 %269
  %v273 = vmul.f32 %v260, %v268
  %v274 = vmul.f32 %v262, %v270
  %277 = vrot.lane.b32.xlu0 %v263, 64
  %v278 = vpop.permute.xlu0 %277
  %279 = vrot.lane.b32.xlu0 %v264, 64
  %v280 = vpop.permute.xlu0 %279
  %v283 = vmul.f32 %v260, %v278
  %v284 = vmul.f32 %v262, %v280
  %287 = vrot.lane.b32.xlu0 %v283, 32
  %v288 = vpop.permute.xlu0 %287
  %289 = vrot.lane.b32.xlu0 %v284, 32
  %v290 = vpop.permute.xlu0 %289
  %v293 = vadd.f32 %v273, %v288
  %v294 = vadd.f32 %v274, %v290
  %v295 = vtanh.pop %v293
  %v296 = vtanh.pop %v294
  %299 = vrot.lane.b32.xlu0 %v295, 64
  %v300 = vpop.permute.xlu0 %299
  %301 = vrot.lane.b32.xlu0 %v296, 64
  %v302 = vpop.permute.xlu0 %301
  %v305 = vmul.f32 %v260, %v300
  %v306 = vmul.f32 %v262, %v302
  %309 = vrot.lane.b32.xlu0 %v247, 32
  %v310 = vpop.permute.xlu0 %309
  %311 = vrot.lane.b32.xlu0 %v248, 32
  %v312 = vpop.permute.xlu0 %311
  %315 = vst.msk [vmem:[#allocation2] sm:$0xff] %vm91, %v310
  %316 = vst.msk [vmem:[#allocation2 + $0x8] sm:$0xff] %vm91, %v312
  %319 = vrot.lane.b32.xlu0 %v235, 96
  %v320 = vpop.permute.xlu0 %319
  %321 = vrot.lane.b32.xlu0 %v236, 96
  %v322 = vpop.permute.xlu0 %321
  %325 = vst.msk [vmem:[#allocation3] sm:$0xff] %vm91, %v320
  %326 = vst.msk [vmem:[#allocation3 + $0x8] sm:$0xff] %vm91, %v322
  %329 = vrot.lane.b32.xlu0 %v305, 32
  %v330 = vpop.permute.xlu0 %329
  %331 = vrot.lane.b32.xlu0 %v306, 32
  %v332 = vpop.permute.xlu0 %331
  %335 = vst.msk [vmem:[#allocation4] sm:$0xff] %vm91, %v330
  %336 = vst.msk [vmem:[#allocation4 + $0x8] sm:$0xff] %vm91, %v332
  %339 = vrot.lane.b32.xlu0 %v293, 96
  %v340 = vpop.permute.xlu0 %339
  %341 = vrot.lane.b32.xlu0 %v294, 96
  %v342 = vpop.permute.xlu0 %341
  %345 = vst.msk [vmem:[#allocation5] sm:$0xff] %vm91, %v340
  %346 = vst.msk [vmem:[#allocation5 + $0x8] sm:$0xff] %vm91, %v342
  %v347 = vpack.c.bf16 %v248, %v247
  %v349 = vunpack.c.l.b16 %v347
  %v350 = vunpack.c.h.b16 %v347
  %v351 = vpack.c.b16 %v349, %v349
  %v352 = vpack.c.b16 %v350, %v350
  %353 = vrot.lane.b32.xlu0 %v351, 32
  %v354 = vpop.permute.xlu0 %353
  %355 = vrot.lane.b32.xlu0 %v352, 32
  %v356 = vpop.permute.xlu0 %355
  %vm359 = vcmask 257024
  %360 = vst.msk [vmem:[%s3] sm:$0xf] %vm359, %v354
  %361 = vst.msk [vmem:[%s3 + $0x4] sm:$0xf] %vm359, %v356
  %v362 = vpack.c.bf16 %v306, %v305
  %v364 = vunpack.c.l.b16 %v362
  %v365 = vunpack.c.h.b16 %v362
  %v366 = vpack.c.b16 %v364, %v364
  %v367 = vpack.c.b16 %v365, %v365
  %368 = vrot.lane.b32.xlu0 %v366, 32
  %v369 = vpop.permute.xlu0 %368
  %370 = vrot.lane.b32.xlu0 %v367, 32
  %v371 = vpop.permute.xlu0 %370
  %s374 = scalar_lea.vmem %s54, 56
  %375 = vst.msk [vmem:[%s374] sm:$0xf] %vm359, %v369
  %376 = vst.msk [vmem:[%s374 + $0x4] sm:$0xf] %vm359, %v371
  %v377 = vld [vmem:[#allocation2] sm:$0xff]
  %v378 = vld [vmem:[#allocation2 + $0x8] sm:$0xff]
  %v379 = vld [vmem:[#allocation4] sm:$0xff]
  %v380 = vld [vmem:[#allocation4 + $0x8] sm:$0xff]
  %383 = vrot.lane.b32.xlu0 %v379, 32
  %v384 = vpop.permute.xlu0 %383
  %385 = vrot.lane.b32.xlu0 %v380, 32
  %v386 = vpop.permute.xlu0 %385
  %v389 = vsel %vm91, %v377, %v384
  %v390 = vsel %vm91, %v378, %v386
  %v391 = vpack.c.bf16 %v390, %v389
  %v393 = vsel %vm135, %v391, 0
  %395 = vmatprep.subr.bf16.mxu0 %v120
  %396 = vmatpush1.bf16.msra.mxu0 %v119
  %397 = vmatprep.subr.bf16.mxu0 %v122
  %398 = vmatpush1.bf16.msra.mxu0 %v121
  %399 = vmatprep.subr.bf16.mxu0 %v124
  %400 = vmatpush1.bf16.msra.mxu0 %v123
  %401 = vmatprep.subr.bf16.mxu0 %v126
  %402 = vmatpush1.bf16.msra.mxu0 %v125
  %403 = vmatprep.subr.bf16.mxu0 0
  %404 = vmatpush1.bf16.msra.mxu0 0
  %405 = vmatprep.subr.bf16.mxu0 0
  %406 = vmatpush1.bf16.msra.mxu0 0
  %407 = vmatprep.subr.bf16.mxu0 0
  %408 = vmatpush1.bf16.msra.mxu0 0
  %409 = vmatprep.subr.bf16.mxu0 0
  %410 = vmatpush1.bf16.msra.mxu0 0
  %411 = vmatprep.subr.bf16.mxu0 0
  %412 = vmatpush1.bf16.msra.mxu0 0
  %413 = vmatprep.subr.bf16.mxu0 0
  %414 = vmatpush1.bf16.msra.mxu0 0
  %415 = vmatprep.subr.bf16.mxu0 0
  %416 = vmatpush1.bf16.msra.mxu0 0
  %417 = vmatprep.subr.bf16.mxu0 0
  %418 = vmatpush1.bf16.msra.mxu0 0
  %419 = vmatprep.subr.bf16.mxu0 0
  %420 = vmatpush1.bf16.msra.mxu0 0
  %421 = vmatprep.subr.bf16.mxu0 0
  %422 = vmatpush1.bf16.msra.mxu0 0
  %423 = vmatprep.subr.bf16.mxu0 0
  %424 = vmatpush1.bf16.msra.mxu0 0
  %425 = vmatprep.subr.bf16.mxu0 0
  %426 = vmatpush1.bf16.msra.mxu0 0
  %427 = vmatprep.mubr.bf16.mxu0 0
  %428 = vmatmul.mubr.bf16.gmra.mrb[0].mxu0 %v393
  %v429 = vpop.f32.mrb[0].mxu0
  %v430 = vadd.f32 0.0, %v429
  %v431 = vpop.f32.mrb[0].mxu0
  %v432 = vadd.f32 0.0, %v431
  %v433 = vpop.f32.mrb[0].mxu0
  %v434 = vadd.f32 0.0, %v433
  %v435 = vpop.f32.mrb[0].mxu0
  %v436 = vadd.f32 0.0, %v435
  %437 = vdwg.mxu0
  %s438 = scalar_lea.vmem %s0, 16
  %v439 = vld [vmem:[%s438] sm:$0xff]
  %v440 = vld [vmem:[%s438 + $0x8] sm:$0xff]
  %v441 = vadd.f32 %v439, %v430
  %v442 = vadd.f32 %v440, %v434
  %s443 = scalar_lea.vmem %s45, 96
  %v444 = vld [vmem:[%s443] sm:$0xff]
  %v445 = vld [vmem:[%s443 + $0x8] sm:$0xff]
  %v446 = vadd.f32 %v444, %v432
  %v447 = vadd.f32 %v445, %v436
  %v448 = vld [vmem:[#allocation3] sm:$0xff]
  %v449 = vld [vmem:[#allocation3 + $0x8] sm:$0xff]
  %v450 = vxor.u32 %v441, 2147483648
  %v451 = vxor.u32 %v442, 2147483648
  %v452 = vmul.f32 %v450, 1.442695
  %v453 = vpow.pop %v452
  %v454 = vmul.f32 %v451, 1.442695
  %v455 = vpow.pop %v454
  %v456 = vadd.f32 %v453, 1.0
  %v457 = vadd.f32 %v455, 1.0
  %v458 = vrcp.pop %v456
  %v459 = vmul.f32 1.0, %v458
  %v460 = vrcp.pop %v457
  %v461 = vmul.f32 1.0, %v460
  %v462 = vtanh.pop %v441
  %v463 = vtanh.pop %v442
  %466 = vrot.lane.b32.xlu0 %v448, 32
  %v467 = vpop.permute.xlu0 %466
  %468 = vrot.lane.b32.xlu0 %v449, 32
  %v469 = vpop.permute.xlu0 %468
  %v472 = vmul.f32 %v459, %v467
  %v473 = vmul.f32 %v461, %v469
  %476 = vrot.lane.b32.xlu0 %v462, 64
  %v477 = vpop.permute.xlu0 %476
  %478 = vrot.lane.b32.xlu0 %v463, 64
  %v479 = vpop.permute.xlu0 %478
  %v482 = vmul.f32 %v459, %v477
  %v483 = vmul.f32 %v461, %v479
  %486 = vrot.lane.b32.xlu0 %v482, 32
  %v487 = vpop.permute.xlu0 %486
  %488 = vrot.lane.b32.xlu0 %v483, 32
  %v489 = vpop.permute.xlu0 %488
  %v492 = vadd.f32 %v472, %v487
  %v493 = vadd.f32 %v473, %v489
  %v494 = vtanh.pop %v492
  %v495 = vtanh.pop %v493
  %498 = vrot.lane.b32.xlu0 %v494, 64
  %v499 = vpop.permute.xlu0 %498
  %500 = vrot.lane.b32.xlu0 %v495, 64
  %v501 = vpop.permute.xlu0 %500
  %v504 = vmul.f32 %v459, %v499
  %v505 = vmul.f32 %v461, %v501
  %v506 = vld [vmem:[#allocation5] sm:$0xff]
  %v507 = vld [vmem:[#allocation5 + $0x8] sm:$0xff]
  %v508 = vxor.u32 %v446, 2147483648
  %v509 = vxor.u32 %v447, 2147483648
  %v510 = vmul.f32 %v508, 1.442695
  %v511 = vpow.pop %v510
  %v512 = vmul.f32 %v509, 1.442695
  %v513 = vpow.pop %v512
  %v514 = vadd.f32 %v511, 1.0
  %v515 = vadd.f32 %v513, 1.0
  %v516 = vrcp.pop %v514
  %v517 = vmul.f32 1.0, %v516
  %v518 = vrcp.pop %v515
  %v519 = vmul.f32 1.0, %v518
  %v520 = vtanh.pop %v446
  %v521 = vtanh.pop %v447
  %524 = vrot.lane.b32.xlu0 %v506, 32
  %v525 = vpop.permute.xlu0 %524
  %526 = vrot.lane.b32.xlu0 %v507, 32
  %v527 = vpop.permute.xlu0 %526
  %v530 = vmul.f32 %v517, %v525
  %v531 = vmul.f32 %v519, %v527
  %534 = vrot.lane.b32.xlu0 %v520, 64
  %v535 = vpop.permute.xlu0 %534
  %536 = vrot.lane.b32.xlu0 %v521, 64
  %v537 = vpop.permute.xlu0 %536
  %v540 = vmul.f32 %v517, %v535
  %v541 = vmul.f32 %v519, %v537
  %544 = vrot.lane.b32.xlu0 %v540, 32
  %v545 = vpop.permute.xlu0 %544
  %546 = vrot.lane.b32.xlu0 %v541, 32
  %v547 = vpop.permute.xlu0 %546
  %v550 = vadd.f32 %v530, %v545
  %v551 = vadd.f32 %v531, %v547
  %v552 = vtanh.pop %v550
  %v553 = vtanh.pop %v551
  %556 = vrot.lane.b32.xlu0 %v552, 64
  %v557 = vpop.permute.xlu0 %556
  %558 = vrot.lane.b32.xlu0 %v553, 64
  %v559 = vpop.permute.xlu0 %558
  %v562 = vmul.f32 %v517, %v557
  %v563 = vmul.f32 %v519, %v559
  %566 = vrot.lane.b32.xlu0 %v504, 32
  %v567 = vpop.permute.xlu0 %566
  %568 = vrot.lane.b32.xlu0 %v505, 32
  %v569 = vpop.permute.xlu0 %568
  %572 = vst.msk [vmem:[#allocation2] sm:$0xff] %vm91, %v567
  %573 = vst.msk [vmem:[#allocation2 + $0x8] sm:$0xff] %vm91, %v569
  %576 = vrot.lane.b32.xlu0 %v492, 96
  %v577 = vpop.permute.xlu0 %576
  %578 = vrot.lane.b32.xlu0 %v493, 96
  %v579 = vpop.permute.xlu0 %578
  %582 = vst.msk [vmem:[#allocation3] sm:$0xff] %vm91, %v577
  %583 = vst.msk [vmem:[#allocation3 + $0x8] sm:$0xff] %vm91, %v579
  %586 = vrot.lane.b32.xlu0 %v562, 32
  %v587 = vpop.permute.xlu0 %586
  %588 = vrot.lane.b32.xlu0 %v563, 32
  %v589 = vpop.permute.xlu0 %588
  %592 = vst.msk [vmem:[#allocation4] sm:$0xff] %vm91, %v587
  %593 = vst.msk [vmem:[#allocation4 + $0x8] sm:$0xff] %vm91, %v589
  %596 = vrot.lane.b32.xlu0 %v550, 96
  %v597 = vpop.permute.xlu0 %596
  %598 = vrot.lane.b32.xlu0 %v551, 96
  %v599 = vpop.permute.xlu0 %598
  %602 = vst.msk [vmem:[#allocation5] sm:$0xff] %vm91, %v597
  %603 = vst.msk [vmem:[#allocation5 + $0x8] sm:$0xff] %vm91, %v599
  %v604 = vpack.c.bf16 %v505, %v504
  %v606 = vunpack.c.l.b16 %v604
  %v607 = vunpack.c.h.b16 %v604
  %v608 = vpack.c.b16 %v606, %v606
  %v609 = vpack.c.b16 %v607, %v607
  %610 = vrot.lane.b32.xlu0 %v608, 32
  %v611 = vpop.permute.xlu0 %610
  %612 = vrot.lane.b32.xlu0 %v609, 32
  %v613 = vpop.permute.xlu0 %612
  %s616 = scalar_lea.vmem %s3, 8
  %617 = vst.msk [vmem:[%s616] sm:$0xf] %vm359, %v611
  %618 = vst.msk [vmem:[%s616 + $0x4] sm:$0xf] %vm359, %v613
  %v619 = vpack.c.bf16 %v563, %v562
  %v621 = vunpack.c.l.b16 %v619
  %v622 = vunpack.c.h.b16 %v619
  %v623 = vpack.c.b16 %v621, %v621
  %v624 = vpack.c.b16 %v622, %v622
  %625 = vrot.lane.b32.xlu0 %v623, 32
  %v626 = vpop.permute.xlu0 %625
  %627 = vrot.lane.b32.xlu0 %v624, 32
  %v628 = vpop.permute.xlu0 %627
  %s631 = scalar_lea.vmem %s54, 48
  %632 = vst.msk [vmem:[%s631] sm:$0xf] %vm359, %v626
  %633 = vst.msk [vmem:[%s631 + $0x4] sm:$0xf] %vm359, %v628
  %v634 = vld [vmem:[#allocation2] sm:$0xff]
  %v635 = vld [vmem:[#allocation2 + $0x8] sm:$0xff]
  %v636 = vld [vmem:[#allocation4] sm:$0xff]
  %v637 = vld [vmem:[#allocation4 + $0x8] sm:$0xff]
  %640 = vrot.lane.b32.xlu0 %v636, 32
  %v641 = vpop.permute.xlu0 %640
  %642 = vrot.lane.b32.xlu0 %v637, 32
  %v643 = vpop.permute.xlu0 %642
  %v646 = vsel %vm91, %v634, %v641
  %v647 = vsel %vm91, %v635, %v643
  %v648 = vpack.c.bf16 %v647, %v646
  %v650 = vsel %vm135, %v648, 0
  %652 = vmatprep.subr.bf16.mxu0 %v120
  %653 = vmatpush1.bf16.msra.mxu0 %v119
  %654 = vmatprep.subr.bf16.mxu0 %v122
  %655 = vmatpush1.bf16.msra.mxu0 %v121
  %656 = vmatprep.subr.bf16.mxu0 %v124
  %657 = vmatpush1.bf16.msra.mxu0 %v123
  %658 = vmatprep.subr.bf16.mxu0 %v126
  %659 = vmatpush1.bf16.msra.mxu0 %v125
  %660 = vmatprep.subr.bf16.mxu0 0
  %661 = vmatpush1.bf16.msra.mxu0 0
  %662 = vmatprep.subr.bf16.mxu0 0
  %663 = vmatpush1.bf16.msra.mxu0 0
  %664 = vmatprep.subr.bf16.mxu0 0
  %665 = vmatpush1.bf16.msra.mxu0 0
  %666 = vmatprep.subr.bf16.mxu0 0
  %667 = vmatpush1.bf16.msra.mxu0 0
  %668 = vmatprep.subr.bf16.mxu0 0
  %669 = vmatpush1.bf16.msra.mxu0 0
  %670 = vmatprep.subr.bf16.mxu0 0
  %671 = vmatpush1.bf16.msra.mxu0 0
  %672 = vmatprep.subr.bf16.mxu0 0
  %673 = vmatpush1.bf16.msra.mxu0 0
  %674 = vmatprep.subr.bf16.mxu0 0
  %675 = vmatpush1.bf16.msra.mxu0 0
  %676 = vmatprep.subr.bf16.mxu0 0
  %677 = vmatpush1.bf16.msra.mxu0 0
  %678 = vmatprep.subr.bf16.mxu0 0
  %679 = vmatpush1.bf16.msra.mxu0 0
  %680 = vmatprep.subr.bf16.mxu0 0
  %681 = vmatpush1.bf16.msra.mxu0 0
  %682 = vmatprep.subr.bf16.mxu0 0
  %683 = vmatpush1.bf16.msra.mxu0 0
  %684 = vmatprep.mubr.bf16.mxu0 0
  %685 = vmatmul.mubr.bf16.gmra.mrb[0].mxu0 %v650
  %v686 = vpop.f32.mrb[0].mxu0
  %v687 = vadd.f32 0.0, %v686
  %v688 = vpop.f32.mrb[0].mxu0
  %v689 = vadd.f32 0.0, %v688
  %v690 = vpop.f32.mrb[0].mxu0
  %v691 = vadd.f32 0.0, %v690
  %v692 = vpop.f32.mrb[0].mxu0
  %v693 = vadd.f32 0.0, %v692
  %694 = vdwg.mxu0
  %s695 = scalar_lea.vmem %s0, 32
  %v696 = vld [vmem:[%s695] sm:$0xff]
  %v697 = vld [vmem:[%s695 + $0x8] sm:$0xff]
  %v698 = vadd.f32 %v696, %v687
  %v699 = vadd.f32 %v697, %v691
  %s700 = scalar_lea.vmem %s45, 80
  %v701 = vld [vmem:[%s700] sm:$0xff]
  %v702 = vld [vmem:[%s700 + $0x8] sm:$0xff]
  %v703 = vadd.f32 %v701, %v689
  %v704 = vadd.f32 %v702, %v693
  %v705 = vld [vmem:[#allocation3] sm:$0xff]
  %v706 = vld [vmem:[#allocation3 + $0x8] sm:$0xff]
  %v707 = vxor.u32 %v698, 2147483648
  %v708 = vxor.u32 %v699, 2147483648
  %v709 = vmul.f32 %v707, 1.442695
  %v710 = vpow.pop %v709
  %v711 = vmul.f32 %v708, 1.442695
  %v712 = vpow.pop %v711
  %v713 = vadd.f32 %v710, 1.0
  %v714 = vadd.f32 %v712, 1.0
  %v715 = vrcp.pop %v713
  %v716 = vmul.f32 1.0, %v715
  %v717 = vrcp.pop %v714
  %v718 = vmul.f32 1.0, %v717
  %v719 = vtanh.pop %v698
  %v720 = vtanh.pop %v699
  %723 = vrot.lane.b32.xlu0 %v705, 32
  %v724 = vpop.permute.xlu0 %723
  %725 = vrot.lane.b32.xlu0 %v706, 32
  %v726 = vpop.permute.xlu0 %725
  %v729 = vmul.f32 %v716, %v724
  %v730 = vmul.f32 %v718, %v726
  %733 = vrot.lane.b32.xlu0 %v719, 64
  %v734 = vpop.permute.xlu0 %733
  %735 = vrot.lane.b32.xlu0 %v720, 64
  %v736 = vpop.permute.xlu0 %735
  %v739 = vmul.f32 %v716, %v734
  %v740 = vmul.f32 %v718, %v736
  %743 = vrot.lane.b32.xlu0 %v739, 32
  %v744 = vpop.permute.xlu0 %743
  %745 = vrot.lane.b32.xlu0 %v740, 32
  %v746 = vpop.permute.xlu0 %745
  %v749 = vadd.f32 %v729, %v744
  %v750 = vadd.f32 %v730, %v746
  %v751 = vtanh.pop %v749
  %v752 = vtanh.pop %v750
  %755 = vrot.lane.b32.xlu0 %v751, 64
  %v756 = vpop.permute.xlu0 %755
  %757 = vrot.lane.b32.xlu0 %v752, 64
  %v758 = vpop.permute.xlu0 %757
  %v761 = vmul.f32 %v716, %v756
  %v762 = vmul.f32 %v718, %v758
  %v763 = vld [vmem:[#allocation5] sm:$0xff]
  %v764 = vld [vmem:[#allocation5 + $0x8] sm:$0xff]
  %v765 = vxor.u32 %v703, 2147483648
  %v766 = vxor.u32 %v704, 2147483648
  %v767 = vmul.f32 %v765, 1.442695
  %v768 = vpow.pop %v767
  %v769 = vmul.f32 %v766, 1.442695
  %v770 = vpow.pop %v769
  %v771 = vadd.f32 %v768, 1.0
  %v772 = vadd.f32 %v770, 1.0
  %v773 = vrcp.pop %v771
  %v774 = vmul.f32 1.0, %v773
  %v775 = vrcp.pop %v772
  %v776 = vmul.f32 1.0, %v775
  %v777 = vtanh.pop %v703
  %v778 = vtanh.pop %v704
  %781 = vrot.lane.b32.xlu0 %v763, 32
  %v782 = vpop.permute.xlu0 %781
  %783 = vrot.lane.b32.xlu0 %v764, 32
  %v784 = vpop.permute.xlu0 %783
  %v787 = vmul.f32 %v774, %v782
  %v788 = vmul.f32 %v776, %v784
  %791 = vrot.lane.b32.xlu0 %v777, 64
  %v792 = vpop.permute.xlu0 %791
  %793 = vrot.lane.b32.xlu0 %v778, 64
  %v794 = vpop.permute.xlu0 %793
  %v797 = vmul.f32 %v774, %v792
  %v798 = vmul.f32 %v776, %v794
  %801 = vrot.lane.b32.xlu0 %v797, 32
  %v802 = vpop.permute.xlu0 %801
  %803 = vrot.lane.b32.xlu0 %v798, 32
  %v804 = vpop.permute.xlu0 %803
  %v807 = vadd.f32 %v787, %v802
  %v808 = vadd.f32 %v788, %v804
  %v809 = vtanh.pop %v807
  %v810 = vtanh.pop %v808
  %813 = vrot.lane.b32.xlu0 %v809, 64
  %v814 = vpop.permute.xlu0 %813
  %815 = vrot.lane.b32.xlu0 %v810, 64
  %v816 = vpop.permute.xlu0 %815
  %v819 = vmul.f32 %v774, %v814
  %v820 = vmul.f32 %v776, %v816
  %823 = vrot.lane.b32.xlu0 %v761, 32
  %v824 = vpop.permute.xlu0 %823
  %825 = vrot.lane.b32.xlu0 %v762, 32
  %v826 = vpop.permute.xlu0 %825
  %829 = vst.msk [vmem:[#allocation2] sm:$0xff] %vm91, %v824
  %830 = vst.msk [vmem:[#allocation2 + $0x8] sm:$0xff] %vm91, %v826
  %833 = vrot.lane.b32.xlu0 %v749, 96
  %v834 = vpop.permute.xlu0 %833
  %835 = vrot.lane.b32.xlu0 %v750, 96
  %v836 = vpop.permute.xlu0 %835
  %839 = vst.msk [vmem:[#allocation3] sm:$0xff] %vm91, %v834
  %840 = vst.msk [vmem:[#allocation3 + $0x8] sm:$0xff] %vm91, %v836
  %843 = vrot.lane.b32.xlu0 %v819, 32
  %v844 = vpop.permute.xlu0 %843
  %845 = vrot.lane.b32.xlu0 %v820, 32
  %v846 = vpop.permute.xlu0 %845
  %849 = vst.msk [vmem:[#allocation4] sm:$0xff] %vm91, %v844
  %850 = vst.msk [vmem:[#allocation4 + $0x8] sm:$0xff] %vm91, %v846
  %853 = vrot.lane.b32.xlu0 %v807, 96
  %v854 = vpop.permute.xlu0 %853
  %855 = vrot.lane.b32.xlu0 %v808, 96
  %v856 = vpop.permute.xlu0 %855
  %859 = vst.msk [vmem:[#allocation5] sm:$0xff] %vm91, %v854
  %860 = vst.msk [vmem:[#allocation5 + $0x8] sm:$0xff] %vm91, %v856
  %v861 = vpack.c.bf16 %v762, %v761
  %v863 = vunpack.c.l.b16 %v861
  %v864 = vunpack.c.h.b16 %v861
  %v865 = vpack.c.b16 %v863, %v863
  %v866 = vpack.c.b16 %v864, %v864
  %867 = vrot.lane.b32.xlu0 %v865, 32
  %v868 = vpop.permute.xlu0 %867
  %869 = vrot.lane.b32.xlu0 %v866, 32
  %v870 = vpop.permute.xlu0 %869
  %s873 = scalar_lea.vmem %s3, 16
  %874 = vst.msk [vmem:[%s873] sm:$0xf] %vm359, %v868
  %875 = vst.msk [vmem:[%s873 + $0x4] sm:$0xf] %vm359, %v870
  %v876 = vpack.c.bf16 %v820, %v819
  %v878 = vunpack.c.l.b16 %v876
  %v879 = vunpack.c.h.b16 %v876
  %v880 = vpack.c.b16 %v878, %v878
  %v881 = vpack.c.b16 %v879, %v879
  %882 = vrot.lane.b32.xlu0 %v880, 32
  %v883 = vpop.permute.xlu0 %882
  %884 = vrot.lane.b32.xlu0 %v881, 32
  %v885 = vpop.permute.xlu0 %884
  %s888 = scalar_lea.vmem %s54, 40
  %889 = vst.msk [vmem:[%s888] sm:$0xf] %vm359, %v883
  %890 = vst.msk [vmem:[%s888 + $0x4] sm:$0xf] %vm359, %v885
  %v891 = vld [vmem:[#allocation2] sm:$0xff]
  %v892 = vld [vmem:[#allocation2 + $0x8] sm:$0xff]
  %v893 = vld [vmem:[#allocation4] sm:$0xff]
  %v894 = vld [vmem:[#allocation4 + $0x8] sm:$0xff]
  %897 = vrot.lane.b32.xlu0 %v893, 32
  %v898 = vpop.permute.xlu0 %897
  %899 = vrot.lane.b32.xlu0 %v894, 32
  %v900 = vpop.permute.xlu0 %899
  %v903 = vsel %vm91, %v891, %v898
  %v904 = vsel %vm91, %v892, %v900
  %v905 = vpack.c.bf16 %v904, %v903
  %v907 = vsel %vm135, %v905, 0
  %909 = vmatprep.subr.bf16.mxu0 %v120
  %910 = vmatpush1.bf16.msra.mxu0 %v119
  %911 = vmatprep.subr.bf16.mxu0 %v122
  %912 = vmatpush1.bf16.msra.mxu0 %v121
  %913 = vmatprep.subr.bf16.mxu0 %v124
  %914 = vmatpush1.bf16.msra.mxu0 %v123
  %915 = vmatprep.subr.bf16.mxu0 %v126
  %916 = vmatpush1.bf16.msra.mxu0 %v125
  %917 = vmatprep.subr.bf16.mxu0 0
  %918 = vmatpush1.bf16.msra.mxu0 0
  %919 = vmatprep.subr.bf16.mxu0 0
  %920 = vmatpush1.bf16.msra.mxu0 0
  %921 = vmatprep.subr.bf16.mxu0 0
  %922 = vmatpush1.bf16.msra.mxu0 0
  %923 = vmatprep.subr.bf16.mxu0 0
  %924 = vmatpush1.bf16.msra.mxu0 0
  %925 = vmatprep.subr.bf16.mxu0 0
  %926 = vmatpush1.bf16.msra.mxu0 0
  %927 = vmatprep.subr.bf16.mxu0 0
  %928 = vmatpush1.bf16.msra.mxu0 0
  %929 = vmatprep.subr.bf16.mxu0 0
  %930 = vmatpush1.bf16.msra.mxu0 0
  %931 = vmatprep.subr.bf16.mxu0 0
  %932 = vmatpush1.bf16.msra.mxu0 0
  %933 = vmatprep.subr.bf16.mxu0 0
  %934 = vmatpush1.bf16.msra.mxu0 0
  %935 = vmatprep.subr.bf16.mxu0 0
  %936 = vmatpush1.bf16.msra.mxu0 0
  %937 = vmatprep.subr.bf16.mxu0 0
  %938 = vmatpush1.bf16.msra.mxu0 0
  %939 = vmatprep.subr.bf16.mxu0 0
  %940 = vmatpush1.bf16.msra.mxu0 0
  %941 = vmatprep.mubr.bf16.mxu0 0
  %942 = vmatmul.mubr.bf16.gmra.mrb[0].mxu0 %v907
  %v943 = vpop.f32.mrb[0].mxu0
  %v944 = vadd.f32 0.0, %v943
  %v945 = vpop.f32.mrb[0].mxu0
  %v946 = vadd.f32 0.0, %v945
  %v947 = vpop.f32.mrb[0].mxu0
  %v948 = vadd.f32 0.0, %v947
  %v949 = vpop.f32.mrb[0].mxu0
  %v950 = vadd.f32 0.0, %v949
  %951 = vdwg.mxu0
  %s952 = scalar_lea.vmem %s0, 48
  %v953 = vld [vmem:[%s952] sm:$0xff]
  %v954 = vld [vmem:[%s952 + $0x8] sm:$0xff]
  %v955 = vadd.f32 %v953, %v944
  %v956 = vadd.f32 %v954, %v948
  %s957 = scalar_lea.vmem %s45, 64
  %v958 = vld [vmem:[%s957] sm:$0xff]
  %v959 = vld [vmem:[%s957 + $0x8] sm:$0xff]
  %v960 = vadd.f32 %v958, %v946
  %v961 = vadd.f32 %v959, %v950
  %v962 = vld [vmem:[#allocation3] sm:$0xff]
  %v963 = vld [vmem:[#allocation3 + $0x8] sm:$0xff]
  %v964 = vxor.u32 %v955, 2147483648
  %v965 = vxor.u32 %v956, 2147483648
  %v966 = vmul.f32 %v964, 1.442695
  %v967 = vpow.pop %v966
  %v968 = vmul.f32 %v965, 1.442695
  %v969 = vpow.pop %v968
  %v970 = vadd.f32 %v967, 1.0
  %v971 = vadd.f32 %v969, 1.0
  %v972 = vrcp.pop %v970
  %v973 = vmul.f32 1.0, %v972
  %v974 = vrcp.pop %v971
  %v975 = vmul.f32 1.0, %v974
  %v976 = vtanh.pop %v955
  %v977 = vtanh.pop %v956
  %980 = vrot.lane.b32.xlu0 %v962, 32
  %v981 = vpop.permute.xlu0 %980
  %982 = vrot.lane.b32.xlu0 %v963, 32
  %v983 = vpop.permute.xlu0 %982
  %v986 = vmul.f32 %v973, %v981
  %v987 = vmul.f32 %v975, %v983
  %990 = vrot.lane.b32.xlu0 %v976, 64
  %v991 = vpop.permute.xlu0 %990
  %992 = vrot.lane.b32.xlu0 %v977, 64
  %v993 = vpop.permute.xlu0 %992
  %v996 = vmul.f32 %v973, %v991
  %v997 = vmul.f32 %v975, %v993
  %1000 = vrot.lane.b32.xlu0 %v996, 32
  %v1001 = vpop.permute.xlu0 %1000
  %1002 = vrot.lane.b32.xlu0 %v997, 32
  %v1003 = vpop.permute.xlu0 %1002
  %v1006 = vadd.f32 %v986, %v1001
  %v1007 = vadd.f32 %v987, %v1003
  %v1008 = vtanh.pop %v1006
  %v1009 = vtanh.pop %v1007
  %1012 = vrot.lane.b32.xlu0 %v1008, 64
  %v1013 = vpop.permute.xlu0 %1012
  %1014 = vrot.lane.b32.xlu0 %v1009, 64
  %v1015 = vpop.permute.xlu0 %1014
  %v1018 = vmul.f32 %v973, %v1013
  %v1019 = vmul.f32 %v975, %v1015
  %v1020 = vld [vmem:[#allocation5] sm:$0xff]
  %v1021 = vld [vmem:[#allocation5 + $0x8] sm:$0xff]
  %v1022 = vxor.u32 %v960, 2147483648
  %v1023 = vxor.u32 %v961, 2147483648
  %v1024 = vmul.f32 %v1022, 1.442695
  %v1025 = vpow.pop %v1024
  %v1026 = vmul.f32 %v1023, 1.442695
  %v1027 = vpow.pop %v1026
  %v1028 = vadd.f32 %v1025, 1.0
  %v1029 = vadd.f32 %v1027, 1.0
  %v1030 = vrcp.pop %v1028
  %v1031 = vmul.f32 1.0, %v1030
  %v1032 = vrcp.pop %v1029
  %v1033 = vmul.f32 1.0, %v1032
  %v1034 = vtanh.pop %v960
  %v1035 = vtanh.pop %v961
  %1038 = vrot.lane.b32.xlu0 %v1020, 32
  %v1039 = vpop.permute.xlu0 %1038
  %1040 = vrot.lane.b32.xlu0 %v1021, 32
  %v1041 = vpop.permute.xlu0 %1040
  %v1044 = vmul.f32 %v1031, %v1039
  %v1045 = vmul.f32 %v1033, %v1041
  %1048 = vrot.lane.b32.xlu0 %v1034, 64
  %v1049 = vpop.permute.xlu0 %1048
  %1050 = vrot.lane.b32.xlu0 %v1035, 64
  %v1051 = vpop.permute.xlu0 %1050
  %v1054 = vmul.f32 %v1031, %v1049
  %v1055 = vmul.f32 %v1033, %v1051
  %1058 = vrot.lane.b32.xlu0 %v1054, 32
  %v1059 = vpop.permute.xlu0 %1058
  %1060 = vrot.lane.b32.xlu0 %v1055, 32
  %v1061 = vpop.permute.xlu0 %1060
  %v1064 = vadd.f32 %v1044, %v1059
  %v1065 = vadd.f32 %v1045, %v1061
  %v1066 = vtanh.pop %v1064
  %v1067 = vtanh.pop %v1065
  %1070 = vrot.lane.b32.xlu0 %v1066, 64
  %v1071 = vpop.permute.xlu0 %1070
  %1072 = vrot.lane.b32.xlu0 %v1067, 64
  %v1073 = vpop.permute.xlu0 %1072
  %v1076 = vmul.f32 %v1031, %v1071
  %v1077 = vmul.f32 %v1033, %v1073
  %1080 = vrot.lane.b32.xlu0 %v1018, 32
  %v1081 = vpop.permute.xlu0 %1080
  %1082 = vrot.lane.b32.xlu0 %v1019, 32
  %v1083 = vpop.permute.xlu0 %1082
  %1086 = vst.msk [vmem:[#allocation2] sm:$0xff] %vm91, %v1081
  %1087 = vst.msk [vmem:[#allocation2 + $0x8] sm:$0xff] %vm91, %v1083
  %1090 = vrot.lane.b32.xlu0 %v1006, 96
  %v1091 = vpop.permute.xlu0 %1090
  %1092 = vrot.lane.b32.xlu0 %v1007, 96
  %v1093 = vpop.permute.xlu0 %1092
  %1096 = vst.msk [vmem:[#allocation3] sm:$0xff] %vm91, %v1091
  %1097 = vst.msk [vmem:[#allocation3 + $0x8] sm:$0xff] %vm91, %v1093
  %1100 = vrot.lane.b32.xlu0 %v1076, 32
  %v1101 = vpop.permute.xlu0 %1100
  %1102 = vrot.lane.b32.xlu0 %v1077, 32
  %v1103 = vpop.permute.xlu0 %1102
  %1106 = vst.msk [vmem:[#allocation4] sm:$0xff] %vm91, %v1101
  %1107 = vst.msk [vmem:[#allocation4 + $0x8] sm:$0xff] %vm91, %v1103
  %1110 = vrot.lane.b32.xlu0 %v1064, 96
  %v1111 = vpop.permute.xlu0 %1110
  %1112 = vrot.lane.b32.xlu0 %v1065, 96
  %v1113 = vpop.permute.xlu0 %1112
  %1116 = vst.msk [vmem:[#allocation5] sm:$0xff] %vm91, %v1111
  %1117 = vst.msk [vmem:[#allocation5 + $0x8] sm:$0xff] %vm91, %v1113
  %v1118 = vpack.c.bf16 %v1019, %v1018
  %v1120 = vunpack.c.l.b16 %v1118
  %v1121 = vunpack.c.h.b16 %v1118
  %v1122 = vpack.c.b16 %v1120, %v1120
  %v1123 = vpack.c.b16 %v1121, %v1121
  %1124 = vrot.lane.b32.xlu0 %v1122, 32
  %v1125 = vpop.permute.xlu0 %1124
  %1126 = vrot.lane.b32.xlu0 %v1123, 32
  %v1127 = vpop.permute.xlu0 %1126
  %s1130 = scalar_lea.vmem %s3, 24
  %1131 = vst.msk [vmem:[%s1130] sm:$0xf] %vm359, %v1125
  %1132 = vst.msk [vmem:[%s1130 + $0x4] sm:$0xf] %vm359, %v1127
  %v1133 = vpack.c.bf16 %v1077, %v1076
  %v1135 = vunpack.c.l.b16 %v1133
  %v1136 = vunpack.c.h.b16 %v1133
  %v1137 = vpack.c.b16 %v1135, %v1135
  %v1138 = vpack.c.b16 %v1136, %v1136
  %1139 = vrot.lane.b32.xlu0 %v1137, 32
  %v1140 = vpop.permute.xlu0 %1139
  %1141 = vrot.lane.b32.xlu0 %v1138, 32
  %v1142 = vpop.permute.xlu0 %1141
  %s1145 = scalar_lea.vmem %s54, 32
  %1146 = vst.msk [vmem:[%s1145] sm:$0xf] %vm359, %v1140
  %1147 = vst.msk [vmem:[%s1145 + $0x4] sm:$0xf] %vm359, %v1142
  %v1148 = vld [vmem:[#allocation2] sm:$0xff]
  %v1149 = vld [vmem:[#allocation2 + $0x8] sm:$0xff]
  %v1150 = vld [vmem:[#allocation4] sm:$0xff]
  %v1151 = vld [vmem:[#allocation4 + $0x8] sm:$0xff]
  %1154 = vrot.lane.b32.xlu0 %v1150, 32
  %v1155 = vpop.permute.xlu0 %1154
  %1156 = vrot.lane.b32.xlu0 %v1151, 32
  %v1157 = vpop.permute.xlu0 %1156
  %v1160 = vsel %vm91, %v1148, %v1155
  %v1161 = vsel %vm91, %v1149, %v1157
  %v1162 = vpack.c.bf16 %v1161, %v1160
  %v1164 = vsel %vm135, %v1162, 0
  %1166 = vmatprep.subr.bf16.mxu0 %v120
  %1167 = vmatpush1.bf16.msra.mxu0 %v119
  %1168 = vmatprep.subr.bf16.mxu0 %v122
  %1169 = vmatpush1.bf16.msra.mxu0 %v121
  %1170 = vmatprep.subr.bf16.mxu0 %v124
  %1171 = vmatpush1.bf16.msra.mxu0 %v123
  %1172 = vmatprep.subr.bf16.mxu0 %v126
  %1173 = vmatpush1.bf16.msra.mxu0 %v125
  %1174 = vmatprep.subr.bf16.mxu0 0
  %1175 = vmatpush1.bf16.msra.mxu0 0
  %1176 = vmatprep.subr.bf16.mxu0 0
  %1177 = vmatpush1.bf16.msra.mxu0 0
  %1178 = vmatprep.subr.bf16.mxu0 0
  %1179 = vmatpush1.bf16.msra.mxu0 0
  %1180 = vmatprep.subr.bf16.mxu0 0
  %1181 = vmatpush1.bf16.msra.mxu0 0
  %1182 = vmatprep.subr.bf16.mxu0 0
  %1183 = vmatpush1.bf16.msra.mxu0 0
  %1184 = vmatprep.subr.bf16.mxu0 0
  %1185 = vmatpush1.bf16.msra.mxu0 0
  %1186 = vmatprep.subr.bf16.mxu0 0
  %1187 = vmatpush1.bf16.msra.mxu0 0
  %1188 = vmatprep.subr.bf16.mxu0 0
  %1189 = vmatpush1.bf16.msra.mxu0 0
  %1190 = vmatprep.subr.bf16.mxu0 0
  %1191 = vmatpush1.bf16.msra.mxu0 0
  %1192 = vmatprep.subr.bf16.mxu0 0
  %1193 = vmatpush1.bf16.msra.mxu0 0
  %1194 = vmatprep.subr.bf16.mxu0 0
  %1195 = vmatpush1.bf16.msra.mxu0 0
  %1196 = vmatprep.subr.bf16.mxu0 0
  %1197 = vmatpush1.bf16.msra.mxu0 0
  %1198 = vmatprep.mubr.bf16.mxu0 0
  %1199 = vmatmul.mubr.bf16.gmra.mrb[0].mxu0 %v1164
  %v1200 = vpop.f32.mrb[0].mxu0
  %v1201 = vadd.f32 0.0, %v1200
  %v1202 = vpop.f32.mrb[0].mxu0
  %v1203 = vadd.f32 0.0, %v1202
  %v1204 = vpop.f32.mrb[0].mxu0
  %v1205 = vadd.f32 0.0, %v1204
  %v1206 = vpop.f32.mrb[0].mxu0
  %v1207 = vadd.f32 0.0, %v1206
  %1208 = vdwg.mxu0
  %s1209 = scalar_lea.vmem %s0, 64
  %v1210 = vld [vmem:[%s1209] sm:$0xff]
  %v1211 = vld [vmem:[%s1209 + $0x8] sm:$0xff]
  %v1212 = vadd.f32 %v1210, %v1201
  %v1213 = vadd.f32 %v1211, %v1205
  %s1214 = scalar_lea.vmem %s45, 48
  %v1215 = vld [vmem:[%s1214] sm:$0xff]
  %v1216 = vld [vmem:[%s1214 + $0x8] sm:$0xff]
  %v1217 = vadd.f32 %v1215, %v1203
  %v1218 = vadd.f32 %v1216, %v1207
  %v1219 = vld [vmem:[#allocation3] sm:$0xff]
  %v1220 = vld [vmem:[#allocation3 + $0x8] sm:$0xff]
  %v1221 = vxor.u32 %v1212, 2147483648
  %v1222 = vxor.u32 %v1213, 2147483648
  %v1223 = vmul.f32 %v1221, 1.442695
  %v1224 = vpow.pop %v1223
  %v1225 = vmul.f32 %v1222, 1.442695
  %v1226 = vpow.pop %v1225
  %v1227 = vadd.f32 %v1224, 1.0
  %v1228 = vadd.f32 %v1226, 1.0
  %v1229 = vrcp.pop %v1227
  %v1230 = vmul.f32 1.0, %v1229
  %v1231 = vrcp.pop %v1228
  %v1232 = vmul.f32 1.0, %v1231
  %v1233 = vtanh.pop %v1212
  %v1234 = vtanh.pop %v1213
  %1237 = vrot.lane.b32.xlu0 %v1219, 32
  %v1238 = vpop.permute.xlu0 %1237
  %1239 = vrot.lane.b32.xlu0 %v1220, 32
  %v1240 = vpop.permute.xlu0 %1239
  %v1243 = vmul.f32 %v1230, %v1238
  %v1244 = vmul.f32 %v1232, %v1240
  %1247 = vrot.lane.b32.xlu0 %v1233, 64
  %v1248 = vpop.permute.xlu0 %1247
  %1249 = vrot.lane.b32.xlu0 %v1234, 64
  %v1250 = vpop.permute.xlu0 %1249
  %v1253 = vmul.f32 %v1230, %v1248
  %v1254 = vmul.f32 %v1232, %v1250
  %1257 = vrot.lane.b32.xlu0 %v1253, 32
  %v1258 = vpop.permute.xlu0 %1257
  %1259 = vrot.lane.b32.xlu0 %v1254, 32
  %v1260 = vpop.permute.xlu0 %1259
  %v1263 = vadd.f32 %v1243, %v1258
  %v1264 = vadd.f32 %v1244, %v1260
  %v1265 = vtanh.pop %v1263
  %v1266 = vtanh.pop %v1264
  %1269 = vrot.lane.b32.xlu0 %v1265, 64
  %v1270 = vpop.permute.xlu0 %1269
  %1271 = vrot.lane.b32.xlu0 %v1266, 64
  %v1272 = vpop.permute.xlu0 %1271
  %v1275 = vmul.f32 %v1230, %v1270
  %v1276 = vmul.f32 %v1232, %v1272
  %v1277 = vld [vmem:[#allocation5] sm:$0xff]
  %v1278 = vld [vmem:[#allocation5 + $0x8] sm:$0xff]
  %v1279 = vxor.u32 %v1217, 2147483648
  %v1280 = vxor.u32 %v1218, 2147483648
  %v1281 = vmul.f32 %v1279, 1.442695
  %v1282 = vpow.pop %v1281
  %v1283 = vmul.f32 %v1280, 1.442695
  %v1284 = vpow.pop %v1283
  %v1285 = vadd.f32 %v1282, 1.0
  %v1286 = vadd.f32 %v1284, 1.0
  %v1287 = vrcp.pop %v1285
  %v1288 = vmul.f32 1.0, %v1287
  %v1289 = vrcp.pop %v1286
  %v1290 = vmul.f32 1.0, %v1289
  %v1291 = vtanh.pop %v1217
  %v1292 = vtanh.pop %v1218
  %1295 = vrot.lane.b32.xlu0 %v1277, 32
  %v1296 = vpop.permute.xlu0 %1295
  %1297 = vrot.lane.b32.xlu0 %v1278, 32
  %v1298 = vpop.permute.xlu0 %1297
  %v1301 = vmul.f32 %v1288, %v1296
  %v1302 = vmul.f32 %v1290, %v1298
  %1305 = vrot.lane.b32.xlu0 %v1291, 64
  %v1306 = vpop.permute.xlu0 %1305
  %1307 = vrot.lane.b32.xlu0 %v1292, 64
  %v1308 = vpop.permute.xlu0 %1307
  %v1311 = vmul.f32 %v1288, %v1306
  %v1312 = vmul.f32 %v1290, %v1308
  %1315 = vrot.lane.b32.xlu0 %v1311, 32
  %v1316 = vpop.permute.xlu0 %1315
  %1317 = vrot.lane.b32.xlu0 %v1312, 32
  %v1318 = vpop.permute.xlu0 %1317
  %v1321 = vadd.f32 %v1301, %v1316
  %v1322 = vadd.f32 %v1302, %v1318
  %v1323 = vtanh.pop %v1321
  %v1324 = vtanh.pop %v1322
  %1327 = vrot.lane.b32.xlu0 %v1323, 64
  %v1328 = vpop.permute.xlu0 %1327
  %1329 = vrot.lane.b32.xlu0 %v1324, 64
  %v1330 = vpop.permute.xlu0 %1329
  %v1333 = vmul.f32 %v1288, %v1328
  %v1334 = vmul.f32 %v1290, %v1330
  %1337 = vrot.lane.b32.xlu0 %v1275, 32
  %v1338 = vpop.permute.xlu0 %1337
  %1339 = vrot.lane.b32.xlu0 %v1276, 32
  %v1340 = vpop.permute.xlu0 %1339
  %1343 = vst.msk [vmem:[#allocation2] sm:$0xff] %vm91, %v1338
  %1344 = vst.msk [vmem:[#allocation2 + $0x8] sm:$0xff] %vm91, %v1340
  %1347 = vrot.lane.b32.xlu0 %v1263, 96
  %v1348 = vpop.permute.xlu0 %1347
  %1349 = vrot.lane.b32.xlu0 %v1264, 96
  %v1350 = vpop.permute.xlu0 %1349
  %1353 = vst.msk [vmem:[#allocation3] sm:$0xff] %vm91, %v1348
  %1354 = vst.msk [vmem:[#allocation3 + $0x8] sm:$0xff] %vm91, %v1350
  %1357 = vrot.lane.b32.xlu0 %v1333, 32
  %v1358 = vpop.permute.xlu0 %1357
  %1359 = vrot.lane.b32.xlu0 %v1334, 32
  %v1360 = vpop.permute.xlu0 %1359
  %1363 = vst.msk [vmem:[#allocation4] sm:$0xff] %vm91, %v1358
  %1364 = vst.msk [vmem:[#allocation4 + $0x8] sm:$0xff] %vm91, %v1360
  %1367 = vrot.lane.b32.xlu0 %v1321, 96
  %v1368 = vpop.permute.xlu0 %1367
  %1369 = vrot.lane.b32.xlu0 %v1322, 96
  %v1370 = vpop.permute.xlu0 %1369
  %1373 = vst.msk [vmem:[#allocation5] sm:$0xff] %vm91, %v1368
  %1374 = vst.msk [vmem:[#allocation5 + $0x8] sm:$0xff] %vm91, %v1370
  %v1375 = vpack.c.bf16 %v1276, %v1275
  %v1377 = vunpack.c.l.b16 %v1375
  %v1378 = vunpack.c.h.b16 %v1375
  %v1379 = vpack.c.b16 %v1377, %v1377
  %v1380 = vpack.c.b16 %v1378, %v1378
  %1381 = vrot.lane.b32.xlu0 %v1379, 32
  %v1382 = vpop.permute.xlu0 %1381
  %1383 = vrot.lane.b32.xlu0 %v1380, 32
  %v1384 = vpop.permute.xlu0 %1383
  %s1387 = scalar_lea.vmem %s3, 32
  %1388 = vst.msk [vmem:[%s1387] sm:$0xf] %vm359, %v1382
  %1389 = vst.msk [vmem:[%s1387 + $0x4] sm:$0xf] %vm359, %v1384
  %v1390 = vpack.c.bf16 %v1334, %v1333
  %v1392 = vunpack.c.l.b16 %v1390
  %v1393 = vunpack.c.h.b16 %v1390
  %v1394 = vpack.c.b16 %v1392, %v1392
  %v1395 = vpack.c.b16 %v1393, %v1393
  %1396 = vrot.lane.b32.xlu0 %v1394, 32
  %v1397 = vpop.permute.xlu0 %1396
  %1398 = vrot.lane.b32.xlu0 %v1395, 32
  %v1399 = vpop.permute.xlu0 %1398
  %s1402 = scalar_lea.vmem %s54, 24
  %1403 = vst.msk [vmem:[%s1402] sm:$0xf] %vm359, %v1397
  %1404 = vst.msk [vmem:[%s1402 + $0x4] sm:$0xf] %vm359, %v1399
  %v1405 = vld [vmem:[#allocation2] sm:$0xff]
  %v1406 = vld [vmem:[#allocation2 + $0x8] sm:$0xff]
  %v1407 = vld [vmem:[#allocation4] sm:$0xff]
  %v1408 = vld [vmem:[#allocation4 + $0x8] sm:$0xff]
  %1411 = vrot.lane.b32.xlu0 %v1407, 32
  %v1412 = vpop.permute.xlu0 %1411
  %1413 = vrot.lane.b32.xlu0 %v1408, 32
  %v1414 = vpop.permute.xlu0 %1413
  %v1417 = vsel %vm91, %v1405, %v1412
  %v1418 = vsel %vm91, %v1406, %v1414
  %v1419 = vpack.c.bf16 %v1418, %v1417
  %v1421 = vsel %vm135, %v1419, 0
  %1423 = vmatprep.subr.bf16.mxu0 %v120
  %1424 = vmatpush1.bf16.msra.mxu0 %v119
  %1425 = vmatprep.subr.bf16.mxu0 %v122
  %1426 = vmatpush1.bf16.msra.mxu0 %v121
  %1427 = vmatprep.subr.bf16.mxu0 %v124
  %1428 = vmatpush1.bf16.msra.mxu0 %v123
  %1429 = vmatprep.subr.bf16.mxu0 %v126
  %1430 = vmatpush1.bf16.msra.mxu0 %v125
  %1431 = vmatprep.subr.bf16.mxu0 0
  %1432 = vmatpush1.bf16.msra.mxu0 0
  %1433 = vmatprep.subr.bf16.mxu0 0
  %1434 = vmatpush1.bf16.msra.mxu0 0
  %1435 = vmatprep.subr.bf16.mxu0 0
  %1436 = vmatpush1.bf16.msra.mxu0 0
  %1437 = vmatprep.subr.bf16.mxu0 0
  %1438 = vmatpush1.bf16.msra.mxu0 0
  %1439 = vmatprep.subr.bf16.mxu0 0
  %1440 = vmatpush1.bf16.msra.mxu0 0
  %1441 = vmatprep.subr.bf16.mxu0 0
  %1442 = vmatpush1.bf16.msra.mxu0 0
  %1443 = vmatprep.subr.bf16.mxu0 0
  %1444 = vmatpush1.bf16.msra.mxu0 0
  %1445 = vmatprep.subr.bf16.mxu0 0
  %1446 = vmatpush1.bf16.msra.mxu0 0
  %1447 = vmatprep.subr.bf16.mxu0 0
  %1448 = vmatpush1.bf16.msra.mxu0 0
  %1449 = vmatprep.subr.bf16.mxu0 0
  %1450 = vmatpush1.bf16.msra.mxu0 0
  %1451 = vmatprep.subr.bf16.mxu0 0
  %1452 = vmatpush1.bf16.msra.mxu0 0
  %1453 = vmatprep.subr.bf16.mxu0 0
  %1454 = vmatpush1.bf16.msra.mxu0 0
  %1455 = vmatprep.mubr.bf16.mxu0 0
  %1456 = vmatmul.mubr.bf16.gmra.mrb[0].mxu0 %v1421
  %v1457 = vpop.f32.mrb[0].mxu0
  %v1458 = vadd.f32 0.0, %v1457
  %v1459 = vpop.f32.mrb[0].mxu0
  %v1460 = vadd.f32 0.0, %v1459
  %v1461 = vpop.f32.mrb[0].mxu0
  %v1462 = vadd.f32 0.0, %v1461
  %v1463 = vpop.f32.mrb[0].mxu0
  %v1464 = vadd.f32 0.0, %v1463
  %1465 = vdwg.mxu0
  %s1466 = scalar_lea.vmem %s0, 80
  %v1467 = vld [vmem:[%s1466] sm:$0xff]
  %v1468 = vld [vmem:[%s1466 + $0x8] sm:$0xff]
  %v1469 = vadd.f32 %v1467, %v1458
  %v1470 = vadd.f32 %v1468, %v1462
  %s1471 = scalar_lea.vmem %s45, 32
  %v1472 = vld [vmem:[%s1471] sm:$0xff]
  %v1473 = vld [vmem:[%s1471 + $0x8] sm:$0xff]
  %v1474 = vadd.f32 %v1472, %v1460
  %v1475 = vadd.f32 %v1473, %v1464
  %v1476 = vld [vmem:[#allocation3] sm:$0xff]
  %v1477 = vld [vmem:[#allocation3 + $0x8] sm:$0xff]
  %v1478 = vxor.u32 %v1469, 2147483648
  %v1479 = vxor.u32 %v1470, 2147483648
  %v1480 = vmul.f32 %v1478, 1.442695
  %v1481 = vpow.pop %v1480
  %v1482 = vmul.f32 %v1479, 1.442695
  %v1483 = vpow.pop %v1482
  %v1484 = vadd.f32 %v1481, 1.0
  %v1485 = vadd.f32 %v1483, 1.0
  %v1486 = vrcp.pop %v1484
  %v1487 = vmul.f32 1.0, %v1486
  %v1488 = vrcp.pop %v1485
  %v1489 = vmul.f32 1.0, %v1488
  %v1490 = vtanh.pop %v1469
  %v1491 = vtanh.pop %v1470
  %1494 = vrot.lane.b32.xlu0 %v1476, 32
  %v1495 = vpop.permute.xlu0 %1494
  %1496 = vrot.lane.b32.xlu0 %v1477, 32
  %v1497 = vpop.permute.xlu0 %1496
  %v1500 = vmul.f32 %v1487, %v1495
  %v1501 = vmul.f32 %v1489, %v1497
  %1504 = vrot.lane.b32.xlu0 %v1490, 64
  %v1505 = vpop.permute.xlu0 %1504
  %1506 = vrot.lane.b32.xlu0 %v1491, 64
  %v1507 = vpop.permute.xlu0 %1506
  %v1510 = vmul.f32 %v1487, %v1505
  %v1511 = vmul.f32 %v1489, %v1507
  %1514 = vrot.lane.b32.xlu0 %v1510, 32
  %v1515 = vpop.permute.xlu0 %1514
  %1516 = vrot.lane.b32.xlu0 %v1511, 32
  %v1517 = vpop.permute.xlu0 %1516
  %v1520 = vadd.f32 %v1500, %v1515
  %v1521 = vadd.f32 %v1501, %v1517
  %v1522 = vtanh.pop %v1520
  %v1523 = vtanh.pop %v1521
  %1526 = vrot.lane.b32.xlu0 %v1522, 64
  %v1527 = vpop.permute.xlu0 %1526
  %1528 = vrot.lane.b32.xlu0 %v1523, 64
  %v1529 = vpop.permute.xlu0 %1528
  %v1532 = vmul.f32 %v1487, %v1527
  %v1533 = vmul.f32 %v1489, %v1529
  %v1534 = vld [vmem:[#allocation5] sm:$0xff]
  %v1535 = vld [vmem:[#allocation5 + $0x8] sm:$0xff]
  %v1536 = vxor.u32 %v1474, 2147483648
  %v1537 = vxor.u32 %v1475, 2147483648
  %v1538 = vmul.f32 %v1536, 1.442695
  %v1539 = vpow.pop %v1538
  %v1540 = vmul.f32 %v1537, 1.442695
  %v1541 = vpow.pop %v1540
  %v1542 = vadd.f32 %v1539, 1.0
  %v1543 = vadd.f32 %v1541, 1.0
  %v1544 = vrcp.pop %v1542
  %v1545 = vmul.f32 1.0, %v1544
  %v1546 = vrcp.pop %v1543
  %v1547 = vmul.f32 1.0, %v1546
  %v1548 = vtanh.pop %v1474
  %v1549 = vtanh.pop %v1475
  %1552 = vrot.lane.b32.xlu0 %v1534, 32
  %v1553 = vpop.permute.xlu0 %1552
  %1554 = vrot.lane.b32.xlu0 %v1535, 32
  %v1555 = vpop.permute.xlu0 %1554
  %v1558 = vmul.f32 %v1545, %v1553
  %v1559 = vmul.f32 %v1547, %v1555
  %1562 = vrot.lane.b32.xlu0 %v1548, 64
  %v1563 = vpop.permute.xlu0 %1562
  %1564 = vrot.lane.b32.xlu0 %v1549, 64
  %v1565 = vpop.permute.xlu0 %1564
  %v1568 = vmul.f32 %v1545, %v1563
  %v1569 = vmul.f32 %v1547, %v1565
  %1572 = vrot.lane.b32.xlu0 %v1568, 32
  %v1573 = vpop.permute.xlu0 %1572
  %1574 = vrot.lane.b32.xlu0 %v1569, 32
  %v1575 = vpop.permute.xlu0 %1574
  %v1578 = vadd.f32 %v1558, %v1573
  %v1579 = vadd.f32 %v1559, %v1575
  %v1580 = vtanh.pop %v1578
  %v1581 = vtanh.pop %v1579
  %1584 = vrot.lane.b32.xlu0 %v1580, 64
  %v1585 = vpop.permute.xlu0 %1584
  %1586 = vrot.lane.b32.xlu0 %v1581, 64
  %v1587 = vpop.permute.xlu0 %1586
  %v1590 = vmul.f32 %v1545, %v1585
  %v1591 = vmul.f32 %v1547, %v1587
  %1594 = vrot.lane.b32.xlu0 %v1532, 32
  %v1595 = vpop.permute.xlu0 %1594
  %1596 = vrot.lane.b32.xlu0 %v1533, 32
  %v1597 = vpop.permute.xlu0 %1596
  %1600 = vst.msk [vmem:[#allocation2] sm:$0xff] %vm91, %v1595
  %1601 = vst.msk [vmem:[#allocation2 + $0x8] sm:$0xff] %vm91, %v1597
  %1604 = vrot.lane.b32.xlu0 %v1520, 96
  %v1605 = vpop.permute.xlu0 %1604
  %1606 = vrot.lane.b32.xlu0 %v1521, 96
  %v1607 = vpop.permute.xlu0 %1606
  %1610 = vst.msk [vmem:[#allocation3] sm:$0xff] %vm91, %v1605
  %1611 = vst.msk [vmem:[#allocation3 + $0x8] sm:$0xff] %vm91, %v1607
  %1614 = vrot.lane.b32.xlu0 %v1590, 32
  %v1615 = vpop.permute.xlu0 %1614
  %1616 = vrot.lane.b32.xlu0 %v1591, 32
  %v1617 = vpop.permute.xlu0 %1616
  %1620 = vst.msk [vmem:[#allocation4] sm:$0xff] %vm91, %v1615
  %1621 = vst.msk [vmem:[#allocation4 + $0x8] sm:$0xff] %vm91, %v1617
  %1624 = vrot.lane.b32.xlu0 %v1578, 96
  %v1625 = vpop.permute.xlu0 %1624
  %1626 = vrot.lane.b32.xlu0 %v1579, 96
  %v1627 = vpop.permute.xlu0 %1626
  %1630 = vst.msk [vmem:[#allocation5] sm:$0xff] %vm91, %v1625
  %1631 = vst.msk [vmem:[#allocation5 + $0x8] sm:$0xff] %vm91, %v1627
  %v1632 = vpack.c.bf16 %v1533, %v1532
  %v1634 = vunpack.c.l.b16 %v1632
  %v1635 = vunpack.c.h.b16 %v1632
  %v1636 = vpack.c.b16 %v1634, %v1634
  %v1637 = vpack.c.b16 %v1635, %v1635
  %1638 = vrot.lane.b32.xlu0 %v1636, 32
  %v1639 = vpop.permute.xlu0 %1638
  %1640 = vrot.lane.b32.xlu0 %v1637, 32
  %v1641 = vpop.permute.xlu0 %1640
  %s1644 = scalar_lea.vmem %s3, 40
  %1645 = vst.msk [vmem:[%s1644] sm:$0xf] %vm359, %v1639
  %1646 = vst.msk [vmem:[%s1644 + $0x4] sm:$0xf] %vm359, %v1641
  %v1647 = vpack.c.bf16 %v1591, %v1590
  %v1649 = vunpack.c.l.b16 %v1647
  %v1650 = vunpack.c.h.b16 %v1647
  %v1651 = vpack.c.b16 %v1649, %v1649
  %v1652 = vpack.c.b16 %v1650, %v1650
  %1653 = vrot.lane.b32.xlu0 %v1651, 32
  %v1654 = vpop.permute.xlu0 %1653
  %1655 = vrot.lane.b32.xlu0 %v1652, 32
  %v1656 = vpop.permute.xlu0 %1655
  %s1659 = scalar_lea.vmem %s54, 16
  %1660 = vst.msk [vmem:[%s1659] sm:$0xf] %vm359, %v1654
  %1661 = vst.msk [vmem:[%s1659 + $0x4] sm:$0xf] %vm359, %v1656
  %v1662 = vld [vmem:[#allocation2] sm:$0xff]
  %v1663 = vld [vmem:[#allocation2 + $0x8] sm:$0xff]
  %v1664 = vld [vmem:[#allocation4] sm:$0xff]
  %v1665 = vld [vmem:[#allocation4 + $0x8] sm:$0xff]
  %1668 = vrot.lane.b32.xlu0 %v1664, 32
  %v1669 = vpop.permute.xlu0 %1668
  %1670 = vrot.lane.b32.xlu0 %v1665, 32
  %v1671 = vpop.permute.xlu0 %1670
  %v1674 = vsel %vm91, %v1662, %v1669
  %v1675 = vsel %vm91, %v1663, %v1671
  %v1676 = vpack.c.bf16 %v1675, %v1674
  %v1678 = vsel %vm135, %v1676, 0
  %1680 = vmatprep.subr.bf16.mxu0 %v120
  %1681 = vmatpush1.bf16.msra.mxu0 %v119
  %1682 = vmatprep.subr.bf16.mxu0 %v122
  %1683 = vmatpush1.bf16.msra.mxu0 %v121
  %1684 = vmatprep.subr.bf16.mxu0 %v124
  %1685 = vmatpush1.bf16.msra.mxu0 %v123
  %1686 = vmatprep.subr.bf16.mxu0 %v126
  %1687 = vmatpush1.bf16.msra.mxu0 %v125
  %1688 = vmatprep.subr.bf16.mxu0 0
  %1689 = vmatpush1.bf16.msra.mxu0 0
  %1690 = vmatprep.subr.bf16.mxu0 0
  %1691 = vmatpush1.bf16.msra.mxu0 0
  %1692 = vmatprep.subr.bf16.mxu0 0
  %1693 = vmatpush1.bf16.msra.mxu0 0
  %1694 = vmatprep.subr.bf16.mxu0 0
  %1695 = vmatpush1.bf16.msra.mxu0 0
  %1696 = vmatprep.subr.bf16.mxu0 0
  %1697 = vmatpush1.bf16.msra.mxu0 0
  %1698 = vmatprep.subr.bf16.mxu0 0
  %1699 = vmatpush1.bf16.msra.mxu0 0
  %1700 = vmatprep.subr.bf16.mxu0 0
  %1701 = vmatpush1.bf16.msra.mxu0 0
  %1702 = vmatprep.subr.bf16.mxu0 0
  %1703 = vmatpush1.bf16.msra.mxu0 0
  %1704 = vmatprep.subr.bf16.mxu0 0
  %1705 = vmatpush1.bf16.msra.mxu0 0
  %1706 = vmatprep.subr.bf16.mxu0 0
  %1707 = vmatpush1.bf16.msra.mxu0 0
  %1708 = vmatprep.subr.bf16.mxu0 0
  %1709 = vmatpush1.bf16.msra.mxu0 0
  %1710 = vmatprep.subr.bf16.mxu0 0
  %1711 = vmatpush1.bf16.msra.mxu0 0
  %1712 = vmatprep.mubr.bf16.mxu0 0
  %1713 = vmatmul.mubr.bf16.gmra.mrb[0].mxu0 %v1678
  %v1714 = vpop.f32.mrb[0].mxu0
  %v1715 = vadd.f32 0.0, %v1714
  %v1716 = vpop.f32.mrb[0].mxu0
  %v1717 = vadd.f32 0.0, %v1716
  %v1718 = vpop.f32.mrb[0].mxu0
  %v1719 = vadd.f32 0.0, %v1718
  %v1720 = vpop.f32.mrb[0].mxu0
  %v1721 = vadd.f32 0.0, %v1720
  %1722 = vdwg.mxu0
  %s1723 = scalar_lea.vmem %s0, 96
  %v1724 = vld [vmem:[%s1723] sm:$0xff]
  %v1725 = vld [vmem:[%s1723 + $0x8] sm:$0xff]
  %v1726 = vadd.f32 %v1724, %v1715
  %v1727 = vadd.f32 %v1725, %v1719
  %s1728 = scalar_lea.vmem %s45, 16
  %v1729 = vld [vmem:[%s1728] sm:$0xff]
  %v1730 = vld [vmem:[%s1728 + $0x8] sm:$0xff]
  %v1731 = vadd.f32 %v1729, %v1717
  %v1732 = vadd.f32 %v1730, %v1721
  %v1733 = vld [vmem:[#allocation3] sm:$0xff]
  %v1734 = vld [vmem:[#allocation3 + $0x8] sm:$0xff]
  %v1735 = vxor.u32 %v1726, 2147483648
  %v1736 = vxor.u32 %v1727, 2147483648
  %v1737 = vmul.f32 %v1735, 1.442695
  %v1738 = vpow.pop %v1737
  %v1739 = vmul.f32 %v1736, 1.442695
  %v1740 = vpow.pop %v1739
  %v1741 = vadd.f32 %v1738, 1.0
  %v1742 = vadd.f32 %v1740, 1.0
  %v1743 = vrcp.pop %v1741
  %v1744 = vmul.f32 1.0, %v1743
  %v1745 = vrcp.pop %v1742
  %v1746 = vmul.f32 1.0, %v1745
  %v1747 = vtanh.pop %v1726
  %v1748 = vtanh.pop %v1727
  %1751 = vrot.lane.b32.xlu0 %v1733, 32
  %v1752 = vpop.permute.xlu0 %1751
  %1753 = vrot.lane.b32.xlu0 %v1734, 32
  %v1754 = vpop.permute.xlu0 %1753
  %v1757 = vmul.f32 %v1744, %v1752
  %v1758 = vmul.f32 %v1746, %v1754
  %1761 = vrot.lane.b32.xlu0 %v1747, 64
  %v1762 = vpop.permute.xlu0 %1761
  %1763 = vrot.lane.b32.xlu0 %v1748, 64
  %v1764 = vpop.permute.xlu0 %1763
  %v1767 = vmul.f32 %v1744, %v1762
  %v1768 = vmul.f32 %v1746, %v1764
  %1771 = vrot.lane.b32.xlu0 %v1767, 32
  %v1772 = vpop.permute.xlu0 %1771
  %1773 = vrot.lane.b32.xlu0 %v1768, 32
  %v1774 = vpop.permute.xlu0 %1773
  %v1777 = vadd.f32 %v1757, %v1772
  %v1778 = vadd.f32 %v1758, %v1774
  %v1779 = vtanh.pop %v1777
  %v1780 = vtanh.pop %v1778
  %1783 = vrot.lane.b32.xlu0 %v1779, 64
  %v1784 = vpop.permute.xlu0 %1783
  %1785 = vrot.lane.b32.xlu0 %v1780, 64
  %v1786 = vpop.permute.xlu0 %1785
  %v1789 = vmul.f32 %v1744, %v1784
  %v1790 = vmul.f32 %v1746, %v1786
  %v1791 = vld [vmem:[#allocation5] sm:$0xff]
  %v1792 = vld [vmem:[#allocation5 + $0x8] sm:$0xff]
  %v1793 = vxor.u32 %v1731, 2147483648
  %v1794 = vxor.u32 %v1732, 2147483648
  %v1795 = vmul.f32 %v1793, 1.442695
  %v1796 = vpow.pop %v1795
  %v1797 = vmul.f32 %v1794, 1.442695
  %v1798 = vpow.pop %v1797
  %v1799 = vadd.f32 %v1796, 1.0
  %v1800 = vadd.f32 %v1798, 1.0
  %v1801 = vrcp.pop %v1799
  %v1802 = vmul.f32 1.0, %v1801
  %v1803 = vrcp.pop %v1800
  %v1804 = vmul.f32 1.0, %v1803
  %v1805 = vtanh.pop %v1731
  %v1806 = vtanh.pop %v1732
  %1809 = vrot.lane.b32.xlu0 %v1791, 32
  %v1810 = vpop.permute.xlu0 %1809
  %1811 = vrot.lane.b32.xlu0 %v1792, 32
  %v1812 = vpop.permute.xlu0 %1811
  %v1815 = vmul.f32 %v1802, %v1810
  %v1816 = vmul.f32 %v1804, %v1812
  %1819 = vrot.lane.b32.xlu0 %v1805, 64
  %v1820 = vpop.permute.xlu0 %1819
  %1821 = vrot.lane.b32.xlu0 %v1806, 64
  %v1822 = vpop.permute.xlu0 %1821
  %v1825 = vmul.f32 %v1802, %v1820
  %v1826 = vmul.f32 %v1804, %v1822
  %1829 = vrot.lane.b32.xlu0 %v1825, 32
  %v1830 = vpop.permute.xlu0 %1829
  %1831 = vrot.lane.b32.xlu0 %v1826, 32
  %v1832 = vpop.permute.xlu0 %1831
  %v1835 = vadd.f32 %v1815, %v1830
  %v1836 = vadd.f32 %v1816, %v1832
  %v1837 = vtanh.pop %v1835
  %v1838 = vtanh.pop %v1836
  %1841 = vrot.lane.b32.xlu0 %v1837, 64
  %v1842 = vpop.permute.xlu0 %1841
  %1843 = vrot.lane.b32.xlu0 %v1838, 64
  %v1844 = vpop.permute.xlu0 %1843
  %v1847 = vmul.f32 %v1802, %v1842
  %v1848 = vmul.f32 %v1804, %v1844
  %1851 = vrot.lane.b32.xlu0 %v1789, 32
  %v1852 = vpop.permute.xlu0 %1851
  %1853 = vrot.lane.b32.xlu0 %v1790, 32
  %v1854 = vpop.permute.xlu0 %1853
  %1857 = vst.msk [vmem:[#allocation2] sm:$0xff] %vm91, %v1852
  %1858 = vst.msk [vmem:[#allocation2 + $0x8] sm:$0xff] %vm91, %v1854
  %1861 = vrot.lane.b32.xlu0 %v1777, 96
  %v1862 = vpop.permute.xlu0 %1861
  %1863 = vrot.lane.b32.xlu0 %v1778, 96
  %v1864 = vpop.permute.xlu0 %1863
  %1867 = vst.msk [vmem:[#allocation3] sm:$0xff] %vm91, %v1862
  %1868 = vst.msk [vmem:[#allocation3 + $0x8] sm:$0xff] %vm91, %v1864
  %1871 = vrot.lane.b32.xlu0 %v1847, 32
  %v1872 = vpop.permute.xlu0 %1871
  %1873 = vrot.lane.b32.xlu0 %v1848, 32
  %v1874 = vpop.permute.xlu0 %1873
  %1877 = vst.msk [vmem:[#allocation4] sm:$0xff] %vm91, %v1872
  %1878 = vst.msk [vmem:[#allocation4 + $0x8] sm:$0xff] %vm91, %v1874
  %1881 = vrot.lane.b32.xlu0 %v1835, 96
  %v1882 = vpop.permute.xlu0 %1881
  %1883 = vrot.lane.b32.xlu0 %v1836, 96
  %v1884 = vpop.permute.xlu0 %1883
  %1887 = vst.msk [vmem:[#allocation5] sm:$0xff] %vm91, %v1882
  %1888 = vst.msk [vmem:[#allocation5 + $0x8] sm:$0xff] %vm91, %v1884
  %v1889 = vpack.c.bf16 %v1790, %v1789
  %v1891 = vunpack.c.l.b16 %v1889
  %v1892 = vunpack.c.h.b16 %v1889
  %v1893 = vpack.c.b16 %v1891, %v1891
  %v1894 = vpack.c.b16 %v1892, %v1892
  %1895 = vrot.lane.b32.xlu0 %v1893, 32
  %v1896 = vpop.permute.xlu0 %1895
  %1897 = vrot.lane.b32.xlu0 %v1894, 32
  %v1898 = vpop.permute.xlu0 %1897
  %s1901 = scalar_lea.vmem %s3, 48
  %1902 = vst.msk [vmem:[%s1901] sm:$0xf] %vm359, %v1896
  %1903 = vst.msk [vmem:[%s1901 + $0x4] sm:$0xf] %vm359, %v1898
  %v1904 = vpack.c.bf16 %v1848, %v1847
  %v1906 = vunpack.c.l.b16 %v1904
  %v1907 = vunpack.c.h.b16 %v1904
  %v1908 = vpack.c.b16 %v1906, %v1906
  %v1909 = vpack.c.b16 %v1907, %v1907
  %1910 = vrot.lane.b32.xlu0 %v1908, 32
  %v1911 = vpop.permute.xlu0 %1910
  %1912 = vrot.lane.b32.xlu0 %v1909, 32
  %v1913 = vpop.permute.xlu0 %1912
  %s1916 = scalar_lea.vmem %s54, 8
  %1917 = vst.msk [vmem:[%s1916] sm:$0xf] %vm359, %v1911
  %1918 = vst.msk [vmem:[%s1916 + $0x4] sm:$0xf] %vm359, %v1913
  %v1919 = vld [vmem:[#allocation2] sm:$0xff]
  %v1920 = vld [vmem:[#allocation2 + $0x8] sm:$0xff]
  %v1921 = vld [vmem:[#allocation4] sm:$0xff]
  %v1922 = vld [vmem:[#allocation4 + $0x8] sm:$0xff]
  %1925 = vrot.lane.b32.xlu0 %v1921, 32
  %v1926 = vpop.permute.xlu0 %1925
  %1927 = vrot.lane.b32.xlu0 %v1922, 32
  %v1928 = vpop.permute.xlu0 %1927
  %v1931 = vsel %vm91, %v1919, %v1926
  %v1932 = vsel %vm91, %v1920, %v1928
  %v1933 = vpack.c.bf16 %v1932, %v1931
  %v1935 = vsel %vm135, %v1933, 0
  %1937 = vmatprep.subr.bf16.mxu0 %v120
  %1938 = vmatpush1.bf16.msra.mxu0 %v119
  %1939 = vmatprep.subr.bf16.mxu0 %v122
  %1940 = vmatpush1.bf16.msra.mxu0 %v121
  %1941 = vmatprep.subr.bf16.mxu0 %v124
  %1942 = vmatpush1.bf16.msra.mxu0 %v123
  %1943 = vmatprep.subr.bf16.mxu0 %v126
  %1944 = vmatpush1.bf16.msra.mxu0 %v125
  %1945 = vmatprep.subr.bf16.mxu0 0
  %1946 = vmatpush1.bf16.msra.mxu0 0
  %1947 = vmatprep.subr.bf16.mxu0 0
  %1948 = vmatpush1.bf16.msra.mxu0 0
  %1949 = vmatprep.subr.bf16.mxu0 0
  %1950 = vmatpush1.bf16.msra.mxu0 0
  %1951 = vmatprep.subr.bf16.mxu0 0
  %1952 = vmatpush1.bf16.msra.mxu0 0
  %1953 = vmatprep.subr.bf16.mxu0 0
  %1954 = vmatpush1.bf16.msra.mxu0 0
  %1955 = vmatprep.subr.bf16.mxu0 0
  %1956 = vmatpush1.bf16.msra.mxu0 0
  %1957 = vmatprep.subr.bf16.mxu0 0
  %1958 = vmatpush1.bf16.msra.mxu0 0
  %1959 = vmatprep.subr.bf16.mxu0 0
  %1960 = vmatpush1.bf16.msra.mxu0 0
  %1961 = vmatprep.subr.bf16.mxu0 0
  %1962 = vmatpush1.bf16.msra.mxu0 0
  %1963 = vmatprep.subr.bf16.mxu0 0
  %1964 = vmatpush1.bf16.msra.mxu0 0
  %1965 = vmatprep.subr.bf16.mxu0 0
  %1966 = vmatpush1.bf16.msra.mxu0 0
  %1967 = vmatprep.subr.bf16.mxu0 0
  %1968 = vmatpush1.bf16.msra.mxu0 0
  %1969 = vmatprep.mubr.bf16.mxu0 0
  %1970 = vmatmul.mubr.bf16.gmra.mrb[0].mxu0 %v1935
  %v1971 = vpop.f32.mrb[0].mxu0
  %v1972 = vadd.f32 0.0, %v1971
  %v1973 = vpop.f32.mrb[0].mxu0
  %v1974 = vadd.f32 0.0, %v1973
  %v1975 = vpop.f32.mrb[0].mxu0
  %v1976 = vadd.f32 0.0, %v1975
  %v1977 = vpop.f32.mrb[0].mxu0
  %v1978 = vadd.f32 0.0, %v1977
  %1979 = vdwg.mxu0
  %s1980 = scalar_lea.vmem %s0, 112
  %v1981 = vld [vmem:[%s1980] sm:$0xff]
  %v1982 = vld [vmem:[%s1980 + $0x8] sm:$0xff]
  %v1983 = vadd.f32 %v1981, %v1972
  %v1984 = vadd.f32 %v1982, %v1976
  %v1985 = vld [vmem:[%s45] sm:$0xff]
  %v1986 = vld [vmem:[%s45 + $0x8] sm:$0xff]
  %v1987 = vadd.f32 %v1985, %v1974
  %v1988 = vadd.f32 %v1986, %v1978
  %v1989 = vld [vmem:[#allocation3] sm:$0xff]
  %v1990 = vld [vmem:[#allocation3 + $0x8] sm:$0xff]
  %v1991 = vxor.u32 %v1983, 2147483648
  %v1992 = vxor.u32 %v1984, 2147483648
  %v1993 = vmul.f32 %v1991, 1.442695
  %v1994 = vpow.pop %v1993
  %v1995 = vmul.f32 %v1992, 1.442695
  %v1996 = vpow.pop %v1995
  %v1997 = vadd.f32 %v1994, 1.0
  %v1998 = vadd.f32 %v1996, 1.0
  %v1999 = vrcp.pop %v1997
  %v2000 = vmul.f32 1.0, %v1999
  %v2001 = vrcp.pop %v1998
  %v2002 = vmul.f32 1.0, %v2001
  %v2003 = vtanh.pop %v1983
  %v2004 = vtanh.pop %v1984
  %2007 = vrot.lane.b32.xlu0 %v1989, 32
  %v2008 = vpop.permute.xlu0 %2007
  %2009 = vrot.lane.b32.xlu0 %v1990, 32
  %v2010 = vpop.permute.xlu0 %2009
  %v2013 = vmul.f32 %v2000, %v2008
  %v2014 = vmul.f32 %v2002, %v2010
  %2017 = vrot.lane.b32.xlu0 %v2003, 64
  %v2018 = vpop.permute.xlu0 %2017
  %2019 = vrot.lane.b32.xlu0 %v2004, 64
  %v2020 = vpop.permute.xlu0 %2019
  %v2023 = vmul.f32 %v2000, %v2018
  %v2024 = vmul.f32 %v2002, %v2020
  %2027 = vrot.lane.b32.xlu0 %v2023, 32
  %v2028 = vpop.permute.xlu0 %2027
  %2029 = vrot.lane.b32.xlu0 %v2024, 32
  %v2030 = vpop.permute.xlu0 %2029
  %v2033 = vadd.f32 %v2013, %v2028
  %v2034 = vadd.f32 %v2014, %v2030
  %v2035 = vtanh.pop %v2033
  %v2036 = vtanh.pop %v2034
  %2039 = vrot.lane.b32.xlu0 %v2035, 64
  %v2040 = vpop.permute.xlu0 %2039
  %2041 = vrot.lane.b32.xlu0 %v2036, 64
  %v2042 = vpop.permute.xlu0 %2041
  %v2045 = vmul.f32 %v2000, %v2040
  %v2046 = vmul.f32 %v2002, %v2042
  %v2047 = vld [vmem:[#allocation5] sm:$0xff]
  %v2048 = vld [vmem:[#allocation5 + $0x8] sm:$0xff]
  %v2049 = vxor.u32 %v1987, 2147483648
  %v2050 = vxor.u32 %v1988, 2147483648
  %v2051 = vmul.f32 %v2049, 1.442695
  %v2052 = vpow.pop %v2051
  %v2053 = vmul.f32 %v2050, 1.442695
  %v2054 = vpow.pop %v2053
  %v2055 = vadd.f32 %v2052, 1.0
  %v2056 = vadd.f32 %v2054, 1.0
  %v2057 = vrcp.pop %v2055
  %v2058 = vmul.f32 1.0, %v2057
  %v2059 = vrcp.pop %v2056
  %v2060 = vmul.f32 1.0, %v2059
  %v2061 = vtanh.pop %v1987
  %v2062 = vtanh.pop %v1988
  %2065 = vrot.lane.b32.xlu0 %v2047, 32
  %v2066 = vpop.permute.xlu0 %2065
  %2067 = vrot.lane.b32.xlu0 %v2048, 32
  %v2068 = vpop.permute.xlu0 %2067
  %v2071 = vmul.f32 %v2058, %v2066
  %v2072 = vmul.f32 %v2060, %v2068
  %2075 = vrot.lane.b32.xlu0 %v2061, 64
  %v2076 = vpop.permute.xlu0 %2075
  %2077 = vrot.lane.b32.xlu0 %v2062, 64
  %v2078 = vpop.permute.xlu0 %2077
  %v2081 = vmul.f32 %v2058, %v2076
  %v2082 = vmul.f32 %v2060, %v2078
  %2085 = vrot.lane.b32.xlu0 %v2081, 32
  %v2086 = vpop.permute.xlu0 %2085
  %2087 = vrot.lane.b32.xlu0 %v2082, 32
  %v2088 = vpop.permute.xlu0 %2087
  %v2091 = vadd.f32 %v2071, %v2086
  %v2092 = vadd.f32 %v2072, %v2088
  %v2093 = vtanh.pop %v2091
  %v2094 = vtanh.pop %v2092
  %2097 = vrot.lane.b32.xlu0 %v2093, 64
  %v2098 = vpop.permute.xlu0 %2097
  %2099 = vrot.lane.b32.xlu0 %v2094, 64
  %v2100 = vpop.permute.xlu0 %2099
  %v2103 = vmul.f32 %v2058, %v2098
  %v2104 = vmul.f32 %v2060, %v2100
  %2107 = vrot.lane.b32.xlu0 %v2045, 32
  %v2108 = vpop.permute.xlu0 %2107
  %2109 = vrot.lane.b32.xlu0 %v2046, 32
  %v2110 = vpop.permute.xlu0 %2109
  %2113 = vst.msk [vmem:[#allocation2] sm:$0xff] %vm91, %v2108
  %2114 = vst.msk [vmem:[#allocation2 + $0x8] sm:$0xff] %vm91, %v2110
  %2117 = vrot.lane.b32.xlu0 %v2033, 96
  %v2118 = vpop.permute.xlu0 %2117
  %2119 = vrot.lane.b32.xlu0 %v2034, 96
  %v2120 = vpop.permute.xlu0 %2119
  %2123 = vst.msk [vmem:[#allocation3] sm:$0xff] %vm91, %v2118
  %2124 = vst.msk [vmem:[#allocation3 + $0x8] sm:$0xff] %vm91, %v2120
  %2127 = vrot.lane.b32.xlu0 %v2103, 32
  %v2128 = vpop.permute.xlu0 %2127
  %2129 = vrot.lane.b32.xlu0 %v2104, 32
  %v2130 = vpop.permute.xlu0 %2129
  %2133 = vst.msk [vmem:[#allocation4] sm:$0xff] %vm91, %v2128
  %2134 = vst.msk [vmem:[#allocation4 + $0x8] sm:$0xff] %vm91, %v2130
  %2137 = vrot.lane.b32.xlu0 %v2091, 96
  %v2138 = vpop.permute.xlu0 %2137
  %2139 = vrot.lane.b32.xlu0 %v2092, 96
  %v2140 = vpop.permute.xlu0 %2139
  %2143 = vst.msk [vmem:[#allocation5] sm:$0xff] %vm91, %v2138
  %2144 = vst.msk [vmem:[#allocation5 + $0x8] sm:$0xff] %vm91, %v2140
  %v2145 = vpack.c.bf16 %v2046, %v2045
  %v2147 = vunpack.c.l.b16 %v2145
  %v2148 = vunpack.c.h.b16 %v2145
  %v2149 = vpack.c.b16 %v2147, %v2147
  %v2150 = vpack.c.b16 %v2148, %v2148
  %2151 = vrot.lane.b32.xlu0 %v2149, 32
  %v2152 = vpop.permute.xlu0 %2151
  %2153 = vrot.lane.b32.xlu0 %v2150, 32
  %v2154 = vpop.permute.xlu0 %2153
  %s2157 = scalar_lea.vmem %s3, 56
  %2158 = vst.msk [vmem:[%s2157] sm:$0xf] %vm359, %v2152
  %2159 = vst.msk [vmem:[%s2157 + $0x4] sm:$0xf] %vm359, %v2154
  %v2160 = vpack.c.bf16 %v2104, %v2103
  %v2162 = vunpack.c.l.b16 %v2160
  %v2163 = vunpack.c.h.b16 %v2160
  %v2164 = vpack.c.b16 %v2162, %v2162
  %v2165 = vpack.c.b16 %v2163, %v2163
  %2166 = vrot.lane.b32.xlu0 %v2164, 32
  %v2167 = vpop.permute.xlu0 %2166
  %2168 = vrot.lane.b32.xlu0 %v2165, 32
  %v2169 = vpop.permute.xlu0 %2168
  %2172 = vst.msk [vmem:[%s54] sm:$0xf] %vm359, %v2167
  %2173 = vst.msk [vmem:[%s54 + $0x4] sm:$0xf] %vm359, %v2169
  %s2174 = ssub.s32 0, 0
  %s2175 = smul.u32 8, %s2174
  %p2176 = scmp.lt.s32.totalorder %s2175, 7
  %s2177 = scalar_select %p2176, %s2175, 7
  %s2178 = smul.addr %s2177, 2
  %s2179 = smul.addr %s2178, 4
  %s2180 = scalar_lea.vmem %s4, %s2179
  // Predicated region
  $region18: #{glove_bilstm_forward.6} parent=0 // pred_check
    _
  $region19: #{glove_bilstm_forward.6} parent=0 // pred_check_branch
    %2182 = sbr.rel (0) target = $region21
  $region20: #{glove_bilstm_forward.6} parent=0 // pred_region
    _
  $region21: #{glove_bilstm_forward.6} parent=0 // pred_fallthru
    _
  // Predicated region
  $region22: #{glove_bilstm_forward.6} parent=0 // pred_check
    _
  $region23: #{glove_bilstm_forward.6} parent=0 // pred_check_branch
    %2184 = sbr.rel (0) target = $region25
  $region24: #{glove_bilstm_forward.6} parent=0 // pred_region
    %s2185 = ssub.s32 0, 0
    %s2186 = smul.u32 8, %s2185
  $region25: #{glove_bilstm_forward.6} parent=0 // pred_fallthru
    _
  // Predicated region
  $region26: #{glove_bilstm_forward.6} parent=0 // pred_check
    _
  $region27: #{glove_bilstm_forward.6} parent=0 // pred_check_branch
    %2188 = sbr.rel (0) target = $region29
  $region28: #{glove_bilstm_forward.6} parent=0 // pred_region
    _
  $region29: #{glove_bilstm_forward.6} parent=0 // pred_fallthru
    _
  // Predicated region
  $region30: #{glove_bilstm_forward.6} parent=0 // pred_check
    _
  $region31: #{glove_bilstm_forward.6} parent=0 // pred_check_branch
    %2190 = sbr.rel (0) target = $region33
  $region32: #{glove_bilstm_forward.6} parent=0 // pred_region
    %s2191 = ssub.s32 0, 0
    %s2192 = smul.u32 8, %s2191
    %p2193 = scmp.lt.s32.totalorder %s2192, 7
    %s2194 = scalar_select %p2193, %s2192, 7
    %s2195 = smul.addr %s2194, 2
    %s2196 = smul.addr %s2195, 4
    %s2197 = scalar_lea.vmem %s4, %s2196
  $region33: #{glove_bilstm_forward.6} parent=0 // pred_fallthru
    _

</llo_original>
